<compile_context>
chip_gen: v6e
topology: v6e:2x2x1
jax: 0.10.0
libtpu: 0.0.40
codegen_flags: <defaults>
</compile_context>

<pallas_src>
import jax
import jax.numpy as jnp
from jax.experimental import pallas as pl
from jax.experimental.pallas import tpu as pltpu

LANES = 128
# Layer widths of the PyTorch DNN: num_features -> 64 -> 32 -> 32 -> 16 -> 10 -> 100
HIDDEN_DIMS = [64, 32, 32, 16, 10, 100]
OUT_DIM = HIDDEN_DIMS[-1]          # 100 real output lanes
NUM_LAYERS = len(HIDDEN_DIMS)      # 6 linear layers
ROW_CHUNK = 256                    # rows per in-kernel chunk (keeps activations in vregs)


def _round_up(x, m):
    return (x + m - 1) // m * m


def _chunk_plan(tile, chunk):
    """Static (start, size) pairs covering a batch tile."""
    plan, start = [], 0
    while start < tile:
        size = min(chunk, tile - start)
        plan.append((start, size))
        start += size
    return tuple(plan)


# ----------------------------------------------------------------------------
# Pallas kernel: full MLP forward for one batch tile, chunked over rows.
# ----------------------------------------------------------------------------
def make_mlp_kernel(tile, chunk):
    plan = _chunk_plan(tile, chunk)

    def mlp_kernel(x_ref, w1_ref, wr_ref, b_ref, out_ref):
        """x_ref  : (tile, F)       f32  (F = real/16-padded feature width)
           w1_ref : (F, 128)        bf16 (layer-1 weight, lane-padded to 128)
           wr_ref : (128, 5*128)    bf16 (layers 2..6 packed along lanes, zero-padded)
           b_ref  : (1, 6*128)      f32  (all biases packed along lanes, zero-padded)
           out_ref: (tile, 128)     f32  (only lanes [:100] are real)
        """
        # Dropout layers are identity at inference time (eval mode).
        for (start, size) in plan:            # static slices -> free ref views
            # Layer 1: in-kernel f32->bf16 cast, MXU matmul, f32 accumulation.
            xb = x_ref[start:start + size, :].astype(jnp.bfloat16)
            y = jnp.dot(xb, w1_ref[...], preferred_element_type=jnp.float32)
            h = jnp.maximum(y + b_ref[:, 0:LANES], 0.0).astype(jnp.bfloat16)

            # Layers 2..5: Linear -> ReLU (bf16 cast fused into the ReLU).
            for j in range(4):
                w = wr_ref[:, j * LANES:(j + 1) * LANES]
                b = b_ref[:, (j + 1) * LANES:(j + 2) * LANES]
                y = jnp.dot(h, w, preferred_element_type=jnp.float32)
                h = jnp.maximum(y + b, 0.0).astype(jnp.bfloat16)

            # Output layer: Linear only, no activation; store lane-dense f32.
            w = wr_ref[:, 4 * LANES:5 * LANES]
            b = b_ref[:, 5 * LANES:6 * LANES]
            y = jnp.dot(h, w, preferred_element_type=jnp.float32) + b
            out_ref[start:start + size, :] = y

    return mlp_kernel


# ----------------------------------------------------------------------------
# Parameter packing: 12 tiny tensors -> 3 zero-padded, lane-aligned slabs.
# ----------------------------------------------------------------------------
def pack_params(params, num_features):
    # Pad F only to the bf16 sublane multiple (16), NOT to 128 lanes.
    F_pad = max(_round_up(num_features, 16), 16)

    # Layer 1 weight: (F, 64) -> (F_pad, 128), bf16.
    w1 = jnp.zeros((F_pad, LANES), jnp.float32)
    w1 = w1.at[:num_features, :HIDDEN_DIMS[0]].set(params["w1"])
    w1 = w1.astype(jnp.bfloat16)

    # Layers 2..6 weights packed along lanes: (128, 5*128), bf16.
    wr = jnp.zeros((LANES, 5 * LANES), jnp.float32)
    for j in range(5):
        w = params[f"w{j + 2}"]
        fi, fo = w.shape
        assert fi <= LANES and fo <= LANES
        wr = wr.at[:fi, j * LANES:j * LANES + fo].set(w)
    wr = wr.astype(jnp.bfloat16)

    # All biases packed along lanes: (1, 6*128), f32 (padding lanes stay exactly 0,
    # so ReLU keeps them 0 and they never contaminate the next layer).
    bslab = jnp.zeros((1, NUM_LAYERS * LANES), jnp.float32)
    for j in range(NUM_LAYERS):
        b = params[f"b{j + 1}"].reshape(1, -1)
        bslab = bslab.at[:, j * LANES:j * LANES + b.shape[1]].set(b)

    return w1, wr, bslab


# ----------------------------------------------------------------------------
# Wrapper
# ----------------------------------------------------------------------------
def dnn_forward(x, packed, *, batch_tile=2048, row_chunk=ROW_CHUNK):
    """x: (B, num_features) float32.  packed: output of pack_params()."""
    w1, wr, bslab = packed
    B, F = x.shape
    F_pad = w1.shape[0]
    if F != F_pad:
        # Rare fallback (F not a multiple of 16): minimal feature pad so x matches w1.
        x = jnp.pad(x, ((0, 0), (0, F_pad - F)))
        F = F_pad

    # ---- static batch tile selection ----
    # Big tiles amortize the ~0.35us/step pipeline overhead, but keep >=2 grid steps
    # so dimension_semantics=("parallel",) can shard across v7x's 2 TensorCores.
    if B <= 2 * row_chunk:
        tile = max(_round_up(B, 8), 8)
    else:
        tile = min(_round_up(batch_tile, row_chunk),
                   _round_up(pl.cdiv(B, 2), row_chunk))
    chunk = min(row_chunk, tile)
    grid = (pl.cdiv(B, tile),)          # ragged last block handled by Pallas masking

    # Advisory cost hint for XLA scheduling around the custom call.
    flops = 2 * B * (F_pad * LANES + 5 * LANES * LANES)
    bytes_accessed = (x.size * 4 + w1.size * 2 + wr.size * 2 +
                      bslab.size * 4 + B * LANES * 4)

    out_padded = pl.pallas_call(
        make_mlp_kernel(tile, chunk),
        out_shape=jax.ShapeDtypeStruct((B, LANES), jnp.float32),
        grid_spec=pltpu.PrefetchScalarGridSpec(
            num_scalar_prefetch=0,
            grid=grid,
            in_specs=[
                # x tile: last dim = full array dim F (escape from the 128-lane rule),
                # so no feature padding and no wrapper cast pass is needed.
                pl.BlockSpec((tile, F), lambda i: (i, 0)),
                pl.BlockSpec((F_pad, LANES), lambda i: (0, 0)),            # w1 (resident)
                pl.BlockSpec((LANES, 5 * LANES), lambda i: (0, 0)),        # w2..w6 slab
                pl.BlockSpec((1, NUM_LAYERS * LANES), lambda i: (0, 0)),   # bias slab
            ],
            out_specs=pl.BlockSpec((tile, LANES), lambda i: (i, 0)),
        ),
        compiler_params=pltpu.CompilerParams(
            # Batch axis is embarrassingly parallel -> megacore sharding on v7x.
            dimension_semantics=("parallel",),
            # VMEM at tile=2048, F=32: ~3 MiB double-buffered -> under scoped default
            # on v5e/v6e/v7x; no explicit vmem_limit_bytes required.
        ),
        cost_estimate=pl.CostEstimate(
            flops=flops, transcendentals=0, bytes_accessed=bytes_accessed),
    )(x, w1, wr, bslab)

    # Strip lane padding outside the kernel (keeps stores lane-dense inside).
    return out_padded[:, :OUT_DIM]


# ----------------------------------------------------------------------------
# Deterministic parameter init (shapes from DNN.__init__) + reference
# ----------------------------------------------------------------------------
def init_params(key, num_features):
    dims = [num_features] + HIDDEN_DIMS
    params = {}
    for i in range(NUM_LAYERS):
        fan_in, fan_out = dims[i], dims[i + 1]
        key, kw, kb = jax.random.split(key, 3)
        bound = 1.0 / jnp.sqrt(fan_in)
        # stored as (in, out) — transposed w.r.t. PyTorch's (out, in)
        params[f"w{i + 1}"] = jax.random.uniform(
            kw, (fan_in, fan_out), jnp.float32, -bound, bound)
        params[f"b{i + 1}"] = jax.random.uniform(
            kb, (1, fan_out), jnp.float32, -bound, bound)
    return params


def reference_forward(x, params):
    """Pure-JAX reference with matching bf16-operand / f32-accumulate numerics."""
    h = x
    for i in range(1, NUM_LAYERS + 1):
        w = params[f"w{i}"].astype(jnp.bfloat16)
        y = jnp.dot(h.astype(jnp.bfloat16), w, preferred_element_type=jnp.float32)
        y = y + params[f"b{i}"]
        h = jnp.maximum(y, 0.0) if i < NUM_LAYERS else y
    return h


if __name__ == "__main__":
    key = jax.random.PRNGKey(0)
    num_features = 32
    batch = 1000      # ragged on purpose: grid = cdiv(1000, 512) = 2, last block masked

    kx, kp = jax.random.split(key)
    x = jax.random.normal(kx, (batch, num_features), jnp.float32)
    params = init_params(kp, num_features)
    packed = pack_params(params, num_features)

    out = dnn_forward(x, packed)
    out = jax.block_until_ready(out)

    ref = reference_forward(x, params)
    assert out.shape == (batch, OUT_DIM), out.shape
    max_err = float(jnp.max(jnp.abs(out - ref)))
    assert jnp.allclose(out, ref, atol=2e-3, rtol=2e-3), max_err

    print("KERNEL_OK")
</pallas_src>

<mosaic_0001>
module attributes {stable_mosaic.version = 11 : i64} {
  func.func @mlp_kernel(%arg0: i32, %arg1: memref<512x32xf32, #tpu.memory_space<vmem>>, %arg2: memref<32x128xbf16, #tpu.memory_space<vmem>>, %arg3: memref<128x640xbf16, #tpu.memory_space<vmem>>, %arg4: memref<1x768xf32, #tpu.memory_space<vmem>>, %arg5: memref<512x128xf32, #tpu.memory_space<vmem>>) attributes {dimension_semantics = [#tpu.dimension_semantics<parallel>], iteration_bounds = array<i64: 2>, scalar_prefetch = 0 : i64, scratch_operands = 0 : i64, tpu.core_type = #tpu.core_type<tc>, window_params = [{transform_indices = @transform_0, window_bounds = array<i64: 512, 32>}, {pipeline_mode = #tpu.pipeline_mode<synchronous>, transform_indices = @transform_1, window_bounds = array<i64: 32, 128>}, {pipeline_mode = #tpu.pipeline_mode<synchronous>, transform_indices = @transform_2, window_bounds = array<i64: 128, 640>}, {pipeline_mode = #tpu.pipeline_mode<synchronous>, transform_indices = @transform_3, window_bounds = array<i64: 1, 768>}, {transform_indices = @transform_4, window_bounds = array<i64: 512, 128>}]} {
    %c0 = arith.constant 0 : index
    %c0_0 = arith.constant 0 : index
    %0 = vector.load %arg1[%c0, %c0_0] : memref<512x32xf32, #tpu.memory_space<vmem>>, vector<256x32xf32>
    %1 = arith.truncf %0 : vector<256x32xf32> to vector<256x32xbf16>
    %c0_1 = arith.constant 0 : index
    %c0_2 = arith.constant 0 : index
    %2 = vector.load %arg2[%c0_1, %c0_2] : memref<32x128xbf16, #tpu.memory_space<vmem>>, vector<32x128xbf16>
    %cst = arith.constant dense<0.000000e+00> : vector<256x128xf32>
    %3 = tpu.matmul %1, %2, %cst {dimension_numbers = #tpu.dot_dimension_numbers<[1], [0], [0], [1], [0, 0, 1, 1], [], []>} : vector<256x32xbf16>, vector<32x128xbf16>, vector<256x128xf32> -> vector<256x128xf32>
    %c0_3 = arith.constant 0 : index
    %c0_4 = arith.constant 0 : index
    %4 = vector.load %arg4[%c0_3, %c0_4] : memref<1x768xf32, #tpu.memory_space<vmem>>, vector<1x128xf32>
    %5 = vector.broadcast %4 : vector<1x128xf32> to vector<256x128xf32>
    %6 = arith.addf %3, %5 : vector<256x128xf32>
    %cst_5 = arith.constant 0.000000e+00 : f32
    %7 = vector.broadcast %cst_5 : f32 to vector<256x128xf32>
    %8 = arith.maximumf %6, %7 : vector<256x128xf32>
    %9 = arith.truncf %8 : vector<256x128xf32> to vector<256x128xbf16>
    %c0_6 = arith.constant 0 : index
    %c0_7 = arith.constant 0 : index
    %10 = vector.load %arg3[%c0_6, %c0_7] : memref<128x640xbf16, #tpu.memory_space<vmem>>, vector<128x128xbf16>
    %c0_8 = arith.constant 0 : index
    %c128 = arith.constant 128 : index
    %11 = vector.load %arg4[%c0_8, %c128] : memref<1x768xf32, #tpu.memory_space<vmem>>, vector<1x128xf32>
    %cst_9 = arith.constant dense<0.000000e+00> : vector<256x128xf32>
    %12 = tpu.matmul %9, %10, %cst_9 {dimension_numbers = #tpu.dot_dimension_numbers<[1], [0], [0], [1], [0, 0, 1, 1], [], []>} : vector<256x128xbf16>, vector<128x128xbf16>, vector<256x128xf32> -> vector<256x128xf32>
    %13 = vector.broadcast %11 : vector<1x128xf32> to vector<256x128xf32>
    %14 = arith.addf %12, %13 : vector<256x128xf32>
    %cst_10 = arith.constant 0.000000e+00 : f32
    %15 = vector.broadcast %cst_10 : f32 to vector<256x128xf32>
    %16 = arith.maximumf %14, %15 : vector<256x128xf32>
    %17 = arith.truncf %16 : vector<256x128xf32> to vector<256x128xbf16>
    %c0_11 = arith.constant 0 : index
    %c128_12 = arith.constant 128 : index
    %18 = vector.load %arg3[%c0_11, %c128_12] : memref<128x640xbf16, #tpu.memory_space<vmem>>, vector<128x128xbf16>
    %c0_13 = arith.constant 0 : index
    %c256 = arith.constant 256 : index
    %19 = vector.load %arg4[%c0_13, %c256] : memref<1x768xf32, #tpu.memory_space<vmem>>, vector<1x128xf32>
    %cst_14 = arith.constant dense<0.000000e+00> : vector<256x128xf32>
    %20 = tpu.matmul %17, %18, %cst_14 {dimension_numbers = #tpu.dot_dimension_numbers<[1], [0], [0], [1], [0, 0, 1, 1], [], []>} : vector<256x128xbf16>, vector<128x128xbf16>, vector<256x128xf32> -> vector<256x128xf32>
    %21 = vector.broadcast %19 : vector<1x128xf32> to vector<256x128xf32>
    %22 = arith.addf %20, %21 : vector<256x128xf32>
    %cst_15 = arith.constant 0.000000e+00 : f32
    %23 = vector.broadcast %cst_15 : f32 to vector<256x128xf32>
    %24 = arith.maximumf %22, %23 : vector<256x128xf32>
    %25 = arith.truncf %24 : vector<256x128xf32> to vector<256x128xbf16>
    %c0_16 = arith.constant 0 : index
    %c256_17 = arith.constant 256 : index
    %26 = vector.load %arg3[%c0_16, %c256_17] : memref<128x640xbf16, #tpu.memory_space<vmem>>, vector<128x128xbf16>
    %c0_18 = arith.constant 0 : index
    %c384 = arith.constant 384 : index
    %27 = vector.load %arg4[%c0_18, %c384] : memref<1x768xf32, #tpu.memory_space<vmem>>, vector<1x128xf32>
    %cst_19 = arith.constant dense<0.000000e+00> : vector<256x128xf32>
    %28 = tpu.matmul %25, %26, %cst_19 {dimension_numbers = #tpu.dot_dimension_numbers<[1], [0], [0], [1], [0, 0, 1, 1], [], []>} : vector<256x128xbf16>, vector<128x128xbf16>, vector<256x128xf32> -> vector<256x128xf32>
    %29 = vector.broadcast %27 : vector<1x128xf32> to vector<256x128xf32>
    %30 = arith.addf %28, %29 : vector<256x128xf32>
    %cst_20 = arith.constant 0.000000e+00 : f32
    %31 = vector.broadcast %cst_20 : f32 to vector<256x128xf32>
    %32 = arith.maximumf %30, %31 : vector<256x128xf32>
    %33 = arith.truncf %32 : vector<256x128xf32> to vector<256x128xbf16>
    %c0_21 = arith.constant 0 : index
    %c384_22 = arith.constant 384 : index
    %34 = vector.load %arg3[%c0_21, %c384_22] : memref<128x640xbf16, #tpu.memory_space<vmem>>, vector<128x128xbf16>
    %c0_23 = arith.constant 0 : index
    %c512 = arith.constant 512 : index
    %35 = vector.load %arg4[%c0_23, %c512] : memref<1x768xf32, #tpu.memory_space<vmem>>, vector<1x128xf32>
    %cst_24 = arith.constant dense<0.000000e+00> : vector<256x128xf32>
    %36 = tpu.matmul %33, %34, %cst_24 {dimension_numbers = #tpu.dot_dimension_numbers<[1], [0], [0], [1], [0, 0, 1, 1], [], []>} : vector<256x128xbf16>, vector<128x128xbf16>, vector<256x128xf32> -> vector<256x128xf32>
    %37 = vector.broadcast %35 : vector<1x128xf32> to vector<256x128xf32>
    %38 = arith.addf %36, %37 : vector<256x128xf32>
    %cst_25 = arith.constant 0.000000e+00 : f32
    %39 = vector.broadcast %cst_25 : f32 to vector<256x128xf32>
    %40 = arith.maximumf %38, %39 : vector<256x128xf32>
    %41 = arith.truncf %40 : vector<256x128xf32> to vector<256x128xbf16>
    %c0_26 = arith.constant 0 : index
    %c512_27 = arith.constant 512 : index
    %42 = vector.load %arg3[%c0_26, %c512_27] : memref<128x640xbf16, #tpu.memory_space<vmem>>, vector<128x128xbf16>
    %c0_28 = arith.constant 0 : index
    %c640 = arith.constant 640 : index
    %43 = vector.load %arg4[%c0_28, %c640] : memref<1x768xf32, #tpu.memory_space<vmem>>, vector<1x128xf32>
    %cst_29 = arith.constant dense<0.000000e+00> : vector<256x128xf32>
    %44 = tpu.matmul %41, %42, %cst_29 {dimension_numbers = #tpu.dot_dimension_numbers<[1], [0], [0], [1], [0, 0, 1, 1], [], []>} : vector<256x128xbf16>, vector<128x128xbf16>, vector<256x128xf32> -> vector<256x128xf32>
    %45 = vector.broadcast %43 : vector<1x128xf32> to vector<256x128xf32>
    %46 = arith.addf %44, %45 : vector<256x128xf32>
    %c0_30 = arith.constant 0 : index
    %c0_31 = arith.constant 0 : index
    %47 = vector.load %arg5[%c0_30, %c0_31] : memref<512x128xf32, #tpu.memory_space<vmem>>, vector<256x128xf32>
    tpu.vector_store %arg5[%c0_30, %c0_31], %46 {strides = array<i32>} : memref<512x128xf32, #tpu.memory_space<vmem>>, vector<256x128xf32>,
    %c256_32 = arith.constant 256 : index
    %c0_33 = arith.constant 0 : index
    %48 = vector.load %arg1[%c256_32, %c0_33] : memref<512x32xf32, #tpu.memory_space<vmem>>, vector<256x32xf32>
    %49 = arith.truncf %48 : vector<256x32xf32> to vector<256x32xbf16>
    %c0_34 = arith.constant 0 : index
    %c0_35 = arith.constant 0 : index
    %50 = vector.load %arg2[%c0_34, %c0_35] : memref<32x128xbf16, #tpu.memory_space<vmem>>, vector<32x128xbf16>
    %cst_36 = arith.constant dense<0.000000e+00> : vector<256x128xf32>
    %51 = tpu.matmul %49, %50, %cst_36 {dimension_numbers = #tpu.dot_dimension_numbers<[1], [0], [0], [1], [0, 0, 1, 1], [], []>} : vector<256x32xbf16>, vector<32x128xbf16>, vector<256x128xf32> -> vector<256x128xf32>
    %c0_37 = arith.constant 0 : index
    %c0_38 = arith.constant 0 : index
    %52 = vector.load %arg4[%c0_37, %c0_38] : memref<1x768xf32, #tpu.memory_space<vmem>>, vector<1x128xf32>
    %53 = vector.broadcast %52 : vector<1x128xf32> to vector<256x128xf32>
    %54 = arith.addf %51, %53 : vector<256x128xf32>
    %cst_39 = arith.constant 0.000000e+00 : f32
    %55 = vector.broadcast %cst_39 : f32 to vector<256x128xf32>
    %56 = arith.maximumf %54, %55 : vector<256x128xf32>
    %57 = arith.truncf %56 : vector<256x128xf32> to vector<256x128xbf16>
    %c0_40 = arith.constant 0 : index
    %c0_41 = arith.constant 0 : index
    %58 = vector.load %arg3[%c0_40, %c0_41] : memref<128x640xbf16, #tpu.memory_space<vmem>>, vector<128x128xbf16>
    %c0_42 = arith.constant 0 : index
    %c128_43 = arith.constant 128 : index
    %59 = vector.load %arg4[%c0_42, %c128_43] : memref<1x768xf32, #tpu.memory_space<vmem>>, vector<1x128xf32>
    %cst_44 = arith.constant dense<0.000000e+00> : vector<256x128xf32>
    %60 = tpu.matmul %57, %58, %cst_44 {dimension_numbers = #tpu.dot_dimension_numbers<[1], [0], [0], [1], [0, 0, 1, 1], [], []>} : vector<256x128xbf16>, vector<128x128xbf16>, vector<256x128xf32> -> vector<256x128xf32>
    %61 = vector.broadcast %59 : vector<1x128xf32> to vector<256x128xf32>
    %62 = arith.addf %60, %61 : vector<256x128xf32>
    %cst_45 = arith.constant 0.000000e+00 : f32
    %63 = vector.broadcast %cst_45 : f32 to vector<256x128xf32>
    %64 = arith.maximumf %62, %63 : vector<256x128xf32>
    %65 = arith.truncf %64 : vector<256x128xf32> to vector<256x128xbf16>
    %c0_46 = arith.constant 0 : index
    %c128_47 = arith.constant 128 : index
    %66 = vector.load %arg3[%c0_46, %c128_47] : memref<128x640xbf16, #tpu.memory_space<vmem>>, vector<128x128xbf16>
    %c0_48 = arith.constant 0 : index
    %c256_49 = arith.constant 256 : index
    %67 = vector.load %arg4[%c0_48, %c256_49] : memref<1x768xf32, #tpu.memory_space<vmem>>, vector<1x128xf32>
    %cst_50 = arith.constant dense<0.000000e+00> : vector<256x128xf32>
    %68 = tpu.matmul %65, %66, %cst_50 {dimension_numbers = #tpu.dot_dimension_numbers<[1], [0], [0], [1], [0, 0, 1, 1], [], []>} : vector<256x128xbf16>, vector<128x128xbf16>, vector<256x128xf32> -> vector<256x128xf32>
    %69 = vector.broadcast %67 : vector<1x128xf32> to vector<256x128xf32>
    %70 = arith.addf %68, %69 : vector<256x128xf32>
    %cst_51 = arith.constant 0.000000e+00 : f32
    %71 = vector.broadcast %cst_51 : f32 to vector<256x128xf32>
    %72 = arith.maximumf %70, %71 : vector<256x128xf32>
    %73 = arith.truncf %72 : vector<256x128xf32> to vector<256x128xbf16>
    %c0_52 = arith.constant 0 : index
    %c256_53 = arith.constant 256 : index
    %74 = vector.load %arg3[%c0_52, %c256_53] : memref<128x640xbf16, #tpu.memory_space<vmem>>, vector<128x128xbf16>
    %c0_54 = arith.constant 0 : index
    %c384_55 = arith.constant 384 : index
    %75 = vector.load %arg4[%c0_54, %c384_55] : memref<1x768xf32, #tpu.memory_space<vmem>>, vector<1x128xf32>
    %cst_56 = arith.constant dense<0.000000e+00> : vector<256x128xf32>
    %76 = tpu.matmul %73, %74, %cst_56 {dimension_numbers = #tpu.dot_dimension_numbers<[1], [0], [0], [1], [0, 0, 1, 1], [], []>} : vector<256x128xbf16>, vector<128x128xbf16>, vector<256x128xf32> -> vector<256x128xf32>
    %77 = vector.broadcast %75 : vector<1x128xf32> to vector<256x128xf32>
    %78 = arith.addf %76, %77 : vector<256x128xf32>
    %cst_57 = arith.constant 0.000000e+00 : f32
    %79 = vector.broadcast %cst_57 : f32 to vector<256x128xf32>
    %80 = arith.maximumf %78, %79 : vector<256x128xf32>
    %81 = arith.truncf %80 : vector<256x128xf32> to vector<256x128xbf16>
    %c0_58 = arith.constant 0 : index
    %c384_59 = arith.constant 384 : index
    %82 = vector.load %arg3[%c0_58, %c384_59] : memref<128x640xbf16, #tpu.memory_space<vmem>>, vector<128x128xbf16>
    %c0_60 = arith.constant 0 : index
    %c512_61 = arith.constant 512 : index
    %83 = vector.load %arg4[%c0_60, %c512_61] : memref<1x768xf32, #tpu.memory_space<vmem>>, vector<1x128xf32>
    %cst_62 = arith.constant dense<0.000000e+00> : vector<256x128xf32>
    %84 = tpu.matmul %81, %82, %cst_62 {dimension_numbers = #tpu.dot_dimension_numbers<[1], [0], [0], [1], [0, 0, 1, 1], [], []>} : vector<256x128xbf16>, vector<128x128xbf16>, vector<256x128xf32> -> vector<256x128xf32>
    %85 = vector.broadcast %83 : vector<1x128xf32> to vector<256x128xf32>
    %86 = arith.addf %84, %85 : vector<256x128xf32>
    %cst_63 = arith.constant 0.000000e+00 : f32
    %87 = vector.broadcast %cst_63 : f32 to vector<256x128xf32>
    %88 = arith.maximumf %86, %87 : vector<256x128xf32>
    %89 = arith.truncf %88 : vector<256x128xf32> to vector<256x128xbf16>
    %c0_64 = arith.constant 0 : index
    %c512_65 = arith.constant 512 : index
    %90 = vector.load %arg3[%c0_64, %c512_65] : memref<128x640xbf16, #tpu.memory_space<vmem>>, vector<128x128xbf16>
    %c0_66 = arith.constant 0 : index
    %c640_67 = arith.constant 640 : index
    %91 = vector.load %arg4[%c0_66, %c640_67] : memref<1x768xf32, #tpu.memory_space<vmem>>, vector<1x128xf32>
    %cst_68 = arith.constant dense<0.000000e+00> : vector<256x128xf32>
    %92 = tpu.matmul %89, %90, %cst_68 {dimension_numbers = #tpu.dot_dimension_numbers<[1], [0], [0], [1], [0, 0, 1, 1], [], []>} : vector<256x128xbf16>, vector<128x128xbf16>, vector<256x128xf32> -> vector<256x128xf32>
    %93 = vector.broadcast %91 : vector<1x128xf32> to vector<256x128xf32>
    %94 = arith.addf %92, %93 : vector<256x128xf32>
    %c256_69 = arith.constant 256 : index
    %c0_70 = arith.constant 0 : index
    %95 = vector.load %arg5[%c256_69, %c0_70] : memref<512x128xf32, #tpu.memory_space<vmem>>, vector<256x128xf32>
    tpu.vector_store %arg5[%c256_69, %c0_70], %94 {strides = array<i32>} : memref<512x128xf32, #tpu.memory_space<vmem>>, vector<256x128xf32>,
    return
  }
  func.func @transform_0(%arg0: i32) -> (i32, i32) {
    %c0_i32 = arith.constant 0 : i32
    %c0_i32_0 = arith.constant 0 : i32
    return %arg0, %c0_i32 : i32, i32
  }
  func.func @transform_1(%arg0: i32) -> (i32, i32) {
    %c0_i32 = arith.constant 0 : i32
    %c0_i32_0 = arith.constant 0 : i32
    %c0_i32_1 = arith.constant 0 : i32
    return %c0_i32, %c0_i32_0 : i32, i32
  }
  func.func @transform_2(%arg0: i32) -> (i32, i32) {
    %c0_i32 = arith.constant 0 : i32
    %c0_i32_0 = arith.constant 0 : i32
    %c0_i32_1 = arith.constant 0 : i32
    return %c0_i32, %c0_i32_0 : i32, i32
  }
  func.func @transform_3(%arg0: i32) -> (i32, i32) {
    %c0_i32 = arith.constant 0 : i32
    %c0_i32_0 = arith.constant 0 : i32
    %c0_i32_1 = arith.constant 0 : i32
    return %c0_i32, %c0_i32_0 : i32, i32
  }
  func.func @transform_4(%arg0: i32) -> (i32, i32) {
    %c0_i32 = arith.constant 0 : i32
    %c0_i32_0 = arith.constant 0 : i32
    return %arg0, %c0_i32 : i32, i32
  }
}

</mosaic_0001>

<llo_original>
// kernel: tpu_custom_call.1
$region0: #{tpu_custom_call.1}
  #allocation0 [shape = 'u32[]', space=smem, size = 0x4, offset = 0x4, fixed_abs, tag = 'smem constant byte address 0x4 - core index']
  #allocation1 [shape = 'u32[144,128]{1,0:T(1,128)}', space=vmem, size = 0x12000, scoped, tag = 'internal scratch']
  %s0 = inlined_call_operand.vmem [shape: f32[1000,32], index: 0, kind: input, shape index: {}]
  %s1 = inlined_call_operand.vmem [shape: bf16[32,128], index: 1, kind: input, shape index: {}]
  %s2 = inlined_call_operand.vmem [shape: bf16[128,640], index: 2, kind: input, shape index: {}]
  %s3 = inlined_call_operand.vmem [shape: f32[1,768], index: 3, kind: input, shape index: {}]
  %s4 = inlined_call_operand.hbm [shape: f32[1000,128], index: 4, kind: output, shape index: {}]
  %s5 = sld [smem:[#allocation0]]
  $region49: #{tpu_custom_call.1} parent=0
    _
  %s7 = ssub.s32 1, %s5
  %s8 = scalar_select 0, %s7, %s5
  $region1: #{tpu_custom_call.1} parent=0
    #allocation2 [shape = 'u8[524288]{0}', space=vmem, size = 0x80000, scoped, tag = 'output window, operand 0']
    #allocation3 [shape = 's32[2]{0}', space=sflag, size = 0x8, scoped, tag = 'scoped memory for tpu_custom_call.1']
    %9 = vsyncpa [#allocation3], 0
    %s10 = scalar_lea.sflag [#allocation3], 1
    %11 = vsyncpa %s10, 0
    loop: start=0, step=1, limit=4
    $region2: #{tpu_custom_call.1} parent=1 // loop_pre_header
      _
    $region3: #{tpu_custom_call.1} parent=1 // loop_header
      %s13 = sphi 0, %s17
      %p14 = scmp.ge.s32.totalorder %s13, 4
      %s23 = sphi 0, %s25
      %s26 = sphi 0, %s23
      %s27 = sphi 0, %s26
      %s43 = sphi 0, %s27
      %s47 = sphi 0, %s47
      %s49 = sphi 0, %s47
      %s50 = sphi 0, %s49
      %s64 = sphi 0, %s50
      %s68 = sphi 0, %s68
      %s70 = sphi 0, %s68
      %s71 = sphi 0, %s70
      %s85 = sphi 0, %s71
      %s89 = sphi 0, %s89
      %s91 = sphi 0, %s89
      %s92 = sphi 0, %s91
      %s106 = sphi 0, %s92
      %s112 = sphi 0, %s114
      %s115 = sphi 0, %s112
      %s116 = sphi 0, %s115
      %s132 = sphi 0, %s116
    $region4: #{tpu_custom_call.1} parent=1 // loop_header_branch
      %16 = sbr.rel (%p14) target = $region8
    $region5: #{tpu_custom_call.1} parent=1 // loop_body
      %s18 = ssub.s32 %s13, 1
      %s19 = ssub.s32 %s13, 2
      %s20 = sadd.s32 %s13, 1
      %s21 = ssub.s32 %s13, %s20
      %p22 = scmp.eq.s32.totalorder %s21, 0
      %s24 = sadd.s32 %s23, 1
      %s25 = scalar_select %p22, %s23, %s24
      %p28 = pneg %p22
      %p29 = scmp.eq.s32.totalorder %s13, 1
      %p30 = por %p28, %p29
      %p31 = scmp.ne.s32.totalorder %s23, %s26
      %p32 = scmp.eq.s32.totalorder %s13, 0
      %p33 = por %p31, %p32
      %p34 = scmp.ne.s32.totalorder %s23, %s26
      %p35 = scmp.eq.s32.totalorder %s18, 1
      %p36 = por %p34, %p35
      %p37 = scmp.ne.s32.totalorder %s26, %s27
      %p38 = scmp.eq.s32.totalorder %s18, 0
      %p39 = por %p37, %p38
      %p40 = scmp.ne.s32.totalorder %s26, %s27
      %p41 = scmp.eq.s32.totalorder %s19, 1
      %p42 = por %p40, %p41
      %p44 = scmp.ne.s32.totalorder %s27, %s43
      %p45 = scmp.eq.s32.totalorder %s19, 0
      %p46 = por %p44, %p45
      %s48 = sadd.s32 %s47, 1
      %p51 = scmp.eq.s32.totalorder %s13, 1
      %p52 = scmp.ne.s32.totalorder %s47, %s49
      %p53 = scmp.eq.s32.totalorder %s13, 0
      %p54 = por %p52, %p53
      %p55 = scmp.ne.s32.totalorder %s47, %s49
      %p56 = scmp.eq.s32.totalorder %s18, 1
      %p57 = por %p55, %p56
      %p58 = scmp.ne.s32.totalorder %s49, %s50
      %p59 = scmp.eq.s32.totalorder %s18, 0
      %p60 = por %p58, %p59
      %p61 = scmp.ne.s32.totalorder %s49, %s50
      %p62 = scmp.eq.s32.totalorder %s19, 1
      %p63 = por %p61, %p62
      %p65 = scmp.ne.s32.totalorder %s50, %s64
      %p66 = scmp.eq.s32.totalorder %s19, 0
      %p67 = por %p65, %p66
      %s69 = sadd.s32 %s68, 1
      %p72 = scmp.eq.s32.totalorder %s13, 1
      %p73 = scmp.ne.s32.totalorder %s68, %s70
      %p74 = scmp.eq.s32.totalorder %s13, 0
      %p75 = por %p73, %p74
      %p76 = scmp.ne.s32.totalorder %s68, %s70
      %p77 = scmp.eq.s32.totalorder %s18, 1
      %p78 = por %p76, %p77
      %p79 = scmp.ne.s32.totalorder %s70, %s71
      %p80 = scmp.eq.s32.totalorder %s18, 0
      %p81 = por %p79, %p80
      %p82 = scmp.ne.s32.totalorder %s70, %s71
      %p83 = scmp.eq.s32.totalorder %s19, 1
      %p84 = por %p82, %p83
      %p86 = scmp.ne.s32.totalorder %s71, %s85
      %p87 = scmp.eq.s32.totalorder %s19, 0
      %p88 = por %p86, %p87
      %s90 = sadd.s32 %s89, 1
      %p93 = scmp.eq.s32.totalorder %s13, 1
      %p94 = scmp.ne.s32.totalorder %s89, %s91
      %p95 = scmp.eq.s32.totalorder %s13, 0
      %p96 = por %p94, %p95
      %p97 = scmp.ne.s32.totalorder %s89, %s91
      %p98 = scmp.eq.s32.totalorder %s18, 1
      %p99 = por %p97, %p98
      %p100 = scmp.ne.s32.totalorder %s91, %s92
      %p101 = scmp.eq.s32.totalorder %s18, 0
      %p102 = por %p100, %p101
      %p103 = scmp.ne.s32.totalorder %s91, %s92
      %p104 = scmp.eq.s32.totalorder %s19, 1
      %p105 = por %p103, %p104
      %p107 = scmp.ne.s32.totalorder %s92, %s106
      %p108 = scmp.eq.s32.totalorder %s19, 0
      %p109 = por %p107, %p108
      %s110 = ssub.s32 %s13, %s20
      %p111 = scmp.eq.s32.totalorder %s110, 0
      %s113 = sadd.s32 %s112, 1
      %s114 = scalar_select %p111, %s112, %s113
      %p117 = pneg %p111
      %p118 = scmp.eq.s32.totalorder %s13, 1
      %p119 = por %p117, %p118
      %p120 = scmp.ne.s32.totalorder %s112, %s115
      %p121 = scmp.eq.s32.totalorder %s13, 0
      %p122 = por %p120, %p121
      %p123 = scmp.ne.s32.totalorder %s112, %s115
      %p124 = scmp.eq.s32.totalorder %s18, 1
      %p125 = por %p123, %p124
      %p126 = scmp.ne.s32.totalorder %s115, %s116
      %p127 = scmp.eq.s32.totalorder %s18, 0
      %p128 = por %p126, %p127
      %p129 = scmp.ne.s32.totalorder %s115, %s116
      %p130 = scmp.eq.s32.totalorder %s19, 1
      %p131 = por %p129, %p130
      %p133 = scmp.ne.s32.totalorder %s116, %s132
      %p134 = scmp.eq.s32.totalorder %s19, 0
      %p135 = por %p133, %p134
      %p136 = scmp.le.s32.totalorder 1, %s13
      %p137 = scmp.lt.s32.totalorder %s13, 3
      %p138 = pnand %p136, %p137
      %p139 = pneg %p138
      // Predicated region
      $region9: #{tpu_custom_call.1} parent=5 // pred_check
        _
      $region10: #{tpu_custom_call.1} parent=5 // pred_check_branch
        %141 = sbr.rel (%p138) target = $region12
      $region11: #{tpu_custom_call.1} parent=5 // pred_region
        %s142 = ssub.s32 %s13, 1
        // Predicated region
        $region13: #{tpu_custom_call.1} parent=11 // pred_check
          %p143 = pneg %p60
        $region14: #{tpu_custom_call.1} parent=11 // pred_check_branch
          %145 = sbr.rel (%p143) target = $region16
        $region15: #{tpu_custom_call.1} parent=11 // pred_region
          _
        $region16: #{tpu_custom_call.1} parent=11 // pred_fallthru
          _
        // Predicated region
        $region17: #{tpu_custom_call.1} parent=11 // pred_check
          %p146 = pneg %p81
        $region18: #{tpu_custom_call.1} parent=11 // pred_check_branch
          %148 = sbr.rel (%p146) target = $region20
        $region19: #{tpu_custom_call.1} parent=11 // pred_region
          _
        $region20: #{tpu_custom_call.1} parent=11 // pred_fallthru
          _
        // Predicated region
        $region21: #{tpu_custom_call.1} parent=11 // pred_check
          %p149 = pneg %p102
        $region22: #{tpu_custom_call.1} parent=11 // pred_check_branch
          %151 = sbr.rel (%p149) target = $region24
        $region23: #{tpu_custom_call.1} parent=11 // pred_region
          _
        $region24: #{tpu_custom_call.1} parent=11 // pred_fallthru
          _
      $region12: #{tpu_custom_call.1} parent=5 // pred_fallthru
        _
      %p152 = scmp.lt.s32.totalorder %s13, 2
      // Predicated region
      $region25: #{tpu_custom_call.1} parent=5 // pred_check
        %p153 = pneg %p152
      $region26: #{tpu_custom_call.1} parent=5 // pred_check_branch
        %155 = sbr.rel (%p153) target = $region28
      $region27: #{tpu_custom_call.1} parent=5 // pred_region
        // Predicated region
        $region29: #{tpu_custom_call.1} parent=27 // pred_check
          %p156 = pneg %p33
        $region30: #{tpu_custom_call.1} parent=27 // pred_check_branch
          %158 = sbr.rel (%p156) target = $region32
        $region31: #{tpu_custom_call.1} parent=27 // pred_region
          %s159 = smul.u32 64, %s13
          %s160 = ssub.s32 125, %s159
          %p161 = scmp.lt.s32.totalorder %s160, 64
          %s162 = scalar_select %p161, %s160, 64
          %s163 = smul.u32 128, %s162
          %p164 = scmp.lt.s32.totalorder %s159, 124
          %s165 = scalar_select %p164, %s159, 124
          %s166 = smul.addr %s165, 8
          %s167 = scalar_lea.vmem %s0, %s166
          %s168 = smul.u32 64, %s13
          %s169 = ssub.s32 125, %s168
          %p170 = scmp.lt.s32.totalorder %s169, 64
          %s171 = scalar_select %p170, %s169, 64
          %s172 = smul.u32 128, %s171
        $region32: #{tpu_custom_call.1} parent=27 // pred_fallthru
          _
      $region28: #{tpu_custom_call.1} parent=5 // pred_fallthru
        _
      %p173 = scmp.le.s32.totalorder 1, %s13
      %p174 = scmp.lt.s32.totalorder %s13, 3
      %p175 = pnand %p173, %p174
      %p176 = pneg %p175
      // Predicated region
      $region33: #{tpu_custom_call.1} parent=5 // pred_check
        _
      $region34: #{tpu_custom_call.1} parent=5 // pred_check_branch
        %178 = sbr.rel (%p175) target = $region36
      $region35: #{tpu_custom_call.1} parent=5 // pred_region
        %s179 = ssub.s32 %s13, 1
        %s180 = smul.u32 64, %s18
        %s181 = ssub.s32 125, %s180
        %p182 = scmp.lt.s32.totalorder %s181, 64
        %s183 = scalar_select %p182, %s181, 64
        %s184 = smul.u32 128, %s183
        %p185 = scmp.lt.s32.totalorder %s180, 124
        %s186 = scalar_select %p185, %s180, 124
        %s187 = smul.addr %s186, 8
        %s188 = scalar_lea.vmem %s0, %s187
        %p189 = pneg %p39
        %p190 = pneg %p36
        %p191 = pneg %p60
        %p192 = pneg %p57
        %p193 = pneg %p81
        %p194 = pneg %p78
        %p195 = pneg %p102
        %p196 = pneg %p99
        %p197 = pneg %p128
        %p198 = pneg %p125
        %s199 = sand.u32 %s115, 1
        %s200 = scalar_lea.sflag [#allocation3], %s199
        %s201 = sand.u32 %s115, 1
        %s202 = smul.addr %s201, 512
        %s203 = scalar_lea.vmem [#allocation2], %s202
        %s204 = smul.u32 64, %s18
        %s205 = ssub.s32 125, %s204
        %p206 = scmp.lt.s32.totalorder %s205, 64
        %s207 = scalar_select %p206, %s205, 64
        %s208 = smul.u32 128, %s207
        %p209 = scmp.lt.s32.totalorder %s204, 124
        %s210 = scalar_select %p209, %s204, 124
        %s211 = smul.addr %s210, 8
        %s212 = scalar_lea.vmem %s0, %s211
        %s213 = smul.u32 64, %s18
        %s214 = ssub.s32 125, %s213
        %p215 = scmp.lt.s32.totalorder %s214, 64
        %s216 = scalar_select %p215, %s214, 64
        %s217 = smul.u32 128, %s216
        %s218 = smul.u32 64, %s18
        %s219 = ssub.s32 125, %s218
        %p220 = scmp.lt.s32.totalorder %s219, 64
        %s221 = scalar_select %p220, %s219, 64
        %s222 = smul.u32 128, %s221
        %v224 = vld [vmem:[%s212] sm:$0xff]
        %v225 = vld [vmem:[%s212 + $0x8] sm:$0xff]
        %v226 = vld [vmem:[%s212 + $0x10] sm:$0xff]
        %v227 = vld [vmem:[%s212 + $0x18] sm:$0xff]
        %v228 = vld [vmem:[%s212 + $0x20] sm:$0xff]
        %v229 = vld [vmem:[%s212 + $0x28] sm:$0xff]
        %v230 = vld [vmem:[%s212 + $0x30] sm:$0xff]
        %v231 = vld [vmem:[%s212 + $0x38] sm:$0xff]
        %v232 = vld [vmem:[%s212 + $0x40] sm:$0xff]
        %v233 = vld [vmem:[%s212 + $0x48] sm:$0xff]
        %v234 = vld [vmem:[%s212 + $0x50] sm:$0xff]
        %v235 = vld [vmem:[%s212 + $0x58] sm:$0xff]
        %v236 = vld [vmem:[%s212 + $0x60] sm:$0xff]
        %v237 = vld [vmem:[%s212 + $0x68] sm:$0xff]
        %v238 = vld [vmem:[%s212 + $0x70] sm:$0xff]
        %v239 = vld [vmem:[%s212 + $0x78] sm:$0xff]
        %v240 = vld [vmem:[%s212 + $0x80] sm:$0xff]
        %v241 = vld [vmem:[%s212 + $0x88] sm:$0xff]
        %v242 = vld [vmem:[%s212 + $0x90] sm:$0xff]
        %v243 = vld [vmem:[%s212 + $0x98] sm:$0xff]
        %v244 = vld [vmem:[%s212 + $0xa0] sm:$0xff]
        %v245 = vld [vmem:[%s212 + $0xa8] sm:$0xff]
        %v246 = vld [vmem:[%s212 + $0xb0] sm:$0xff]
        %v247 = vld [vmem:[%s212 + $0xb8] sm:$0xff]
        %v248 = vld [vmem:[%s212 + $0xc0] sm:$0xff]
        %v249 = vld [vmem:[%s212 + $0xc8] sm:$0xff]
        %v250 = vld [vmem:[%s212 + $0xd0] sm:$0xff]
        %v251 = vld [vmem:[%s212 + $0xd8] sm:$0xff]
        %v252 = vld [vmem:[%s212 + $0xe0] sm:$0xff]
        %v253 = vld [vmem:[%s212 + $0xe8] sm:$0xff]
        %v254 = vld [vmem:[%s212 + $0xf0] sm:$0xff]
        %v255 = vld [vmem:[%s212 + $0xf8] sm:$0xff]
        %v256 = vpack.c.bf16 %v225, %v224
        %v257 = vpack.c.bf16 %v227, %v226
        %v258 = vpack.c.bf16 %v229, %v228
        %v259 = vpack.c.bf16 %v231, %v230
        %v260 = vpack.c.bf16 %v233, %v232
        %v261 = vpack.c.bf16 %v235, %v234
        %v262 = vpack.c.bf16 %v237, %v236
        %v263 = vpack.c.bf16 %v239, %v238
        %v264 = vpack.c.bf16 %v241, %v240
        %v265 = vpack.c.bf16 %v243, %v242
        %v266 = vpack.c.bf16 %v245, %v244
        %v267 = vpack.c.bf16 %v247, %v246
        %v268 = vpack.c.bf16 %v249, %v248
        %v269 = vpack.c.bf16 %v251, %v250
        %v270 = vpack.c.bf16 %v253, %v252
        %v271 = vpack.c.bf16 %v255, %v254
        %v272 = vld [vmem:[%s1] sm:$0xf]
        %v273 = vld [vmem:[%s1 + $0x4] sm:$0xf]
        %v274 = vld [vmem:[%s1 + $0x8] sm:$0xf]
        %v275 = vld [vmem:[%s1 + $0xc] sm:$0xf]
        %v276 = vld [vmem:[%s3] sm:$0x1]
        %v278 = vlaneseq
        %v279 = vshrl.u32 %v278, 7
        %v280 = vsub.s32 0, %v279
        %v281 = vrot.slane %v276, %v280
        %v287 = vunpack.c.l.b16 %v272
        %v288 = vunpack.c.l.b16 %v273
        %v289 = vunpack.c.l.b16 %v274
        %v290 = vunpack.c.l.b16 %v275
        %v291 = vpack.c.b16 %v288, %v287
        %v292 = vpack.c.b16 %v290, %v289
        %vm295 = vcmask 261120
        %v297 = vsel %vm295, %v256, 0
        %v300 = vsel %vm295, %v257, 0
        %v303 = vsel %vm295, %v258, 0
        %v306 = vsel %vm295, %v259, 0
        %v309 = vsel %vm295, %v260, 0
        %v312 = vsel %vm295, %v261, 0
        %v315 = vsel %vm295, %v262, 0
        %v318 = vsel %vm295, %v263, 0
        %v321 = vsel %vm295, %v264, 0
        %v324 = vsel %vm295, %v265, 0
        %v327 = vsel %vm295, %v266, 0
        %v330 = vsel %vm295, %v267, 0
        %v333 = vsel %vm295, %v268, 0
        %v336 = vsel %vm295, %v269, 0
        %v339 = vsel %vm295, %v270, 0
        %v342 = vsel %vm295, %v271, 0
        %344 = vmatprep.subr.bf16.mxu0 0
        %345 = vmatpush1.bf16.msra.mxu0 0
        %346 = vmatprep.subr.bf16.mxu0 0
        %347 = vmatpush1.bf16.msra.mxu0 0
        %348 = vmatprep.subr.bf16.mxu0 0
        %349 = vmatpush1.bf16.msra.mxu0 0
        %350 = vmatprep.subr.bf16.mxu0 0
        %351 = vmatpush1.bf16.msra.mxu0 0
        %352 = vmatprep.subr.bf16.mxu0 0
        %353 = vmatpush1.bf16.msra.mxu0 0
        %354 = vmatprep.subr.bf16.mxu0 0
        %355 = vmatpush1.bf16.msra.mxu0 0
        %356 = vmatprep.subr.bf16.mxu0 0
        %357 = vmatpush1.bf16.msra.mxu0 %v292
        %358 = vmatprep.subr.bf16.mxu0 0
        %359 = vmatpush1.bf16.msra.mxu0 %v291
        %360 = vmatprep.subr.bf16.mxu0 0
        %361 = vmatpush2.bf16.msra.mxu0 0
        %362 = vmatprep.subr.bf16.mxu0 0
        %363 = vmatpush2.bf16.msra.mxu0 0
        %364 = vmatprep.subr.bf16.mxu0 0
        %365 = vmatpush2.bf16.msra.mxu0 0
        %366 = vmatprep.subr.bf16.mxu0 0
        %367 = vmatpush2.bf16.msra.mxu0 0
        %368 = vmatprep.subr.bf16.mxu0 0
        %369 = vmatpush2.bf16.msra.mxu0 0
        %370 = vmatprep.subr.bf16.mxu0 0
        %371 = vmatpush2.bf16.msra.mxu0 0
        %372 = vmatprep.subr.bf16.mxu0 0
        %373 = vmatpush2.bf16.msra.mxu0 0
        %374 = vmatprep.subr.bf16.mxu0 0
        %375 = vmatpush2.bf16.msra.mxu0 0
        %376 = vmatprep.mubr.bf16.mxu0 0
        %377 = vmatmul.mubr.bf16.gmra.mxu0 %v297
        %v378 = vpop.f32.mrf.mxu0
        %v379 = vadd.f32 %v281, %v378
        %v380 = vpop.f32.mrf.mxu0
        %v381 = vpop.f32.mrf.mxu0
        %v382 = vadd.f32 %v281, %v381
        %v383 = vpop.f32.mrf.mxu0
        %384 = vmatprep.mubr.bf16.mxu0 0
        %385 = vmatmul.mubr.bf16.gmra.mxu0 %v300
        %v386 = vpop.f32.mrf.mxu0
        %v387 = vadd.f32 %v281, %v386
        %v388 = vpop.f32.mrf.mxu0
        %v389 = vpop.f32.mrf.mxu0
        %v390 = vadd.f32 %v281, %v389
        %v391 = vpop.f32.mrf.mxu0
        %392 = vmatprep.mubr.bf16.mxu0 0
        %393 = vmatmul.mubr.bf16.gmra.mxu0 %v303
        %v394 = vpop.f32.mrf.mxu0
        %v395 = vadd.f32 %v281, %v394
        %v396 = vpop.f32.mrf.mxu0
        %v397 = vpop.f32.mrf.mxu0
        %v398 = vadd.f32 %v281, %v397
        %v399 = vpop.f32.mrf.mxu0
        %400 = vmatprep.mubr.bf16.mxu0 0
        %401 = vmatmul.mubr.bf16.gmra.mxu0 %v306
        %v402 = vpop.f32.mrf.mxu0
        %v403 = vadd.f32 %v281, %v402
        %v404 = vpop.f32.mrf.mxu0
        %v405 = vpop.f32.mrf.mxu0
        %v406 = vadd.f32 %v281, %v405
        %v407 = vpop.f32.mrf.mxu0
        %408 = vmatprep.mubr.bf16.mxu0 0
        %409 = vmatmul.mubr.bf16.gmra.mxu0 %v309
        %v410 = vpop.f32.mrf.mxu0
        %v411 = vadd.f32 %v281, %v410
        %v412 = vpop.f32.mrf.mxu0
        %v413 = vpop.f32.mrf.mxu0
        %v414 = vadd.f32 %v281, %v413
        %v415 = vpop.f32.mrf.mxu0
        %416 = vmatprep.mubr.bf16.mxu0 0
        %417 = vmatmul.mubr.bf16.gmra.mxu0 %v312
        %v418 = vpop.f32.mrf.mxu0
        %v419 = vadd.f32 %v281, %v418
        %v420 = vpop.f32.mrf.mxu0
        %v421 = vpop.f32.mrf.mxu0
        %v422 = vadd.f32 %v281, %v421
        %v423 = vpop.f32.mrf.mxu0
        %424 = vmatprep.mubr.bf16.mxu0 0
        %425 = vmatmul.mubr.bf16.gmra.mxu0 %v315
        %v426 = vpop.f32.mrf.mxu0
        %v427 = vadd.f32 %v281, %v426
        %v428 = vpop.f32.mrf.mxu0
        %v429 = vpop.f32.mrf.mxu0
        %v430 = vadd.f32 %v281, %v429
        %v431 = vpop.f32.mrf.mxu0
        %432 = vmatprep.mubr.bf16.mxu0 0
        %433 = vmatmul.mubr.bf16.gmra.mxu0 %v318
        %v434 = vpop.f32.mrf.mxu0
        %v435 = vadd.f32 %v281, %v434
        %v436 = vpop.f32.mrf.mxu0
        %v437 = vpop.f32.mrf.mxu0
        %v438 = vadd.f32 %v281, %v437
        %v439 = vpop.f32.mrf.mxu0
        %440 = vmatprep.mubr.bf16.mxu0 0
        %441 = vmatmul.mubr.bf16.gmra.mxu0 %v321
        %v442 = vpop.f32.mrf.mxu0
        %v443 = vadd.f32 %v281, %v442
        %v444 = vpop.f32.mrf.mxu0
        %v445 = vpop.f32.mrf.mxu0
        %v446 = vadd.f32 %v281, %v445
        %v447 = vpop.f32.mrf.mxu0
        %448 = vmatprep.mubr.bf16.mxu0 0
        %449 = vmatmul.mubr.bf16.gmra.mxu0 %v324
        %v450 = vpop.f32.mrf.mxu0
        %v451 = vadd.f32 %v281, %v450
        %v452 = vpop.f32.mrf.mxu0
        %v453 = vpop.f32.mrf.mxu0
        %v454 = vadd.f32 %v281, %v453
        %v455 = vpop.f32.mrf.mxu0
        %456 = vmatprep.mubr.bf16.mxu0 0
        %457 = vmatmul.mubr.bf16.gmra.mxu0 %v327
        %v458 = vpop.f32.mrf.mxu0
        %v459 = vadd.f32 %v281, %v458
        %v460 = vpop.f32.mrf.mxu0
        %v461 = vpop.f32.mrf.mxu0
        %v462 = vadd.f32 %v281, %v461
        %v463 = vpop.f32.mrf.mxu0
        %464 = vmatprep.mubr.bf16.mxu0 0
        %465 = vmatmul.mubr.bf16.gmra.mxu0 %v330
        %v466 = vpop.f32.mrf.mxu0
        %v467 = vadd.f32 %v281, %v466
        %v468 = vpop.f32.mrf.mxu0
        %v469 = vpop.f32.mrf.mxu0
        %v470 = vadd.f32 %v281, %v469
        %v471 = vpop.f32.mrf.mxu0
        %472 = vmatprep.mubr.bf16.mxu0 0
        %473 = vmatmul.mubr.bf16.gmra.mxu0 %v333
        %v474 = vpop.f32.mrf.mxu0
        %v475 = vadd.f32 %v281, %v474
        %v476 = vpop.f32.mrf.mxu0
        %v477 = vpop.f32.mrf.mxu0
        %v478 = vadd.f32 %v281, %v477
        %v479 = vpop.f32.mrf.mxu0
        %480 = vmatprep.mubr.bf16.mxu0 0
        %481 = vmatmul.mubr.bf16.gmra.mxu0 %v336
        %v482 = vpop.f32.mrf.mxu0
        %v483 = vadd.f32 %v281, %v482
        %v484 = vpop.f32.mrf.mxu0
        %v485 = vpop.f32.mrf.mxu0
        %v486 = vadd.f32 %v281, %v485
        %v487 = vpop.f32.mrf.mxu0
        %488 = vmatprep.mubr.bf16.mxu0 0
        %489 = vmatmul.mubr.bf16.gmra.mxu0 %v339
        %v490 = vpop.f32.mrf.mxu0
        %v491 = vadd.f32 %v281, %v490
        %v492 = vpop.f32.mrf.mxu0
        %v493 = vpop.f32.mrf.mxu0
        %v494 = vadd.f32 %v281, %v493
        %v495 = vpop.f32.mrf.mxu0
        %496 = vmatprep.mubr.bf16.mxu0 0
        %497 = vmatmul.mubr.bf16.gmra.mxu0 %v342
        %v498 = vpop.f32.mrf.mxu0
        %v499 = vadd.f32 %v281, %v498
        %v500 = vpop.f32.mrf.mxu0
        %v501 = vpop.f32.mrf.mxu0
        %v502 = vadd.f32 %v281, %v501
        %v503 = vpop.f32.mrf.mxu0
        %504 = vdwg.mxu0
        %v505 = vmax.f32 %v379, 0.0
        %v506 = vmax.f32 %v382, 0.0
        %v507 = vmax.f32 %v387, 0.0
        %v508 = vmax.f32 %v390, 0.0
        %v509 = vmax.f32 %v395, 0.0
        %v510 = vmax.f32 %v398, 0.0
        %v511 = vmax.f32 %v403, 0.0
        %v512 = vmax.f32 %v406, 0.0
        %v513 = vmax.f32 %v411, 0.0
        %v514 = vmax.f32 %v414, 0.0
        %v515 = vmax.f32 %v419, 0.0
        %v516 = vmax.f32 %v422, 0.0
        %v517 = vmax.f32 %v427, 0.0
        %v518 = vmax.f32 %v430, 0.0
        %v519 = vmax.f32 %v435, 0.0
        %v520 = vmax.f32 %v438, 0.0
        %v521 = vmax.f32 %v443, 0.0
        %v522 = vmax.f32 %v446, 0.0
        %v523 = vmax.f32 %v451, 0.0
        %v524 = vmax.f32 %v454, 0.0
        %v525 = vmax.f32 %v459, 0.0
        %v526 = vmax.f32 %v462, 0.0
        %v527 = vmax.f32 %v467, 0.0
        %v528 = vmax.f32 %v470, 0.0
        %v529 = vmax.f32 %v475, 0.0
        %v530 = vmax.f32 %v478, 0.0
        %v531 = vmax.f32 %v483, 0.0
        %v532 = vmax.f32 %v486, 0.0
        %v533 = vmax.f32 %v491, 0.0
        %v534 = vmax.f32 %v494, 0.0
        %v535 = vmax.f32 %v499, 0.0
        %v536 = vmax.f32 %v502, 0.0
        %v537 = vpack.c.bf16 %v506, %v505
        %v538 = vpack.c.bf16 %v508, %v507
        %v539 = vpack.c.bf16 %v510, %v509
        %v540 = vpack.c.bf16 %v512, %v511
        %v541 = vpack.c.bf16 %v514, %v513
        %v542 = vpack.c.bf16 %v516, %v515
        %v543 = vpack.c.bf16 %v518, %v517
        %v544 = vpack.c.bf16 %v520, %v519
        %v545 = vpack.c.bf16 %v522, %v521
        %v546 = vpack.c.bf16 %v524, %v523
        %v547 = vpack.c.bf16 %v526, %v525
        %v548 = vpack.c.bf16 %v528, %v527
        %v549 = vpack.c.bf16 %v530, %v529
        %v550 = vpack.c.bf16 %v532, %v531
        %v551 = vpack.c.bf16 %v534, %v533
        %v552 = vpack.c.bf16 %v536, %v535
        %v553 = vld [vmem:[%s2] sm:$0xf]
        %v554 = vld [vmem:[%s2 + $0x14] sm:$0xf]
        %v555 = vld [vmem:[%s2 + $0x28] sm:$0xf]
        %v556 = vld [vmem:[%s2 + $0x3c] sm:$0xf]
        %v557 = vld [vmem:[%s2 + $0x50] sm:$0xf]
        %v558 = vld [vmem:[%s2 + $0x64] sm:$0xf]
        %v559 = vld [vmem:[%s2 + $0x78] sm:$0xf]
        %v560 = vld [vmem:[%s2 + $0x8c] sm:$0xf]
        %v561 = vld [vmem:[%s2 + $0xa0] sm:$0xf]
        %v562 = vld [vmem:[%s2 + $0xb4] sm:$0xf]
        %v563 = vld [vmem:[%s2 + $0xc8] sm:$0xf]
        %v564 = vld [vmem:[%s2 + $0xdc] sm:$0xf]
        %v565 = vld [vmem:[%s2 + $0xf0] sm:$0xf]
        %v566 = vld [vmem:[%s2 + $0x104] sm:$0xf]
        %v567 = vld [vmem:[%s2 + $0x118] sm:$0xf]
        %v568 = vld [vmem:[%s2 + $0x12c] sm:$0xf]
        %v569 = vld [vmem:[%s3 + $0x1] sm:$0x1]
        %v571 = vlaneseq
        %v572 = vshrl.u32 %v571, 7
        %v573 = vsub.s32 0, %v572
        %v574 = vrot.slane %v569, %v573
        %v592 = vunpack.c.l.b16 %v553
        %v593 = vunpack.c.l.b16 %v554
        %v594 = vunpack.c.l.b16 %v555
        %v595 = vunpack.c.l.b16 %v556
        %v596 = vunpack.c.l.b16 %v557
        %v597 = vunpack.c.l.b16 %v558
        %v598 = vunpack.c.l.b16 %v559
        %v599 = vunpack.c.l.b16 %v560
        %v600 = vunpack.c.l.b16 %v561
        %v601 = vunpack.c.l.b16 %v562
        %v602 = vunpack.c.l.b16 %v563
        %v603 = vunpack.c.l.b16 %v564
        %v604 = vunpack.c.l.b16 %v565
        %v605 = vunpack.c.l.b16 %v566
        %v606 = vunpack.c.l.b16 %v567
        %v607 = vunpack.c.l.b16 %v568
        %v608 = vpack.c.b16 %v593, %v592
        %v609 = vpack.c.b16 %v595, %v594
        %v610 = vpack.c.b16 %v597, %v596
        %v611 = vpack.c.b16 %v599, %v598
        %v612 = vpack.c.b16 %v601, %v600
        %v613 = vpack.c.b16 %v603, %v602
        %v614 = vpack.c.b16 %v605, %v604
        %v615 = vpack.c.b16 %v607, %v606
        %624 = vmatprep.subr.bf16.mxu0 0
        %625 = vmatpush1.bf16.msra.mxu0 %v615
        %626 = vmatprep.subr.bf16.mxu0 0
        %627 = vmatpush1.bf16.msra.mxu0 %v614
        %628 = vmatprep.subr.bf16.mxu0 0
        %629 = vmatpush1.bf16.msra.mxu0 %v613
        %630 = vmatprep.subr.bf16.mxu0 0
        %631 = vmatpush1.bf16.msra.mxu0 %v612
        %632 = vmatprep.subr.bf16.mxu0 0
        %633 = vmatpush1.bf16.msra.mxu0 %v611
        %634 = vmatprep.subr.bf16.mxu0 0
        %635 = vmatpush1.bf16.msra.mxu0 %v610
        %636 = vmatprep.subr.bf16.mxu0 0
        %637 = vmatpush1.bf16.msra.mxu0 %v609
        %638 = vmatprep.subr.bf16.mxu0 0
        %639 = vmatpush1.bf16.msra.mxu0 %v608
        %640 = vmatprep.subr.bf16.mxu0 0
        %641 = vmatpush2.bf16.msra.mxu0 0
        %642 = vmatprep.subr.bf16.mxu0 0
        %643 = vmatpush2.bf16.msra.mxu0 0
        %644 = vmatprep.subr.bf16.mxu0 0
        %645 = vmatpush2.bf16.msra.mxu0 0
        %646 = vmatprep.subr.bf16.mxu0 0
        %647 = vmatpush2.bf16.msra.mxu0 0
        %648 = vmatprep.subr.bf16.mxu0 0
        %649 = vmatpush2.bf16.msra.mxu0 0
        %650 = vmatprep.subr.bf16.mxu0 0
        %651 = vmatpush2.bf16.msra.mxu0 0
        %652 = vmatprep.subr.bf16.mxu0 0
        %653 = vmatpush2.bf16.msra.mxu0 0
        %654 = vmatprep.subr.bf16.mxu0 0
        %655 = vmatpush2.bf16.msra.mxu0 0
        %656 = vmatprep.mubr.bf16.mxu0 0
        %657 = vmatmul.mubr.bf16.gmra.mxu0 %v537
        %v658 = vpop.f32.mrf.mxu0
        %v659 = vadd.f32 %v574, %v658
        %v660 = vpop.f32.mrf.mxu0
        %v661 = vpop.f32.mrf.mxu0
        %v662 = vadd.f32 %v574, %v661
        %v663 = vpop.f32.mrf.mxu0
        %664 = vmatprep.mubr.bf16.mxu0 0
        %665 = vmatmul.mubr.bf16.gmra.mxu0 %v538
        %v666 = vpop.f32.mrf.mxu0
        %v667 = vadd.f32 %v574, %v666
        %v668 = vpop.f32.mrf.mxu0
        %v669 = vpop.f32.mrf.mxu0
        %v670 = vadd.f32 %v574, %v669
        %v671 = vpop.f32.mrf.mxu0
        %672 = vmatprep.mubr.bf16.mxu0 0
        %673 = vmatmul.mubr.bf16.gmra.mxu0 %v539
        %v674 = vpop.f32.mrf.mxu0
        %v675 = vadd.f32 %v574, %v674
        %v676 = vpop.f32.mrf.mxu0
        %v677 = vpop.f32.mrf.mxu0
        %v678 = vadd.f32 %v574, %v677
        %v679 = vpop.f32.mrf.mxu0
        %680 = vmatprep.mubr.bf16.mxu0 0
        %681 = vmatmul.mubr.bf16.gmra.mxu0 %v540
        %v682 = vpop.f32.mrf.mxu0
        %v683 = vadd.f32 %v574, %v682
        %v684 = vpop.f32.mrf.mxu0
        %v685 = vpop.f32.mrf.mxu0
        %v686 = vadd.f32 %v574, %v685
        %v687 = vpop.f32.mrf.mxu0
        %688 = vmatprep.mubr.bf16.mxu0 0
        %689 = vmatmul.mubr.bf16.gmra.mxu0 %v541
        %v690 = vpop.f32.mrf.mxu0
        %v691 = vadd.f32 %v574, %v690
        %v692 = vpop.f32.mrf.mxu0
        %v693 = vpop.f32.mrf.mxu0
        %v694 = vadd.f32 %v574, %v693
        %v695 = vpop.f32.mrf.mxu0
        %696 = vmatprep.mubr.bf16.mxu0 0
        %697 = vmatmul.mubr.bf16.gmra.mxu0 %v542
        %v698 = vpop.f32.mrf.mxu0
        %v699 = vadd.f32 %v574, %v698
        %v700 = vpop.f32.mrf.mxu0
        %v701 = vpop.f32.mrf.mxu0
        %v702 = vadd.f32 %v574, %v701
        %v703 = vpop.f32.mrf.mxu0
        %704 = vmatprep.mubr.bf16.mxu0 0
        %705 = vmatmul.mubr.bf16.gmra.mxu0 %v543
        %v706 = vpop.f32.mrf.mxu0
        %v707 = vadd.f32 %v574, %v706
        %v708 = vpop.f32.mrf.mxu0
        %v709 = vpop.f32.mrf.mxu0
        %v710 = vadd.f32 %v574, %v709
        %v711 = vpop.f32.mrf.mxu0
        %712 = vmatprep.mubr.bf16.mxu0 0
        %713 = vmatmul.mubr.bf16.gmra.mxu0 %v544
        %v714 = vpop.f32.mrf.mxu0
        %v715 = vadd.f32 %v574, %v714
        %v716 = vpop.f32.mrf.mxu0
        %v717 = vpop.f32.mrf.mxu0
        %v718 = vadd.f32 %v574, %v717
        %v719 = vpop.f32.mrf.mxu0
        %720 = vmatprep.mubr.bf16.mxu0 0
        %721 = vmatmul.mubr.bf16.gmra.mxu0 %v545
        %v722 = vpop.f32.mrf.mxu0
        %v723 = vadd.f32 %v574, %v722
        %v724 = vpop.f32.mrf.mxu0
        %v725 = vpop.f32.mrf.mxu0
        %v726 = vadd.f32 %v574, %v725
        %v727 = vpop.f32.mrf.mxu0
        %728 = vmatprep.mubr.bf16.mxu0 0
        %729 = vmatmul.mubr.bf16.gmra.mxu0 %v546
        %v730 = vpop.f32.mrf.mxu0
        %v731 = vadd.f32 %v574, %v730
        %v732 = vpop.f32.mrf.mxu0
        %v733 = vpop.f32.mrf.mxu0
        %v734 = vadd.f32 %v574, %v733
        %v735 = vpop.f32.mrf.mxu0
        %736 = vmatprep.mubr.bf16.mxu0 0
        %737 = vmatmul.mubr.bf16.gmra.mxu0 %v547
        %v738 = vpop.f32.mrf.mxu0
        %v739 = vadd.f32 %v574, %v738
        %v740 = vpop.f32.mrf.mxu0
        %v741 = vpop.f32.mrf.mxu0
        %v742 = vadd.f32 %v574, %v741
        %v743 = vpop.f32.mrf.mxu0
        %744 = vmatprep.mubr.bf16.mxu0 0
        %745 = vmatmul.mubr.bf16.gmra.mxu0 %v548
        %v746 = vpop.f32.mrf.mxu0
        %v747 = vadd.f32 %v574, %v746
        %v748 = vpop.f32.mrf.mxu0
        %v749 = vpop.f32.mrf.mxu0
        %v750 = vadd.f32 %v574, %v749
        %v751 = vpop.f32.mrf.mxu0
        %752 = vmatprep.mubr.bf16.mxu0 0
        %753 = vmatmul.mubr.bf16.gmra.mxu0 %v549
        %v754 = vpop.f32.mrf.mxu0
        %v755 = vadd.f32 %v574, %v754
        %v756 = vpop.f32.mrf.mxu0
        %v757 = vpop.f32.mrf.mxu0
        %v758 = vadd.f32 %v574, %v757
        %v759 = vpop.f32.mrf.mxu0
        %760 = vmatprep.mubr.bf16.mxu0 0
        %761 = vmatmul.mubr.bf16.gmra.mxu0 %v550
        %v762 = vpop.f32.mrf.mxu0
        %v763 = vadd.f32 %v574, %v762
        %v764 = vpop.f32.mrf.mxu0
        %v765 = vpop.f32.mrf.mxu0
        %v766 = vadd.f32 %v574, %v765
        %v767 = vpop.f32.mrf.mxu0
        %768 = vmatprep.mubr.bf16.mxu0 0
        %769 = vmatmul.mubr.bf16.gmra.mxu0 %v551
        %v770 = vpop.f32.mrf.mxu0
        %v771 = vadd.f32 %v574, %v770
        %v772 = vpop.f32.mrf.mxu0
        %v773 = vpop.f32.mrf.mxu0
        %v774 = vadd.f32 %v574, %v773
        %v775 = vpop.f32.mrf.mxu0
        %776 = vmatprep.mubr.bf16.mxu0 0
        %777 = vmatmul.mubr.bf16.gmra.mxu0 %v552
        %v778 = vpop.f32.mrf.mxu0
        %v779 = vadd.f32 %v574, %v778
        %v780 = vpop.f32.mrf.mxu0
        %v781 = vpop.f32.mrf.mxu0
        %v782 = vadd.f32 %v574, %v781
        %v783 = vpop.f32.mrf.mxu0
        %784 = vdwg.mxu0
        %v785 = vmax.f32 %v659, 0.0
        %v786 = vmax.f32 %v662, 0.0
        %v787 = vmax.f32 %v667, 0.0
        %v788 = vmax.f32 %v670, 0.0
        %v789 = vmax.f32 %v675, 0.0
        %v790 = vmax.f32 %v678, 0.0
        %v791 = vmax.f32 %v683, 0.0
        %v792 = vmax.f32 %v686, 0.0
        %v793 = vmax.f32 %v691, 0.0
        %v794 = vmax.f32 %v694, 0.0
        %v795 = vmax.f32 %v699, 0.0
        %v796 = vmax.f32 %v702, 0.0
        %v797 = vmax.f32 %v707, 0.0
        %v798 = vmax.f32 %v710, 0.0
        %v799 = vmax.f32 %v715, 0.0
        %v800 = vmax.f32 %v718, 0.0
        %v801 = vmax.f32 %v723, 0.0
        %v802 = vmax.f32 %v726, 0.0
        %v803 = vmax.f32 %v731, 0.0
        %v804 = vmax.f32 %v734, 0.0
        %v805 = vmax.f32 %v739, 0.0
        %v806 = vmax.f32 %v742, 0.0
        %v807 = vmax.f32 %v747, 0.0
        %v808 = vmax.f32 %v750, 0.0
        %v809 = vmax.f32 %v755, 0.0
        %v810 = vmax.f32 %v758, 0.0
        %v811 = vmax.f32 %v763, 0.0
        %v812 = vmax.f32 %v766, 0.0
        %v813 = vmax.f32 %v771, 0.0
        %v814 = vmax.f32 %v774, 0.0
        %v815 = vmax.f32 %v779, 0.0
        %v816 = vmax.f32 %v782, 0.0
        %v817 = vpack.c.bf16 %v786, %v785
        %v818 = vpack.c.bf16 %v788, %v787
        %v819 = vpack.c.bf16 %v790, %v789
        %v820 = vpack.c.bf16 %v792, %v791
        %v821 = vpack.c.bf16 %v794, %v793
        %v822 = vpack.c.bf16 %v796, %v795
        %v823 = vpack.c.bf16 %v798, %v797
        %v824 = vpack.c.bf16 %v800, %v799
        %v825 = vpack.c.bf16 %v802, %v801
        %v826 = vpack.c.bf16 %v804, %v803
        %v827 = vpack.c.bf16 %v806, %v805
        %v828 = vpack.c.bf16 %v808, %v807
        %v829 = vpack.c.bf16 %v810, %v809
        %v830 = vpack.c.bf16 %v812, %v811
        %v831 = vpack.c.bf16 %v814, %v813
        %v832 = vpack.c.bf16 %v816, %v815
        %v833 = vld [vmem:[%s2 + $0x4] sm:$0xf]
        %v834 = vld [vmem:[%s2 + $0x18] sm:$0xf]
        %v835 = vld [vmem:[%s2 + $0x2c] sm:$0xf]
        %v836 = vld [vmem:[%s2 + $0x40] sm:$0xf]
        %v837 = vld [vmem:[%s2 + $0x54] sm:$0xf]
        %v838 = vld [vmem:[%s2 + $0x68] sm:$0xf]
        %v839 = vld [vmem:[%s2 + $0x7c] sm:$0xf]
        %v840 = vld [vmem:[%s2 + $0x90] sm:$0xf]
        %v841 = vld [vmem:[%s2 + $0xa4] sm:$0xf]
        %v842 = vld [vmem:[%s2 + $0xb8] sm:$0xf]
        %v843 = vld [vmem:[%s2 + $0xcc] sm:$0xf]
        %v844 = vld [vmem:[%s2 + $0xe0] sm:$0xf]
        %v845 = vld [vmem:[%s2 + $0xf4] sm:$0xf]
        %v846 = vld [vmem:[%s2 + $0x108] sm:$0xf]
        %v847 = vld [vmem:[%s2 + $0x11c] sm:$0xf]
        %v848 = vld [vmem:[%s2 + $0x130] sm:$0xf]
        %v849 = vld [vmem:[%s3 + $0x2] sm:$0x1]
        %v851 = vlaneseq
        %v852 = vshrl.u32 %v851, 7
        %v853 = vsub.s32 0, %v852
        %v854 = vrot.slane %v849, %v853
        %v872 = vunpack.c.l.b16 %v833
        %v873 = vunpack.c.l.b16 %v834
        %v874 = vunpack.c.l.b16 %v835
        %v875 = vunpack.c.l.b16 %v836
        %v876 = vunpack.c.l.b16 %v837
        %v877 = vunpack.c.l.b16 %v838
        %v878 = vunpack.c.l.b16 %v839
        %v879 = vunpack.c.l.b16 %v840
        %v880 = vunpack.c.l.b16 %v841
        %v881 = vunpack.c.l.b16 %v842
        %v882 = vunpack.c.l.b16 %v843
        %v883 = vunpack.c.l.b16 %v844
        %v884 = vunpack.c.l.b16 %v845
        %v885 = vunpack.c.l.b16 %v846
        %v886 = vunpack.c.l.b16 %v847
        %v887 = vunpack.c.l.b16 %v848
        %v888 = vpack.c.b16 %v873, %v872
        %v889 = vpack.c.b16 %v875, %v874
        %v890 = vpack.c.b16 %v877, %v876
        %v891 = vpack.c.b16 %v879, %v878
        %v892 = vpack.c.b16 %v881, %v880
        %v893 = vpack.c.b16 %v883, %v882
        %v894 = vpack.c.b16 %v885, %v884
        %v895 = vpack.c.b16 %v887, %v886
        %904 = vmatprep.subr.bf16.mxu0 0
        %905 = vmatpush1.bf16.msra.mxu0 %v895
        %906 = vmatprep.subr.bf16.mxu0 0
        %907 = vmatpush1.bf16.msra.mxu0 %v894
        %908 = vmatprep.subr.bf16.mxu0 0
        %909 = vmatpush1.bf16.msra.mxu0 %v893
        %910 = vmatprep.subr.bf16.mxu0 0
        %911 = vmatpush1.bf16.msra.mxu0 %v892
        %912 = vmatprep.subr.bf16.mxu0 0
        %913 = vmatpush1.bf16.msra.mxu0 %v891
        %914 = vmatprep.subr.bf16.mxu0 0
        %915 = vmatpush1.bf16.msra.mxu0 %v890
        %916 = vmatprep.subr.bf16.mxu0 0
        %917 = vmatpush1.bf16.msra.mxu0 %v889
        %918 = vmatprep.subr.bf16.mxu0 0
        %919 = vmatpush1.bf16.msra.mxu0 %v888
        %920 = vmatprep.subr.bf16.mxu0 0
        %921 = vmatpush2.bf16.msra.mxu0 0
        %922 = vmatprep.subr.bf16.mxu0 0
        %923 = vmatpush2.bf16.msra.mxu0 0
        %924 = vmatprep.subr.bf16.mxu0 0
        %925 = vmatpush2.bf16.msra.mxu0 0
        %926 = vmatprep.subr.bf16.mxu0 0
        %927 = vmatpush2.bf16.msra.mxu0 0
        %928 = vmatprep.subr.bf16.mxu0 0
        %929 = vmatpush2.bf16.msra.mxu0 0
        %930 = vmatprep.subr.bf16.mxu0 0
        %931 = vmatpush2.bf16.msra.mxu0 0
        %932 = vmatprep.subr.bf16.mxu0 0
        %933 = vmatpush2.bf16.msra.mxu0 0
        %934 = vmatprep.subr.bf16.mxu0 0
        %935 = vmatpush2.bf16.msra.mxu0 0
        %936 = vmatprep.mubr.bf16.mxu0 0
        %937 = vmatmul.mubr.bf16.gmra.mxu0 %v817
        %v938 = vpop.f32.mrf.mxu0
        %v939 = vadd.f32 %v854, %v938
        %v940 = vpop.f32.mrf.mxu0
        %v941 = vpop.f32.mrf.mxu0
        %v942 = vadd.f32 %v854, %v941
        %v943 = vpop.f32.mrf.mxu0
        %944 = vmatprep.mubr.bf16.mxu0 0
        %945 = vmatmul.mubr.bf16.gmra.mxu0 %v818
        %v946 = vpop.f32.mrf.mxu0
        %v947 = vadd.f32 %v854, %v946
        %v948 = vpop.f32.mrf.mxu0
        %v949 = vpop.f32.mrf.mxu0
        %v950 = vadd.f32 %v854, %v949
        %v951 = vpop.f32.mrf.mxu0
        %952 = vmatprep.mubr.bf16.mxu0 0
        %953 = vmatmul.mubr.bf16.gmra.mxu0 %v819
        %v954 = vpop.f32.mrf.mxu0
        %v955 = vadd.f32 %v854, %v954
        %v956 = vpop.f32.mrf.mxu0
        %v957 = vpop.f32.mrf.mxu0
        %v958 = vadd.f32 %v854, %v957
        %v959 = vpop.f32.mrf.mxu0
        %960 = vmatprep.mubr.bf16.mxu0 0
        %961 = vmatmul.mubr.bf16.gmra.mxu0 %v820
        %v962 = vpop.f32.mrf.mxu0
        %v963 = vadd.f32 %v854, %v962
        %v964 = vpop.f32.mrf.mxu0
        %v965 = vpop.f32.mrf.mxu0
        %v966 = vadd.f32 %v854, %v965
        %v967 = vpop.f32.mrf.mxu0
        %968 = vmatprep.mubr.bf16.mxu0 0
        %969 = vmatmul.mubr.bf16.gmra.mxu0 %v821
        %v970 = vpop.f32.mrf.mxu0
        %v971 = vadd.f32 %v854, %v970
        %v972 = vpop.f32.mrf.mxu0
        %v973 = vpop.f32.mrf.mxu0
        %v974 = vadd.f32 %v854, %v973
        %v975 = vpop.f32.mrf.mxu0
        %976 = vmatprep.mubr.bf16.mxu0 0
        %977 = vmatmul.mubr.bf16.gmra.mxu0 %v822
        %v978 = vpop.f32.mrf.mxu0
        %v979 = vadd.f32 %v854, %v978
        %v980 = vpop.f32.mrf.mxu0
        %v981 = vpop.f32.mrf.mxu0
        %v982 = vadd.f32 %v854, %v981
        %v983 = vpop.f32.mrf.mxu0
        %984 = vmatprep.mubr.bf16.mxu0 0
        %985 = vmatmul.mubr.bf16.gmra.mxu0 %v823
        %v986 = vpop.f32.mrf.mxu0
        %v987 = vadd.f32 %v854, %v986
        %v988 = vpop.f32.mrf.mxu0
        %v989 = vpop.f32.mrf.mxu0
        %v990 = vadd.f32 %v854, %v989
        %v991 = vpop.f32.mrf.mxu0
        %992 = vmatprep.mubr.bf16.mxu0 0
        %993 = vmatmul.mubr.bf16.gmra.mxu0 %v824
        %v994 = vpop.f32.mrf.mxu0
        %v995 = vadd.f32 %v854, %v994
        %v996 = vpop.f32.mrf.mxu0
        %v997 = vpop.f32.mrf.mxu0
        %v998 = vadd.f32 %v854, %v997
        %v999 = vpop.f32.mrf.mxu0
        %1000 = vmatprep.mubr.bf16.mxu0 0
        %1001 = vmatmul.mubr.bf16.gmra.mxu0 %v825
        %v1002 = vpop.f32.mrf.mxu0
        %v1003 = vadd.f32 %v854, %v1002
        %v1004 = vpop.f32.mrf.mxu0
        %v1005 = vpop.f32.mrf.mxu0
        %v1006 = vadd.f32 %v854, %v1005
        %v1007 = vpop.f32.mrf.mxu0
        %1008 = vmatprep.mubr.bf16.mxu0 0
        %1009 = vmatmul.mubr.bf16.gmra.mxu0 %v826
        %v1010 = vpop.f32.mrf.mxu0
        %v1011 = vadd.f32 %v854, %v1010
        %v1012 = vpop.f32.mrf.mxu0
        %v1013 = vpop.f32.mrf.mxu0
        %v1014 = vadd.f32 %v854, %v1013
        %v1015 = vpop.f32.mrf.mxu0
        %1016 = vmatprep.mubr.bf16.mxu0 0
        %1017 = vmatmul.mubr.bf16.gmra.mxu0 %v827
        %v1018 = vpop.f32.mrf.mxu0
        %v1019 = vadd.f32 %v854, %v1018
        %v1020 = vpop.f32.mrf.mxu0
        %v1021 = vpop.f32.mrf.mxu0
        %v1022 = vadd.f32 %v854, %v1021
        %v1023 = vpop.f32.mrf.mxu0
        %1024 = vmatprep.mubr.bf16.mxu0 0
        %1025 = vmatmul.mubr.bf16.gmra.mxu0 %v828
        %v1026 = vpop.f32.mrf.mxu0
        %v1027 = vadd.f32 %v854, %v1026
        %v1028 = vpop.f32.mrf.mxu0
        %v1029 = vpop.f32.mrf.mxu0
        %v1030 = vadd.f32 %v854, %v1029
        %v1031 = vpop.f32.mrf.mxu0
        %1032 = vmatprep.mubr.bf16.mxu0 0
        %1033 = vmatmul.mubr.bf16.gmra.mxu0 %v829
        %v1034 = vpop.f32.mrf.mxu0
        %v1035 = vadd.f32 %v854, %v1034
        %v1036 = vpop.f32.mrf.mxu0
        %v1037 = vpop.f32.mrf.mxu0
        %v1038 = vadd.f32 %v854, %v1037
        %v1039 = vpop.f32.mrf.mxu0
        %1040 = vmatprep.mubr.bf16.mxu0 0
        %1041 = vmatmul.mubr.bf16.gmra.mxu0 %v830
        %v1042 = vpop.f32.mrf.mxu0
        %v1043 = vadd.f32 %v854, %v1042
        %v1044 = vpop.f32.mrf.mxu0
        %v1045 = vpop.f32.mrf.mxu0
        %v1046 = vadd.f32 %v854, %v1045
        %v1047 = vpop.f32.mrf.mxu0
        %1048 = vmatprep.mubr.bf16.mxu0 0
        %1049 = vmatmul.mubr.bf16.gmra.mxu0 %v831
        %v1050 = vpop.f32.mrf.mxu0
        %v1051 = vadd.f32 %v854, %v1050
        %v1052 = vpop.f32.mrf.mxu0
        %v1053 = vpop.f32.mrf.mxu0
        %v1054 = vadd.f32 %v854, %v1053
        %v1055 = vpop.f32.mrf.mxu0
        %1056 = vmatprep.mubr.bf16.mxu0 0
        %1057 = vmatmul.mubr.bf16.gmra.mxu0 %v832
        %v1058 = vpop.f32.mrf.mxu0
        %v1059 = vadd.f32 %v854, %v1058
        %v1060 = vpop.f32.mrf.mxu0
        %v1061 = vpop.f32.mrf.mxu0
        %v1062 = vadd.f32 %v854, %v1061
        %v1063 = vpop.f32.mrf.mxu0
        %1064 = vdwg.mxu0
        %v1065 = vmax.f32 %v939, 0.0
        %v1066 = vmax.f32 %v942, 0.0
        %v1067 = vmax.f32 %v947, 0.0
        %v1068 = vmax.f32 %v950, 0.0
        %v1069 = vmax.f32 %v955, 0.0
        %v1070 = vmax.f32 %v958, 0.0
        %v1071 = vmax.f32 %v963, 0.0
        %v1072 = vmax.f32 %v966, 0.0
        %v1073 = vmax.f32 %v971, 0.0
        %v1074 = vmax.f32 %v974, 0.0
        %v1075 = vmax.f32 %v979, 0.0
        %v1076 = vmax.f32 %v982, 0.0
        %v1077 = vmax.f32 %v987, 0.0
        %v1078 = vmax.f32 %v990, 0.0
        %v1079 = vmax.f32 %v995, 0.0
        %v1080 = vmax.f32 %v998, 0.0
        %v1081 = vmax.f32 %v1003, 0.0
        %v1082 = vmax.f32 %v1006, 0.0
        %v1083 = vmax.f32 %v1011, 0.0
        %v1084 = vmax.f32 %v1014, 0.0
        %v1085 = vmax.f32 %v1019, 0.0
        %v1086 = vmax.f32 %v1022, 0.0
        %v1087 = vmax.f32 %v1027, 0.0
        %v1088 = vmax.f32 %v1030, 0.0
        %v1089 = vmax.f32 %v1035, 0.0
        %v1090 = vmax.f32 %v1038, 0.0
        %v1091 = vmax.f32 %v1043, 0.0
        %v1092 = vmax.f32 %v1046, 0.0
        %v1093 = vmax.f32 %v1051, 0.0
        %v1094 = vmax.f32 %v1054, 0.0
        %v1095 = vmax.f32 %v1059, 0.0
        %v1096 = vmax.f32 %v1062, 0.0
        %v1097 = vpack.c.bf16 %v1066, %v1065
        %v1098 = vpack.c.bf16 %v1068, %v1067
        %v1099 = vpack.c.bf16 %v1070, %v1069
        %v1100 = vpack.c.bf16 %v1072, %v1071
        %v1101 = vpack.c.bf16 %v1074, %v1073
        %v1102 = vpack.c.bf16 %v1076, %v1075
        %v1103 = vpack.c.bf16 %v1078, %v1077
        %v1104 = vpack.c.bf16 %v1080, %v1079
        %v1105 = vpack.c.bf16 %v1082, %v1081
        %v1106 = vpack.c.bf16 %v1084, %v1083
        %v1107 = vpack.c.bf16 %v1086, %v1085
        %v1108 = vpack.c.bf16 %v1088, %v1087
        %v1109 = vpack.c.bf16 %v1090, %v1089
        %v1110 = vpack.c.bf16 %v1092, %v1091
        %v1111 = vpack.c.bf16 %v1094, %v1093
        %v1112 = vpack.c.bf16 %v1096, %v1095
        %v1113 = vld [vmem:[%s2 + $0x8] sm:$0xf]
        %v1114 = vld [vmem:[%s2 + $0x1c] sm:$0xf]
        %v1115 = vld [vmem:[%s2 + $0x30] sm:$0xf]
        %v1116 = vld [vmem:[%s2 + $0x44] sm:$0xf]
        %v1117 = vld [vmem:[%s2 + $0x58] sm:$0xf]
        %v1118 = vld [vmem:[%s2 + $0x6c] sm:$0xf]
        %v1119 = vld [vmem:[%s2 + $0x80] sm:$0xf]
        %v1120 = vld [vmem:[%s2 + $0x94] sm:$0xf]
        %v1121 = vld [vmem:[%s2 + $0xa8] sm:$0xf]
        %v1122 = vld [vmem:[%s2 + $0xbc] sm:$0xf]
        %v1123 = vld [vmem:[%s2 + $0xd0] sm:$0xf]
        %v1124 = vld [vmem:[%s2 + $0xe4] sm:$0xf]
        %v1125 = vld [vmem:[%s2 + $0xf8] sm:$0xf]
        %v1126 = vld [vmem:[%s2 + $0x10c] sm:$0xf]
        %v1127 = vld [vmem:[%s2 + $0x120] sm:$0xf]
        %v1128 = vld [vmem:[%s2 + $0x134] sm:$0xf]
        %v1129 = vld [vmem:[%s3 + $0x3] sm:$0x1]
        %v1131 = vlaneseq
        %v1132 = vshrl.u32 %v1131, 7
        %v1133 = vsub.s32 0, %v1132
        %v1134 = vrot.slane %v1129, %v1133
        %v1152 = vunpack.c.l.b16 %v1113
        %v1153 = vunpack.c.l.b16 %v1114
        %v1154 = vunpack.c.l.b16 %v1115
        %v1155 = vunpack.c.l.b16 %v1116
        %v1156 = vunpack.c.l.b16 %v1117
        %v1157 = vunpack.c.l.b16 %v1118
        %v1158 = vunpack.c.l.b16 %v1119
        %v1159 = vunpack.c.l.b16 %v1120
        %v1160 = vunpack.c.l.b16 %v1121
        %v1161 = vunpack.c.l.b16 %v1122
        %v1162 = vunpack.c.l.b16 %v1123
        %v1163 = vunpack.c.l.b16 %v1124
        %v1164 = vunpack.c.l.b16 %v1125
        %v1165 = vunpack.c.l.b16 %v1126
        %v1166 = vunpack.c.l.b16 %v1127
        %v1167 = vunpack.c.l.b16 %v1128
        %v1168 = vpack.c.b16 %v1153, %v1152
        %v1169 = vpack.c.b16 %v1155, %v1154
        %v1170 = vpack.c.b16 %v1157, %v1156
        %v1171 = vpack.c.b16 %v1159, %v1158
        %v1172 = vpack.c.b16 %v1161, %v1160
        %v1173 = vpack.c.b16 %v1163, %v1162
        %v1174 = vpack.c.b16 %v1165, %v1164
        %v1175 = vpack.c.b16 %v1167, %v1166
        %1184 = vmatprep.subr.bf16.mxu0 0
        %1185 = vmatpush1.bf16.msra.mxu0 %v1175
        %1186 = vmatprep.subr.bf16.mxu0 0
        %1187 = vmatpush1.bf16.msra.mxu0 %v1174
        %1188 = vmatprep.subr.bf16.mxu0 0
        %1189 = vmatpush1.bf16.msra.mxu0 %v1173
        %1190 = vmatprep.subr.bf16.mxu0 0
        %1191 = vmatpush1.bf16.msra.mxu0 %v1172
        %1192 = vmatprep.subr.bf16.mxu0 0
        %1193 = vmatpush1.bf16.msra.mxu0 %v1171
        %1194 = vmatprep.subr.bf16.mxu0 0
        %1195 = vmatpush1.bf16.msra.mxu0 %v1170
        %1196 = vmatprep.subr.bf16.mxu0 0
        %1197 = vmatpush1.bf16.msra.mxu0 %v1169
        %1198 = vmatprep.subr.bf16.mxu0 0
        %1199 = vmatpush1.bf16.msra.mxu0 %v1168
        %1200 = vmatprep.subr.bf16.mxu0 0
        %1201 = vmatpush2.bf16.msra.mxu0 0
        %1202 = vmatprep.subr.bf16.mxu0 0
        %1203 = vmatpush2.bf16.msra.mxu0 0
        %1204 = vmatprep.subr.bf16.mxu0 0
        %1205 = vmatpush2.bf16.msra.mxu0 0
        %1206 = vmatprep.subr.bf16.mxu0 0
        %1207 = vmatpush2.bf16.msra.mxu0 0
        %1208 = vmatprep.subr.bf16.mxu0 0
        %1209 = vmatpush2.bf16.msra.mxu0 0
        %1210 = vmatprep.subr.bf16.mxu0 0
        %1211 = vmatpush2.bf16.msra.mxu0 0
        %1212 = vmatprep.subr.bf16.mxu0 0
        %1213 = vmatpush2.bf16.msra.mxu0 0
        %1214 = vmatprep.subr.bf16.mxu0 0
        %1215 = vmatpush2.bf16.msra.mxu0 0
        %1216 = vmatprep.mubr.bf16.mxu0 0
        %1217 = vmatmul.mubr.bf16.gmra.mxu0 %v1097
        %v1218 = vpop.f32.mrf.mxu0
        %v1219 = vadd.f32 %v1134, %v1218
        %v1220 = vpop.f32.mrf.mxu0
        %v1221 = vpop.f32.mrf.mxu0
        %v1222 = vadd.f32 %v1134, %v1221
        %v1223 = vpop.f32.mrf.mxu0
        %1224 = vmatprep.mubr.bf16.mxu0 0
        %1225 = vmatmul.mubr.bf16.gmra.mxu0 %v1098
        %v1226 = vpop.f32.mrf.mxu0
        %v1227 = vadd.f32 %v1134, %v1226
        %v1228 = vpop.f32.mrf.mxu0
        %v1229 = vpop.f32.mrf.mxu0
        %v1230 = vadd.f32 %v1134, %v1229
        %v1231 = vpop.f32.mrf.mxu0
        %1232 = vmatprep.mubr.bf16.mxu0 0
        %1233 = vmatmul.mubr.bf16.gmra.mxu0 %v1099
        %v1234 = vpop.f32.mrf.mxu0
        %v1235 = vadd.f32 %v1134, %v1234
        %v1236 = vpop.f32.mrf.mxu0
        %v1237 = vpop.f32.mrf.mxu0
        %v1238 = vadd.f32 %v1134, %v1237
        %v1239 = vpop.f32.mrf.mxu0
        %1240 = vmatprep.mubr.bf16.mxu0 0
        %1241 = vmatmul.mubr.bf16.gmra.mxu0 %v1100
        %v1242 = vpop.f32.mrf.mxu0
        %v1243 = vadd.f32 %v1134, %v1242
        %v1244 = vpop.f32.mrf.mxu0
        %v1245 = vpop.f32.mrf.mxu0
        %v1246 = vadd.f32 %v1134, %v1245
        %v1247 = vpop.f32.mrf.mxu0
        %1248 = vmatprep.mubr.bf16.mxu0 0
        %1249 = vmatmul.mubr.bf16.gmra.mxu0 %v1101
        %v1250 = vpop.f32.mrf.mxu0
        %v1251 = vadd.f32 %v1134, %v1250
        %v1252 = vpop.f32.mrf.mxu0
        %v1253 = vpop.f32.mrf.mxu0
        %v1254 = vadd.f32 %v1134, %v1253
        %v1255 = vpop.f32.mrf.mxu0
        %1256 = vmatprep.mubr.bf16.mxu0 0
        %1257 = vmatmul.mubr.bf16.gmra.mxu0 %v1102
        %v1258 = vpop.f32.mrf.mxu0
        %v1259 = vadd.f32 %v1134, %v1258
        %v1260 = vpop.f32.mrf.mxu0
        %v1261 = vpop.f32.mrf.mxu0
        %v1262 = vadd.f32 %v1134, %v1261
        %v1263 = vpop.f32.mrf.mxu0
        %1264 = vmatprep.mubr.bf16.mxu0 0
        %1265 = vmatmul.mubr.bf16.gmra.mxu0 %v1103
        %v1266 = vpop.f32.mrf.mxu0
        %v1267 = vadd.f32 %v1134, %v1266
        %v1268 = vpop.f32.mrf.mxu0
        %v1269 = vpop.f32.mrf.mxu0
        %v1270 = vadd.f32 %v1134, %v1269
        %v1271 = vpop.f32.mrf.mxu0
        %1272 = vmatprep.mubr.bf16.mxu0 0
        %1273 = vmatmul.mubr.bf16.gmra.mxu0 %v1104
        %v1274 = vpop.f32.mrf.mxu0
        %v1275 = vadd.f32 %v1134, %v1274
        %v1276 = vpop.f32.mrf.mxu0
        %v1277 = vpop.f32.mrf.mxu0
        %v1278 = vadd.f32 %v1134, %v1277
        %v1279 = vpop.f32.mrf.mxu0
        %1280 = vmatprep.mubr.bf16.mxu0 0
        %1281 = vmatmul.mubr.bf16.gmra.mxu0 %v1105
        %v1282 = vpop.f32.mrf.mxu0
        %v1283 = vadd.f32 %v1134, %v1282
        %v1284 = vpop.f32.mrf.mxu0
        %v1285 = vpop.f32.mrf.mxu0
        %v1286 = vadd.f32 %v1134, %v1285
        %v1287 = vpop.f32.mrf.mxu0
        %1288 = vmatprep.mubr.bf16.mxu0 0
        %1289 = vmatmul.mubr.bf16.gmra.mxu0 %v1106
        %v1290 = vpop.f32.mrf.mxu0
        %v1291 = vadd.f32 %v1134, %v1290
        %v1292 = vpop.f32.mrf.mxu0
        %v1293 = vpop.f32.mrf.mxu0
        %v1294 = vadd.f32 %v1134, %v1293
        %v1295 = vpop.f32.mrf.mxu0
        %1296 = vmatprep.mubr.bf16.mxu0 0
        %1297 = vmatmul.mubr.bf16.gmra.mxu0 %v1107
        %v1298 = vpop.f32.mrf.mxu0
        %v1299 = vadd.f32 %v1134, %v1298
        %v1300 = vpop.f32.mrf.mxu0
        %v1301 = vpop.f32.mrf.mxu0
        %v1302 = vadd.f32 %v1134, %v1301
        %v1303 = vpop.f32.mrf.mxu0
        %1304 = vmatprep.mubr.bf16.mxu0 0
        %1305 = vmatmul.mubr.bf16.gmra.mxu0 %v1108
        %v1306 = vpop.f32.mrf.mxu0
        %v1307 = vadd.f32 %v1134, %v1306
        %v1308 = vpop.f32.mrf.mxu0
        %v1309 = vpop.f32.mrf.mxu0
        %v1310 = vadd.f32 %v1134, %v1309
        %v1311 = vpop.f32.mrf.mxu0
        %1312 = vmatprep.mubr.bf16.mxu0 0
        %1313 = vmatmul.mubr.bf16.gmra.mxu0 %v1109
        %v1314 = vpop.f32.mrf.mxu0
        %v1315 = vadd.f32 %v1134, %v1314
        %v1316 = vpop.f32.mrf.mxu0
        %v1317 = vpop.f32.mrf.mxu0
        %v1318 = vadd.f32 %v1134, %v1317
        %v1319 = vpop.f32.mrf.mxu0
        %1320 = vmatprep.mubr.bf16.mxu0 0
        %1321 = vmatmul.mubr.bf16.gmra.mxu0 %v1110
        %v1322 = vpop.f32.mrf.mxu0
        %v1323 = vadd.f32 %v1134, %v1322
        %v1324 = vpop.f32.mrf.mxu0
        %v1325 = vpop.f32.mrf.mxu0
        %v1326 = vadd.f32 %v1134, %v1325
        %v1327 = vpop.f32.mrf.mxu0
        %1328 = vmatprep.mubr.bf16.mxu0 0
        %1329 = vmatmul.mubr.bf16.gmra.mxu0 %v1111
        %v1330 = vpop.f32.mrf.mxu0
        %v1331 = vadd.f32 %v1134, %v1330
        %v1332 = vpop.f32.mrf.mxu0
        %v1333 = vpop.f32.mrf.mxu0
        %v1334 = vadd.f32 %v1134, %v1333
        %v1335 = vpop.f32.mrf.mxu0
        %1336 = vmatprep.mubr.bf16.mxu0 0
        %1337 = vmatmul.mubr.bf16.gmra.mxu0 %v1112
        %v1338 = vpop.f32.mrf.mxu0
        %v1339 = vadd.f32 %v1134, %v1338
        %v1340 = vpop.f32.mrf.mxu0
        %v1341 = vpop.f32.mrf.mxu0
        %v1342 = vadd.f32 %v1134, %v1341
        %v1343 = vpop.f32.mrf.mxu0
        %1344 = vdwg.mxu0
        %v1345 = vmax.f32 %v1219, 0.0
        %v1346 = vmax.f32 %v1222, 0.0
        %v1347 = vmax.f32 %v1227, 0.0
        %v1348 = vmax.f32 %v1230, 0.0
        %v1349 = vmax.f32 %v1235, 0.0
        %v1350 = vmax.f32 %v1238, 0.0
        %v1351 = vmax.f32 %v1243, 0.0
        %v1352 = vmax.f32 %v1246, 0.0
        %v1353 = vmax.f32 %v1251, 0.0
        %v1354 = vmax.f32 %v1254, 0.0
        %v1355 = vmax.f32 %v1259, 0.0
        %v1356 = vmax.f32 %v1262, 0.0
        %v1357 = vmax.f32 %v1267, 0.0
        %v1358 = vmax.f32 %v1270, 0.0
        %v1359 = vmax.f32 %v1275, 0.0
        %v1360 = vmax.f32 %v1278, 0.0
        %v1361 = vmax.f32 %v1283, 0.0
        %v1362 = vmax.f32 %v1286, 0.0
        %v1363 = vmax.f32 %v1291, 0.0
        %v1364 = vmax.f32 %v1294, 0.0
        %v1365 = vmax.f32 %v1299, 0.0
        %v1366 = vmax.f32 %v1302, 0.0
        %v1367 = vmax.f32 %v1307, 0.0
        %v1368 = vmax.f32 %v1310, 0.0
        %v1369 = vmax.f32 %v1315, 0.0
        %v1370 = vmax.f32 %v1318, 0.0
        %v1371 = vmax.f32 %v1323, 0.0
        %v1372 = vmax.f32 %v1326, 0.0
        %v1373 = vmax.f32 %v1331, 0.0
        %v1374 = vmax.f32 %v1334, 0.0
        %v1375 = vmax.f32 %v1339, 0.0
        %v1376 = vmax.f32 %v1342, 0.0
        %v1377 = vpack.c.bf16 %v1346, %v1345
        %v1378 = vpack.c.bf16 %v1348, %v1347
        %v1379 = vpack.c.bf16 %v1350, %v1349
        %v1380 = vpack.c.bf16 %v1352, %v1351
        %v1381 = vpack.c.bf16 %v1354, %v1353
        %v1382 = vpack.c.bf16 %v1356, %v1355
        %v1383 = vpack.c.bf16 %v1358, %v1357
        %v1384 = vpack.c.bf16 %v1360, %v1359
        %v1385 = vpack.c.bf16 %v1362, %v1361
        %v1386 = vpack.c.bf16 %v1364, %v1363
        %v1387 = vpack.c.bf16 %v1366, %v1365
        %v1388 = vpack.c.bf16 %v1368, %v1367
        %v1389 = vpack.c.bf16 %v1370, %v1369
        %v1390 = vpack.c.bf16 %v1372, %v1371
        %v1391 = vpack.c.bf16 %v1374, %v1373
        %v1392 = vpack.c.bf16 %v1376, %v1375
        %v1393 = vld [vmem:[%s2 + $0xc] sm:$0xf]
        %v1394 = vld [vmem:[%s2 + $0x20] sm:$0xf]
        %v1395 = vld [vmem:[%s2 + $0x34] sm:$0xf]
        %v1396 = vld [vmem:[%s2 + $0x48] sm:$0xf]
        %v1397 = vld [vmem:[%s2 + $0x5c] sm:$0xf]
        %v1398 = vld [vmem:[%s2 + $0x70] sm:$0xf]
        %v1399 = vld [vmem:[%s2 + $0x84] sm:$0xf]
        %v1400 = vld [vmem:[%s2 + $0x98] sm:$0xf]
        %v1401 = vld [vmem:[%s2 + $0xac] sm:$0xf]
        %v1402 = vld [vmem:[%s2 + $0xc0] sm:$0xf]
        %v1403 = vld [vmem:[%s2 + $0xd4] sm:$0xf]
        %v1404 = vld [vmem:[%s2 + $0xe8] sm:$0xf]
        %v1405 = vld [vmem:[%s2 + $0xfc] sm:$0xf]
        %v1406 = vld [vmem:[%s2 + $0x110] sm:$0xf]
        %v1407 = vld [vmem:[%s2 + $0x124] sm:$0xf]
        %v1408 = vld [vmem:[%s2 + $0x138] sm:$0xf]
        %v1409 = vld [vmem:[%s3 + $0x4] sm:$0x1]
        %v1411 = vlaneseq
        %v1412 = vshrl.u32 %v1411, 7
        %v1413 = vsub.s32 0, %v1412
        %v1414 = vrot.slane %v1409, %v1413
        %v1432 = vunpack.c.l.b16 %v1393
        %v1433 = vunpack.c.l.b16 %v1394
        %v1434 = vunpack.c.l.b16 %v1395
        %v1435 = vunpack.c.l.b16 %v1396
        %v1436 = vunpack.c.l.b16 %v1397
        %v1437 = vunpack.c.l.b16 %v1398
        %v1438 = vunpack.c.l.b16 %v1399
        %v1439 = vunpack.c.l.b16 %v1400
        %v1440 = vunpack.c.l.b16 %v1401
        %v1441 = vunpack.c.l.b16 %v1402
        %v1442 = vunpack.c.l.b16 %v1403
        %v1443 = vunpack.c.l.b16 %v1404
        %v1444 = vunpack.c.l.b16 %v1405
        %v1445 = vunpack.c.l.b16 %v1406
        %v1446 = vunpack.c.l.b16 %v1407
        %v1447 = vunpack.c.l.b16 %v1408
        %v1448 = vpack.c.b16 %v1433, %v1432
        %v1449 = vpack.c.b16 %v1435, %v1434
        %v1450 = vpack.c.b16 %v1437, %v1436
        %v1451 = vpack.c.b16 %v1439, %v1438
        %v1452 = vpack.c.b16 %v1441, %v1440
        %v1453 = vpack.c.b16 %v1443, %v1442
        %v1454 = vpack.c.b16 %v1445, %v1444
        %v1455 = vpack.c.b16 %v1447, %v1446
        %1464 = vmatprep.subr.bf16.mxu0 0
        %1465 = vmatpush1.bf16.msra.mxu0 %v1455
        %1466 = vmatprep.subr.bf16.mxu0 0
        %1467 = vmatpush1.bf16.msra.mxu0 %v1454
        %1468 = vmatprep.subr.bf16.mxu0 0
        %1469 = vmatpush1.bf16.msra.mxu0 %v1453
        %1470 = vmatprep.subr.bf16.mxu0 0
        %1471 = vmatpush1.bf16.msra.mxu0 %v1452
        %1472 = vmatprep.subr.bf16.mxu0 0
        %1473 = vmatpush1.bf16.msra.mxu0 %v1451
        %1474 = vmatprep.subr.bf16.mxu0 0
        %1475 = vmatpush1.bf16.msra.mxu0 %v1450
        %1476 = vmatprep.subr.bf16.mxu0 0
        %1477 = vmatpush1.bf16.msra.mxu0 %v1449
        %1478 = vmatprep.subr.bf16.mxu0 0
        %1479 = vmatpush1.bf16.msra.mxu0 %v1448
        %1480 = vmatprep.subr.bf16.mxu0 0
        %1481 = vmatpush2.bf16.msra.mxu0 0
        %1482 = vmatprep.subr.bf16.mxu0 0
        %1483 = vmatpush2.bf16.msra.mxu0 0
        %1484 = vmatprep.subr.bf16.mxu0 0
        %1485 = vmatpush2.bf16.msra.mxu0 0
        %1486 = vmatprep.subr.bf16.mxu0 0
        %1487 = vmatpush2.bf16.msra.mxu0 0
        %1488 = vmatprep.subr.bf16.mxu0 0
        %1489 = vmatpush2.bf16.msra.mxu0 0
        %1490 = vmatprep.subr.bf16.mxu0 0
        %1491 = vmatpush2.bf16.msra.mxu0 0
        %1492 = vmatprep.subr.bf16.mxu0 0
        %1493 = vmatpush2.bf16.msra.mxu0 0
        %1494 = vmatprep.subr.bf16.mxu0 0
        %1495 = vmatpush2.bf16.msra.mxu0 0
        %1496 = vmatprep.mubr.bf16.mxu0 0
        %1497 = vmatmul.mubr.bf16.gmra.mxu0 %v1377
        %v1498 = vpop.f32.mrf.mxu0
        %v1499 = vadd.f32 %v1414, %v1498
        %v1500 = vpop.f32.mrf.mxu0
        %v1501 = vpop.f32.mrf.mxu0
        %v1502 = vadd.f32 %v1414, %v1501
        %v1503 = vpop.f32.mrf.mxu0
        %1504 = vmatprep.mubr.bf16.mxu0 0
        %1505 = vmatmul.mubr.bf16.gmra.mxu0 %v1378
        %v1506 = vpop.f32.mrf.mxu0
        %v1507 = vadd.f32 %v1414, %v1506
        %v1508 = vpop.f32.mrf.mxu0
        %v1509 = vpop.f32.mrf.mxu0
        %v1510 = vadd.f32 %v1414, %v1509
        %v1511 = vpop.f32.mrf.mxu0
        %1512 = vmatprep.mubr.bf16.mxu0 0
        %1513 = vmatmul.mubr.bf16.gmra.mxu0 %v1379
        %v1514 = vpop.f32.mrf.mxu0
        %v1515 = vadd.f32 %v1414, %v1514
        %v1516 = vpop.f32.mrf.mxu0
        %v1517 = vpop.f32.mrf.mxu0
        %v1518 = vadd.f32 %v1414, %v1517
        %v1519 = vpop.f32.mrf.mxu0
        %1520 = vmatprep.mubr.bf16.mxu0 0
        %1521 = vmatmul.mubr.bf16.gmra.mxu0 %v1380
        %v1522 = vpop.f32.mrf.mxu0
        %v1523 = vadd.f32 %v1414, %v1522
        %v1524 = vpop.f32.mrf.mxu0
        %v1525 = vpop.f32.mrf.mxu0
        %v1526 = vadd.f32 %v1414, %v1525
        %v1527 = vpop.f32.mrf.mxu0
        %1528 = vmatprep.mubr.bf16.mxu0 0
        %1529 = vmatmul.mubr.bf16.gmra.mxu0 %v1381
        %v1530 = vpop.f32.mrf.mxu0
        %v1531 = vadd.f32 %v1414, %v1530
        %v1532 = vpop.f32.mrf.mxu0
        %v1533 = vpop.f32.mrf.mxu0
        %v1534 = vadd.f32 %v1414, %v1533
        %v1535 = vpop.f32.mrf.mxu0
        %1536 = vmatprep.mubr.bf16.mxu0 0
        %1537 = vmatmul.mubr.bf16.gmra.mxu0 %v1382
        %v1538 = vpop.f32.mrf.mxu0
        %v1539 = vadd.f32 %v1414, %v1538
        %v1540 = vpop.f32.mrf.mxu0
        %v1541 = vpop.f32.mrf.mxu0
        %v1542 = vadd.f32 %v1414, %v1541
        %v1543 = vpop.f32.mrf.mxu0
        %1544 = vmatprep.mubr.bf16.mxu0 0
        %1545 = vmatmul.mubr.bf16.gmra.mxu0 %v1383
        %v1546 = vpop.f32.mrf.mxu0
        %v1547 = vadd.f32 %v1414, %v1546
        %v1548 = vpop.f32.mrf.mxu0
        %v1549 = vpop.f32.mrf.mxu0
        %v1550 = vadd.f32 %v1414, %v1549
        %v1551 = vpop.f32.mrf.mxu0
        %1552 = vmatprep.mubr.bf16.mxu0 0
        %1553 = vmatmul.mubr.bf16.gmra.mxu0 %v1384
        %v1554 = vpop.f32.mrf.mxu0
        %v1555 = vadd.f32 %v1414, %v1554
        %v1556 = vpop.f32.mrf.mxu0
        %v1557 = vpop.f32.mrf.mxu0
        %v1558 = vadd.f32 %v1414, %v1557
        %v1559 = vpop.f32.mrf.mxu0
        %1560 = vmatprep.mubr.bf16.mxu0 0
        %1561 = vmatmul.mubr.bf16.gmra.mxu0 %v1385
        %v1562 = vpop.f32.mrf.mxu0
        %v1563 = vadd.f32 %v1414, %v1562
        %v1564 = vpop.f32.mrf.mxu0
        %v1565 = vpop.f32.mrf.mxu0
        %v1566 = vadd.f32 %v1414, %v1565
        %v1567 = vpop.f32.mrf.mxu0
        %1568 = vmatprep.mubr.bf16.mxu0 0
        %1569 = vmatmul.mubr.bf16.gmra.mxu0 %v1386
        %v1570 = vpop.f32.mrf.mxu0
        %v1571 = vadd.f32 %v1414, %v1570
        %v1572 = vpop.f32.mrf.mxu0
        %v1573 = vpop.f32.mrf.mxu0
        %v1574 = vadd.f32 %v1414, %v1573
        %v1575 = vpop.f32.mrf.mxu0
        %1576 = vmatprep.mubr.bf16.mxu0 0
        %1577 = vmatmul.mubr.bf16.gmra.mxu0 %v1387
        %v1578 = vpop.f32.mrf.mxu0
        %v1579 = vadd.f32 %v1414, %v1578
        %v1580 = vpop.f32.mrf.mxu0
        %v1581 = vpop.f32.mrf.mxu0
        %v1582 = vadd.f32 %v1414, %v1581
        %v1583 = vpop.f32.mrf.mxu0
        %1584 = vmatprep.mubr.bf16.mxu0 0
        %1585 = vmatmul.mubr.bf16.gmra.mxu0 %v1388
        %v1586 = vpop.f32.mrf.mxu0
        %v1587 = vadd.f32 %v1414, %v1586
        %v1588 = vpop.f32.mrf.mxu0
        %v1589 = vpop.f32.mrf.mxu0
        %v1590 = vadd.f32 %v1414, %v1589
        %v1591 = vpop.f32.mrf.mxu0
        %1592 = vmatprep.mubr.bf16.mxu0 0
        %1593 = vmatmul.mubr.bf16.gmra.mxu0 %v1389
        %v1594 = vpop.f32.mrf.mxu0
        %v1595 = vadd.f32 %v1414, %v1594
        %v1596 = vpop.f32.mrf.mxu0
        %v1597 = vpop.f32.mrf.mxu0
        %v1598 = vadd.f32 %v1414, %v1597
        %v1599 = vpop.f32.mrf.mxu0
        %1600 = vmatprep.mubr.bf16.mxu0 0
        %1601 = vmatmul.mubr.bf16.gmra.mxu0 %v1390
        %v1602 = vpop.f32.mrf.mxu0
        %v1603 = vadd.f32 %v1414, %v1602
        %v1604 = vpop.f32.mrf.mxu0
        %v1605 = vpop.f32.mrf.mxu0
        %v1606 = vadd.f32 %v1414, %v1605
        %v1607 = vpop.f32.mrf.mxu0
        %1608 = vmatprep.mubr.bf16.mxu0 0
        %1609 = vmatmul.mubr.bf16.gmra.mxu0 %v1391
        %v1610 = vpop.f32.mrf.mxu0
        %v1611 = vadd.f32 %v1414, %v1610
        %v1612 = vpop.f32.mrf.mxu0
        %v1613 = vpop.f32.mrf.mxu0
        %v1614 = vadd.f32 %v1414, %v1613
        %v1615 = vpop.f32.mrf.mxu0
        %1616 = vmatprep.mubr.bf16.mxu0 0
        %1617 = vmatmul.mubr.bf16.gmra.mxu0 %v1392
        %v1618 = vpop.f32.mrf.mxu0
        %v1619 = vadd.f32 %v1414, %v1618
        %v1620 = vpop.f32.mrf.mxu0
        %v1621 = vpop.f32.mrf.mxu0
        %v1622 = vadd.f32 %v1414, %v1621
        %v1623 = vpop.f32.mrf.mxu0
        %1624 = vdwg.mxu0
        %v1625 = vmax.f32 %v1499, 0.0
        %v1626 = vmax.f32 %v1502, 0.0
        %v1627 = vmax.f32 %v1507, 0.0
        %v1628 = vmax.f32 %v1510, 0.0
        %v1629 = vmax.f32 %v1515, 0.0
        %v1630 = vmax.f32 %v1518, 0.0
        %v1631 = vmax.f32 %v1523, 0.0
        %v1632 = vmax.f32 %v1526, 0.0
        %v1633 = vmax.f32 %v1531, 0.0
        %v1634 = vmax.f32 %v1534, 0.0
        %v1635 = vmax.f32 %v1539, 0.0
        %v1636 = vmax.f32 %v1542, 0.0
        %v1637 = vmax.f32 %v1547, 0.0
        %v1638 = vmax.f32 %v1550, 0.0
        %v1639 = vmax.f32 %v1555, 0.0
        %v1640 = vmax.f32 %v1558, 0.0
        %v1641 = vmax.f32 %v1563, 0.0
        %v1642 = vmax.f32 %v1566, 0.0
        %v1643 = vmax.f32 %v1571, 0.0
        %v1644 = vmax.f32 %v1574, 0.0
        %v1645 = vmax.f32 %v1579, 0.0
        %v1646 = vmax.f32 %v1582, 0.0
        %v1647 = vmax.f32 %v1587, 0.0
        %v1648 = vmax.f32 %v1590, 0.0
        %v1649 = vmax.f32 %v1595, 0.0
        %v1650 = vmax.f32 %v1598, 0.0
        %v1651 = vmax.f32 %v1603, 0.0
        %v1652 = vmax.f32 %v1606, 0.0
        %v1653 = vmax.f32 %v1611, 0.0
        %v1654 = vmax.f32 %v1614, 0.0
        %v1655 = vmax.f32 %v1619, 0.0
        %v1656 = vmax.f32 %v1622, 0.0
        %v1657 = vpack.c.bf16 %v1626, %v1625
        %v1658 = vpack.c.bf16 %v1628, %v1627
        %v1659 = vpack.c.bf16 %v1630, %v1629
        %v1660 = vpack.c.bf16 %v1632, %v1631
        %v1661 = vpack.c.bf16 %v1634, %v1633
        %v1662 = vpack.c.bf16 %v1636, %v1635
        %v1663 = vpack.c.bf16 %v1638, %v1637
        %v1664 = vpack.c.bf16 %v1640, %v1639
        %v1665 = vpack.c.bf16 %v1642, %v1641
        %v1666 = vpack.c.bf16 %v1644, %v1643
        %v1667 = vpack.c.bf16 %v1646, %v1645
        %v1668 = vpack.c.bf16 %v1648, %v1647
        %v1669 = vpack.c.bf16 %v1650, %v1649
        %v1670 = vpack.c.bf16 %v1652, %v1651
        %v1671 = vpack.c.bf16 %v1654, %v1653
        %v1672 = vpack.c.bf16 %v1656, %v1655
        %v1673 = vld [vmem:[%s2 + $0x10] sm:$0xf]
        %v1674 = vld [vmem:[%s2 + $0x24] sm:$0xf]
        %v1675 = vld [vmem:[%s2 + $0x38] sm:$0xf]
        %v1676 = vld [vmem:[%s2 + $0x4c] sm:$0xf]
        %v1677 = vld [vmem:[%s2 + $0x60] sm:$0xf]
        %v1678 = vld [vmem:[%s2 + $0x74] sm:$0xf]
        %v1679 = vld [vmem:[%s2 + $0x88] sm:$0xf]
        %v1680 = vld [vmem:[%s2 + $0x9c] sm:$0xf]
        %v1681 = vld [vmem:[%s2 + $0xb0] sm:$0xf]
        %v1682 = vld [vmem:[%s2 + $0xc4] sm:$0xf]
        %v1683 = vld [vmem:[%s2 + $0xd8] sm:$0xf]
        %v1684 = vld [vmem:[%s2 + $0xec] sm:$0xf]
        %v1685 = vld [vmem:[%s2 + $0x100] sm:$0xf]
        %v1686 = vld [vmem:[%s2 + $0x114] sm:$0xf]
        %v1687 = vld [vmem:[%s2 + $0x128] sm:$0xf]
        %v1688 = vld [vmem:[%s2 + $0x13c] sm:$0xf]
        %v1689 = vld [vmem:[%s3 + $0x5] sm:$0x1]
        %v1691 = vlaneseq
        %v1692 = vshrl.u32 %v1691, 7
        %v1693 = vsub.s32 0, %v1692
        %v1694 = vrot.slane %v1689, %v1693
        %v1712 = vunpack.c.l.b16 %v1673
        %v1713 = vunpack.c.l.b16 %v1674
        %v1714 = vunpack.c.l.b16 %v1675
        %v1715 = vunpack.c.l.b16 %v1676
        %v1716 = vunpack.c.l.b16 %v1677
        %v1717 = vunpack.c.l.b16 %v1678
        %v1718 = vunpack.c.l.b16 %v1679
        %v1719 = vunpack.c.l.b16 %v1680
        %v1720 = vunpack.c.l.b16 %v1681
        %v1721 = vunpack.c.l.b16 %v1682
        %v1722 = vunpack.c.l.b16 %v1683
        %v1723 = vunpack.c.l.b16 %v1684
        %v1724 = vunpack.c.l.b16 %v1685
        %v1725 = vunpack.c.l.b16 %v1686
        %v1726 = vunpack.c.l.b16 %v1687
        %v1727 = vunpack.c.l.b16 %v1688
        %v1728 = vpack.c.b16 %v1713, %v1712
        %v1729 = vpack.c.b16 %v1715, %v1714
        %v1730 = vpack.c.b16 %v1717, %v1716
        %v1731 = vpack.c.b16 %v1719, %v1718
        %v1732 = vpack.c.b16 %v1721, %v1720
        %v1733 = vpack.c.b16 %v1723, %v1722
        %v1734 = vpack.c.b16 %v1725, %v1724
        %v1735 = vpack.c.b16 %v1727, %v1726
        %1744 = vmatprep.subr.bf16.mxu0 0
        %1745 = vmatpush1.bf16.msra.mxu0 %v1735
        %1746 = vmatprep.subr.bf16.mxu0 0
        %1747 = vmatpush1.bf16.msra.mxu0 %v1734
        %1748 = vmatprep.subr.bf16.mxu0 0
        %1749 = vmatpush1.bf16.msra.mxu0 %v1733
        %1750 = vmatprep.subr.bf16.mxu0 0
        %1751 = vmatpush1.bf16.msra.mxu0 %v1732
        %1752 = vmatprep.subr.bf16.mxu0 0
        %1753 = vmatpush1.bf16.msra.mxu0 %v1731
        %1754 = vmatprep.subr.bf16.mxu0 0
        %1755 = vmatpush1.bf16.msra.mxu0 %v1730
        %1756 = vmatprep.subr.bf16.mxu0 0
        %1757 = vmatpush1.bf16.msra.mxu0 %v1729
        %1758 = vmatprep.subr.bf16.mxu0 0
        %1759 = vmatpush1.bf16.msra.mxu0 %v1728
        %1760 = vmatprep.subr.bf16.mxu0 0
        %1761 = vmatpush2.bf16.msra.mxu0 0
        %1762 = vmatprep.subr.bf16.mxu0 0
        %1763 = vmatpush2.bf16.msra.mxu0 0
        %1764 = vmatprep.subr.bf16.mxu0 0
        %1765 = vmatpush2.bf16.msra.mxu0 0
        %1766 = vmatprep.subr.bf16.mxu0 0
        %1767 = vmatpush2.bf16.msra.mxu0 0
        %1768 = vmatprep.subr.bf16.mxu0 0
        %1769 = vmatpush2.bf16.msra.mxu0 0
        %1770 = vmatprep.subr.bf16.mxu0 0
        %1771 = vmatpush2.bf16.msra.mxu0 0
        %1772 = vmatprep.subr.bf16.mxu0 0
        %1773 = vmatpush2.bf16.msra.mxu0 0
        %1774 = vmatprep.subr.bf16.mxu0 0
        %1775 = vmatpush2.bf16.msra.mxu0 0
        %1776 = vmatprep.mubr.bf16.mxu0 0
        %1777 = vmatmul.mubr.bf16.gmra.mxu0 %v1657
        %v1778 = vpop.f32.mrf.mxu0
        %v1779 = vadd.f32 %v1694, %v1778
        %v1780 = vpop.f32.mrf.mxu0
        %v1781 = vpop.f32.mrf.mxu0
        %v1782 = vadd.f32 %v1694, %v1781
        %v1783 = vpop.f32.mrf.mxu0
        %1784 = vmatprep.mubr.bf16.mxu0 0
        %1785 = vmatmul.mubr.bf16.gmra.mxu0 %v1658
        %v1786 = vpop.f32.mrf.mxu0
        %v1787 = vadd.f32 %v1694, %v1786
        %v1788 = vpop.f32.mrf.mxu0
        %v1789 = vpop.f32.mrf.mxu0
        %v1790 = vadd.f32 %v1694, %v1789
        %v1791 = vpop.f32.mrf.mxu0
        %1792 = vmatprep.mubr.bf16.mxu0 0
        %1793 = vmatmul.mubr.bf16.gmra.mxu0 %v1659
        %v1794 = vpop.f32.mrf.mxu0
        %v1795 = vadd.f32 %v1694, %v1794
        %v1796 = vpop.f32.mrf.mxu0
        %v1797 = vpop.f32.mrf.mxu0
        %v1798 = vadd.f32 %v1694, %v1797
        %v1799 = vpop.f32.mrf.mxu0
        %1800 = vmatprep.mubr.bf16.mxu0 0
        %1801 = vmatmul.mubr.bf16.gmra.mxu0 %v1660
        %v1802 = vpop.f32.mrf.mxu0
        %v1803 = vadd.f32 %v1694, %v1802
        %v1804 = vpop.f32.mrf.mxu0
        %v1805 = vpop.f32.mrf.mxu0
        %v1806 = vadd.f32 %v1694, %v1805
        %v1807 = vpop.f32.mrf.mxu0
        %1808 = vmatprep.mubr.bf16.mxu0 0
        %1809 = vmatmul.mubr.bf16.gmra.mxu0 %v1661
        %v1810 = vpop.f32.mrf.mxu0
        %v1811 = vadd.f32 %v1694, %v1810
        %v1812 = vpop.f32.mrf.mxu0
        %v1813 = vpop.f32.mrf.mxu0
        %v1814 = vadd.f32 %v1694, %v1813
        %v1815 = vpop.f32.mrf.mxu0
        %1816 = vmatprep.mubr.bf16.mxu0 0
        %1817 = vmatmul.mubr.bf16.gmra.mxu0 %v1662
        %v1818 = vpop.f32.mrf.mxu0
        %v1819 = vadd.f32 %v1694, %v1818
        %v1820 = vpop.f32.mrf.mxu0
        %v1821 = vpop.f32.mrf.mxu0
        %v1822 = vadd.f32 %v1694, %v1821
        %v1823 = vpop.f32.mrf.mxu0
        %1824 = vmatprep.mubr.bf16.mxu0 0
        %1825 = vmatmul.mubr.bf16.gmra.mxu0 %v1663
        %v1826 = vpop.f32.mrf.mxu0
        %v1827 = vadd.f32 %v1694, %v1826
        %v1828 = vpop.f32.mrf.mxu0
        %v1829 = vpop.f32.mrf.mxu0
        %v1830 = vadd.f32 %v1694, %v1829
        %v1831 = vpop.f32.mrf.mxu0
        %1832 = vmatprep.mubr.bf16.mxu0 0
        %1833 = vmatmul.mubr.bf16.gmra.mxu0 %v1664
        %v1834 = vpop.f32.mrf.mxu0
        %v1835 = vadd.f32 %v1694, %v1834
        %v1836 = vpop.f32.mrf.mxu0
        %v1837 = vpop.f32.mrf.mxu0
        %v1838 = vadd.f32 %v1694, %v1837
        %v1839 = vpop.f32.mrf.mxu0
        %1840 = vmatprep.mubr.bf16.mxu0 0
        %1841 = vmatmul.mubr.bf16.gmra.mxu0 %v1665
        %v1842 = vpop.f32.mrf.mxu0
        %v1843 = vadd.f32 %v1694, %v1842
        %v1844 = vpop.f32.mrf.mxu0
        %v1845 = vpop.f32.mrf.mxu0
        %v1846 = vadd.f32 %v1694, %v1845
        %v1847 = vpop.f32.mrf.mxu0
        %1848 = vmatprep.mubr.bf16.mxu0 0
        %1849 = vmatmul.mubr.bf16.gmra.mxu0 %v1666
        %v1850 = vpop.f32.mrf.mxu0
        %v1851 = vadd.f32 %v1694, %v1850
        %v1852 = vpop.f32.mrf.mxu0
        %v1853 = vpop.f32.mrf.mxu0
        %v1854 = vadd.f32 %v1694, %v1853
        %v1855 = vpop.f32.mrf.mxu0
        %1856 = vmatprep.mubr.bf16.mxu0 0
        %1857 = vmatmul.mubr.bf16.gmra.mxu0 %v1667
        %v1858 = vpop.f32.mrf.mxu0
        %v1859 = vadd.f32 %v1694, %v1858
        %v1860 = vpop.f32.mrf.mxu0
        %v1861 = vpop.f32.mrf.mxu0
        %v1862 = vadd.f32 %v1694, %v1861
        %v1863 = vpop.f32.mrf.mxu0
        %1864 = vmatprep.mubr.bf16.mxu0 0
        %1865 = vmatmul.mubr.bf16.gmra.mxu0 %v1668
        %v1866 = vpop.f32.mrf.mxu0
        %v1867 = vadd.f32 %v1694, %v1866
        %v1868 = vpop.f32.mrf.mxu0
        %v1869 = vpop.f32.mrf.mxu0
        %v1870 = vadd.f32 %v1694, %v1869
        %v1871 = vpop.f32.mrf.mxu0
        %1872 = vmatprep.mubr.bf16.mxu0 0
        %1873 = vmatmul.mubr.bf16.gmra.mxu0 %v1669
        %v1874 = vpop.f32.mrf.mxu0
        %v1875 = vadd.f32 %v1694, %v1874
        %v1876 = vpop.f32.mrf.mxu0
        %v1877 = vpop.f32.mrf.mxu0
        %v1878 = vadd.f32 %v1694, %v1877
        %v1879 = vpop.f32.mrf.mxu0
        %1880 = vmatprep.mubr.bf16.mxu0 0
        %1881 = vmatmul.mubr.bf16.gmra.mxu0 %v1670
        %v1882 = vpop.f32.mrf.mxu0
        %v1883 = vadd.f32 %v1694, %v1882
        %v1884 = vpop.f32.mrf.mxu0
        %v1885 = vpop.f32.mrf.mxu0
        %v1886 = vadd.f32 %v1694, %v1885
        %v1887 = vpop.f32.mrf.mxu0
        %1888 = vmatprep.mubr.bf16.mxu0 0
        %1889 = vmatmul.mubr.bf16.gmra.mxu0 %v1671
        %v1890 = vpop.f32.mrf.mxu0
        %v1891 = vadd.f32 %v1694, %v1890
        %v1892 = vpop.f32.mrf.mxu0
        %v1893 = vpop.f32.mrf.mxu0
        %v1894 = vadd.f32 %v1694, %v1893
        %v1895 = vpop.f32.mrf.mxu0
        %1896 = vmatprep.mubr.bf16.mxu0 0
        %1897 = vmatmul.mubr.bf16.gmra.mxu0 %v1672
        %v1898 = vpop.f32.mrf.mxu0
        %v1899 = vadd.f32 %v1694, %v1898
        %v1900 = vpop.f32.mrf.mxu0
        %v1901 = vpop.f32.mrf.mxu0
        %v1902 = vadd.f32 %v1694, %v1901
        %v1903 = vpop.f32.mrf.mxu0
        %1904 = vdwg.mxu0
        %1905 = vst [vmem:[%s203] sm:$0xff] %v1779
        %1906 = vst [vmem:[%s203 + $0x8] sm:$0xff] %v1782
        %1907 = vst [vmem:[%s203 + $0x10] sm:$0xff] %v1787
        %1908 = vst [vmem:[%s203 + $0x18] sm:$0xff] %v1790
        %1909 = vst [vmem:[%s203 + $0x20] sm:$0xff] %v1795
        %1910 = vst [vmem:[%s203 + $0x28] sm:$0xff] %v1798
        %1911 = vst [vmem:[%s203 + $0x30] sm:$0xff] %v1803
        %1912 = vst [vmem:[%s203 + $0x38] sm:$0xff] %v1806
        %1913 = vst [vmem:[%s203 + $0x40] sm:$0xff] %v1811
        %1914 = vst [vmem:[%s203 + $0x48] sm:$0xff] %v1814
        %1915 = vst [vmem:[%s203 + $0x50] sm:$0xff] %v1819
        %1916 = vst [vmem:[%s203 + $0x58] sm:$0xff] %v1822
        %1917 = vst [vmem:[%s203 + $0x60] sm:$0xff] %v1827
        %1918 = vst [vmem:[%s203 + $0x68] sm:$0xff] %v1830
        %1919 = vst [vmem:[%s203 + $0x70] sm:$0xff] %v1835
        %1920 = vst [vmem:[%s203 + $0x78] sm:$0xff] %v1838
        %1921 = vst [vmem:[%s203 + $0x80] sm:$0xff] %v1843
        %1922 = vst [vmem:[%s203 + $0x88] sm:$0xff] %v1846
        %1923 = vst [vmem:[%s203 + $0x90] sm:$0xff] %v1851
        %1924 = vst [vmem:[%s203 + $0x98] sm:$0xff] %v1854
        %1925 = vst [vmem:[%s203 + $0xa0] sm:$0xff] %v1859
        %1926 = vst [vmem:[%s203 + $0xa8] sm:$0xff] %v1862
        %1927 = vst [vmem:[%s203 + $0xb0] sm:$0xff] %v1867
        %1928 = vst [vmem:[%s203 + $0xb8] sm:$0xff] %v1870
        %1929 = vst [vmem:[%s203 + $0xc0] sm:$0xff] %v1875
        %1930 = vst [vmem:[%s203 + $0xc8] sm:$0xff] %v1878
        %1931 = vst [vmem:[%s203 + $0xd0] sm:$0xff] %v1883
        %1932 = vst [vmem:[%s203 + $0xd8] sm:$0xff] %v1886
        %1933 = vst [vmem:[%s203 + $0xe0] sm:$0xff] %v1891
        %1934 = vst [vmem:[%s203 + $0xe8] sm:$0xff] %v1894
        %1935 = vst [vmem:[%s203 + $0xf0] sm:$0xff] %v1899
        %1936 = vst [vmem:[%s203 + $0xf8] sm:$0xff] %v1902
        %v1937 = vld [vmem:[%s212 + $0x100] sm:$0xff]
        %v1938 = vld [vmem:[%s212 + $0x108] sm:$0xff]
        %v1939 = vld [vmem:[%s212 + $0x110] sm:$0xff]
        %v1940 = vld [vmem:[%s212 + $0x118] sm:$0xff]
        %v1941 = vld [vmem:[%s212 + $0x120] sm:$0xff]
        %v1942 = vld [vmem:[%s212 + $0x128] sm:$0xff]
        %v1943 = vld [vmem:[%s212 + $0x130] sm:$0xff]
        %v1944 = vld [vmem:[%s212 + $0x138] sm:$0xff]
        %v1945 = vld [vmem:[%s212 + $0x140] sm:$0xff]
        %v1946 = vld [vmem:[%s212 + $0x148] sm:$0xff]
        %v1947 = vld [vmem:[%s212 + $0x150] sm:$0xff]
        %v1948 = vld [vmem:[%s212 + $0x158] sm:$0xff]
        %v1949 = vld [vmem:[%s212 + $0x160] sm:$0xff]
        %v1950 = vld [vmem:[%s212 + $0x168] sm:$0xff]
        %v1951 = vld [vmem:[%s212 + $0x170] sm:$0xff]
        %v1952 = vld [vmem:[%s212 + $0x178] sm:$0xff]
        %v1953 = vld [vmem:[%s212 + $0x180] sm:$0xff]
        %v1954 = vld [vmem:[%s212 + $0x188] sm:$0xff]
        %v1955 = vld [vmem:[%s212 + $0x190] sm:$0xff]
        %v1956 = vld [vmem:[%s212 + $0x198] sm:$0xff]
        %v1957 = vld [vmem:[%s212 + $0x1a0] sm:$0xff]
        %v1958 = vld [vmem:[%s212 + $0x1a8] sm:$0xff]
        %v1959 = vld [vmem:[%s212 + $0x1b0] sm:$0xff]
        %v1960 = vld [vmem:[%s212 + $0x1b8] sm:$0xff]
        %v1961 = vld [vmem:[%s212 + $0x1c0] sm:$0xff]
        %v1962 = vld [vmem:[%s212 + $0x1c8] sm:$0xff]
        %v1963 = vld [vmem:[%s212 + $0x1d0] sm:$0xff]
        %v1964 = vld [vmem:[%s212 + $0x1d8] sm:$0xff]
        %v1965 = vld [vmem:[%s212 + $0x1e0] sm:$0xff]
        %v1966 = vld [vmem:[%s212 + $0x1e8] sm:$0xff]
        %v1967 = vld [vmem:[%s212 + $0x1f0] sm:$0xff]
        %v1968 = vld [vmem:[%s212 + $0x1f8] sm:$0xff]
        %v1969 = vpack.c.bf16 %v1938, %v1937
        %v1970 = vpack.c.bf16 %v1940, %v1939
        %v1971 = vpack.c.bf16 %v1942, %v1941
        %v1972 = vpack.c.bf16 %v1944, %v1943
        %v1973 = vpack.c.bf16 %v1946, %v1945
        %v1974 = vpack.c.bf16 %v1948, %v1947
        %v1975 = vpack.c.bf16 %v1950, %v1949
        %v1976 = vpack.c.bf16 %v1952, %v1951
        %v1977 = vpack.c.bf16 %v1954, %v1953
        %v1978 = vpack.c.bf16 %v1956, %v1955
        %v1979 = vpack.c.bf16 %v1958, %v1957
        %v1980 = vpack.c.bf16 %v1960, %v1959
        %v1981 = vpack.c.bf16 %v1962, %v1961
        %v1982 = vpack.c.bf16 %v1964, %v1963
        %v1983 = vpack.c.bf16 %v1966, %v1965
        %v1984 = vpack.c.bf16 %v1968, %v1967
        %v1985 = vld [vmem:[%s1] sm:$0xf]
        %v1986 = vld [vmem:[%s1 + $0x4] sm:$0xf]
        %v1987 = vld [vmem:[%s1 + $0x8] sm:$0xf]
        %v1988 = vld [vmem:[%s1 + $0xc] sm:$0xf]
        %v1989 = vld [vmem:[%s3] sm:$0x1]
        %v1991 = vlaneseq
        %v1992 = vshrl.u32 %v1991, 7
        %v1993 = vsub.s32 0, %v1992
        %v1994 = vrot.slane %v1989, %v1993
        %v2000 = vunpack.c.l.b16 %v1985
        %v2001 = vunpack.c.l.b16 %v1986
        %v2002 = vunpack.c.l.b16 %v1987
        %v2003 = vunpack.c.l.b16 %v1988
        %v2004 = vpack.c.b16 %v2001, %v2000
        %v2005 = vpack.c.b16 %v2003, %v2002
        %v2009 = vsel %vm295, %v1969, 0
        %v2012 = vsel %vm295, %v1970, 0
        %v2015 = vsel %vm295, %v1971, 0
        %v2018 = vsel %vm295, %v1972, 0
        %v2021 = vsel %vm295, %v1973, 0
        %v2024 = vsel %vm295, %v1974, 0
        %v2027 = vsel %vm295, %v1975, 0
        %v2030 = vsel %vm295, %v1976, 0
        %v2033 = vsel %vm295, %v1977, 0
        %v2036 = vsel %vm295, %v1978, 0
        %v2039 = vsel %vm295, %v1979, 0
        %v2042 = vsel %vm295, %v1980, 0
        %v2045 = vsel %vm295, %v1981, 0
        %v2048 = vsel %vm295, %v1982, 0
        %v2051 = vsel %vm295, %v1983, 0
        %v2054 = vsel %vm295, %v1984, 0
        %2056 = vmatprep.subr.bf16.mxu0 0
        %2057 = vmatpush1.bf16.msra.mxu0 0
        %2058 = vmatprep.subr.bf16.mxu0 0
        %2059 = vmatpush1.bf16.msra.mxu0 0
        %2060 = vmatprep.subr.bf16.mxu0 0
        %2061 = vmatpush1.bf16.msra.mxu0 0
        %2062 = vmatprep.subr.bf16.mxu0 0
        %2063 = vmatpush1.bf16.msra.mxu0 0
        %2064 = vmatprep.subr.bf16.mxu0 0
        %2065 = vmatpush1.bf16.msra.mxu0 0
        %2066 = vmatprep.subr.bf16.mxu0 0
        %2067 = vmatpush1.bf16.msra.mxu0 0
        %2068 = vmatprep.subr.bf16.mxu0 0
        %2069 = vmatpush1.bf16.msra.mxu0 %v2005
        %2070 = vmatprep.subr.bf16.mxu0 0
        %2071 = vmatpush1.bf16.msra.mxu0 %v2004
        %2072 = vmatprep.subr.bf16.mxu0 0
        %2073 = vmatpush2.bf16.msra.mxu0 0
        %2074 = vmatprep.subr.bf16.mxu0 0
        %2075 = vmatpush2.bf16.msra.mxu0 0
        %2076 = vmatprep.subr.bf16.mxu0 0
        %2077 = vmatpush2.bf16.msra.mxu0 0
        %2078 = vmatprep.subr.bf16.mxu0 0
        %2079 = vmatpush2.bf16.msra.mxu0 0
        %2080 = vmatprep.subr.bf16.mxu0 0
        %2081 = vmatpush2.bf16.msra.mxu0 0
        %2082 = vmatprep.subr.bf16.mxu0 0
        %2083 = vmatpush2.bf16.msra.mxu0 0
        %2084 = vmatprep.subr.bf16.mxu0 0
        %2085 = vmatpush2.bf16.msra.mxu0 0
        %2086 = vmatprep.subr.bf16.mxu0 0
        %2087 = vmatpush2.bf16.msra.mxu0 0
        %2088 = vmatprep.mubr.bf16.mxu0 0
        %2089 = vmatmul.mubr.bf16.gmra.mxu0 %v2009
        %v2090 = vpop.f32.mrf.mxu0
        %v2091 = vadd.f32 %v1994, %v2090
        %v2092 = vpop.f32.mrf.mxu0
        %v2093 = vpop.f32.mrf.mxu0
        %v2094 = vadd.f32 %v1994, %v2093
        %v2095 = vpop.f32.mrf.mxu0
        %2096 = vmatprep.mubr.bf16.mxu0 0
        %2097 = vmatmul.mubr.bf16.gmra.mxu0 %v2012
        %v2098 = vpop.f32.mrf.mxu0
        %v2099 = vadd.f32 %v1994, %v2098
        %v2100 = vpop.f32.mrf.mxu0
        %v2101 = vpop.f32.mrf.mxu0
        %v2102 = vadd.f32 %v1994, %v2101
        %v2103 = vpop.f32.mrf.mxu0
        %2104 = vmatprep.mubr.bf16.mxu0 0
        %2105 = vmatmul.mubr.bf16.gmra.mxu0 %v2015
        %v2106 = vpop.f32.mrf.mxu0
        %v2107 = vadd.f32 %v1994, %v2106
        %v2108 = vpop.f32.mrf.mxu0
        %v2109 = vpop.f32.mrf.mxu0
        %v2110 = vadd.f32 %v1994, %v2109
        %v2111 = vpop.f32.mrf.mxu0
        %2112 = vmatprep.mubr.bf16.mxu0 0
        %2113 = vmatmul.mubr.bf16.gmra.mxu0 %v2018
        %v2114 = vpop.f32.mrf.mxu0
        %v2115 = vadd.f32 %v1994, %v2114
        %v2116 = vpop.f32.mrf.mxu0
        %v2117 = vpop.f32.mrf.mxu0
        %v2118 = vadd.f32 %v1994, %v2117
        %v2119 = vpop.f32.mrf.mxu0
        %2120 = vmatprep.mubr.bf16.mxu0 0
        %2121 = vmatmul.mubr.bf16.gmra.mxu0 %v2021
        %v2122 = vpop.f32.mrf.mxu0
        %v2123 = vadd.f32 %v1994, %v2122
        %v2124 = vpop.f32.mrf.mxu0
        %v2125 = vpop.f32.mrf.mxu0
        %v2126 = vadd.f32 %v1994, %v2125
        %v2127 = vpop.f32.mrf.mxu0
        %2128 = vmatprep.mubr.bf16.mxu0 0
        %2129 = vmatmul.mubr.bf16.gmra.mxu0 %v2024
        %v2130 = vpop.f32.mrf.mxu0
        %v2131 = vadd.f32 %v1994, %v2130
        %v2132 = vpop.f32.mrf.mxu0
        %v2133 = vpop.f32.mrf.mxu0
        %v2134 = vadd.f32 %v1994, %v2133
        %v2135 = vpop.f32.mrf.mxu0
        %2136 = vmatprep.mubr.bf16.mxu0 0
        %2137 = vmatmul.mubr.bf16.gmra.mxu0 %v2027
        %v2138 = vpop.f32.mrf.mxu0
        %v2139 = vadd.f32 %v1994, %v2138
        %v2140 = vpop.f32.mrf.mxu0
        %v2141 = vpop.f32.mrf.mxu0
        %v2142 = vadd.f32 %v1994, %v2141
        %v2143 = vpop.f32.mrf.mxu0
        %2144 = vmatprep.mubr.bf16.mxu0 0
        %2145 = vmatmul.mubr.bf16.gmra.mxu0 %v2030
        %v2146 = vpop.f32.mrf.mxu0
        %v2147 = vadd.f32 %v1994, %v2146
        %v2148 = vpop.f32.mrf.mxu0
        %v2149 = vpop.f32.mrf.mxu0
        %v2150 = vadd.f32 %v1994, %v2149
        %v2151 = vpop.f32.mrf.mxu0
        %2152 = vmatprep.mubr.bf16.mxu0 0
        %2153 = vmatmul.mubr.bf16.gmra.mxu0 %v2033
        %v2154 = vpop.f32.mrf.mxu0
        %v2155 = vadd.f32 %v1994, %v2154
        %v2156 = vpop.f32.mrf.mxu0
        %v2157 = vpop.f32.mrf.mxu0
        %v2158 = vadd.f32 %v1994, %v2157
        %v2159 = vpop.f32.mrf.mxu0
        %2160 = vmatprep.mubr.bf16.mxu0 0
        %2161 = vmatmul.mubr.bf16.gmra.mxu0 %v2036
        %v2162 = vpop.f32.mrf.mxu0
        %v2163 = vadd.f32 %v1994, %v2162
        %v2164 = vpop.f32.mrf.mxu0
        %v2165 = vpop.f32.mrf.mxu0
        %v2166 = vadd.f32 %v1994, %v2165
        %v2167 = vpop.f32.mrf.mxu0
        %2168 = vmatprep.mubr.bf16.mxu0 0
        %2169 = vmatmul.mubr.bf16.gmra.mxu0 %v2039
        %v2170 = vpop.f32.mrf.mxu0
        %v2171 = vadd.f32 %v1994, %v2170
        %v2172 = vpop.f32.mrf.mxu0
        %v2173 = vpop.f32.mrf.mxu0
        %v2174 = vadd.f32 %v1994, %v2173
        %v2175 = vpop.f32.mrf.mxu0
        %2176 = vmatprep.mubr.bf16.mxu0 0
        %2177 = vmatmul.mubr.bf16.gmra.mxu0 %v2042
        %v2178 = vpop.f32.mrf.mxu0
        %v2179 = vadd.f32 %v1994, %v2178
        %v2180 = vpop.f32.mrf.mxu0
        %v2181 = vpop.f32.mrf.mxu0
        %v2182 = vadd.f32 %v1994, %v2181
        %v2183 = vpop.f32.mrf.mxu0
        %2184 = vmatprep.mubr.bf16.mxu0 0
        %2185 = vmatmul.mubr.bf16.gmra.mxu0 %v2045
        %v2186 = vpop.f32.mrf.mxu0
        %v2187 = vadd.f32 %v1994, %v2186
        %v2188 = vpop.f32.mrf.mxu0
        %v2189 = vpop.f32.mrf.mxu0
        %v2190 = vadd.f32 %v1994, %v2189
        %v2191 = vpop.f32.mrf.mxu0
        %2192 = vmatprep.mubr.bf16.mxu0 0
        %2193 = vmatmul.mubr.bf16.gmra.mxu0 %v2048
        %v2194 = vpop.f32.mrf.mxu0
        %v2195 = vadd.f32 %v1994, %v2194
        %v2196 = vpop.f32.mrf.mxu0
        %v2197 = vpop.f32.mrf.mxu0
        %v2198 = vadd.f32 %v1994, %v2197
        %v2199 = vpop.f32.mrf.mxu0
        %2200 = vmatprep.mubr.bf16.mxu0 0
        %2201 = vmatmul.mubr.bf16.gmra.mxu0 %v2051
        %v2202 = vpop.f32.mrf.mxu0
        %v2203 = vadd.f32 %v1994, %v2202
        %v2204 = vpop.f32.mrf.mxu0
        %v2205 = vpop.f32.mrf.mxu0
        %v2206 = vadd.f32 %v1994, %v2205
        %v2207 = vpop.f32.mrf.mxu0
        %2208 = vmatprep.mubr.bf16.mxu0 0
        %2209 = vmatmul.mubr.bf16.gmra.mxu0 %v2054
        %v2210 = vpop.f32.mrf.mxu0
        %v2211 = vadd.f32 %v1994, %v2210
        %v2212 = vpop.f32.mrf.mxu0
        %v2213 = vpop.f32.mrf.mxu0
        %v2214 = vadd.f32 %v1994, %v2213
        %v2215 = vpop.f32.mrf.mxu0
        %2216 = vdwg.mxu0
        %v2217 = vmax.f32 %v2091, 0.0
        %v2218 = vmax.f32 %v2094, 0.0
        %v2219 = vmax.f32 %v2099, 0.0
        %v2220 = vmax.f32 %v2102, 0.0
        %v2221 = vmax.f32 %v2107, 0.0
        %v2222 = vmax.f32 %v2110, 0.0
        %v2223 = vmax.f32 %v2115, 0.0
        %v2224 = vmax.f32 %v2118, 0.0
        %v2225 = vmax.f32 %v2123, 0.0
        %v2226 = vmax.f32 %v2126, 0.0
        %v2227 = vmax.f32 %v2131, 0.0
        %v2228 = vmax.f32 %v2134, 0.0
        %v2229 = vmax.f32 %v2139, 0.0
        %v2230 = vmax.f32 %v2142, 0.0
        %v2231 = vmax.f32 %v2147, 0.0
        %v2232 = vmax.f32 %v2150, 0.0
        %v2233 = vmax.f32 %v2155, 0.0
        %v2234 = vmax.f32 %v2158, 0.0
        %v2235 = vmax.f32 %v2163, 0.0
        %v2236 = vmax.f32 %v2166, 0.0
        %v2237 = vmax.f32 %v2171, 0.0
        %v2238 = vmax.f32 %v2174, 0.0
        %v2239 = vmax.f32 %v2179, 0.0
        %v2240 = vmax.f32 %v2182, 0.0
        %v2241 = vmax.f32 %v2187, 0.0
        %v2242 = vmax.f32 %v2190, 0.0
        %v2243 = vmax.f32 %v2195, 0.0
        %v2244 = vmax.f32 %v2198, 0.0
        %v2245 = vmax.f32 %v2203, 0.0
        %v2246 = vmax.f32 %v2206, 0.0
        %v2247 = vmax.f32 %v2211, 0.0
        %v2248 = vmax.f32 %v2214, 0.0
        %v2249 = vpack.c.bf16 %v2218, %v2217
        %v2250 = vpack.c.bf16 %v2220, %v2219
        %v2251 = vpack.c.bf16 %v2222, %v2221
        %v2252 = vpack.c.bf16 %v2224, %v2223
        %v2253 = vpack.c.bf16 %v2226, %v2225
        %v2254 = vpack.c.bf16 %v2228, %v2227
        %v2255 = vpack.c.bf16 %v2230, %v2229
        %v2256 = vpack.c.bf16 %v2232, %v2231
        %v2257 = vpack.c.bf16 %v2234, %v2233
        %v2258 = vpack.c.bf16 %v2236, %v2235
        %v2259 = vpack.c.bf16 %v2238, %v2237
        %v2260 = vpack.c.bf16 %v2240, %v2239
        %v2261 = vpack.c.bf16 %v2242, %v2241
        %v2262 = vpack.c.bf16 %v2244, %v2243
        %v2263 = vpack.c.bf16 %v2246, %v2245
        %v2264 = vpack.c.bf16 %v2248, %v2247
        %v2265 = vld [vmem:[%s2] sm:$0xf]
        %v2266 = vld [vmem:[%s2 + $0x14] sm:$0xf]
        %v2267 = vld [vmem:[%s2 + $0x28] sm:$0xf]
        %v2268 = vld [vmem:[%s2 + $0x3c] sm:$0xf]
        %v2269 = vld [vmem:[%s2 + $0x50] sm:$0xf]
        %v2270 = vld [vmem:[%s2 + $0x64] sm:$0xf]
        %v2271 = vld [vmem:[%s2 + $0x78] sm:$0xf]
        %v2272 = vld [vmem:[%s2 + $0x8c] sm:$0xf]
        %v2273 = vld [vmem:[%s2 + $0xa0] sm:$0xf]
        %v2274 = vld [vmem:[%s2 + $0xb4] sm:$0xf]
        %v2275 = vld [vmem:[%s2 + $0xc8] sm:$0xf]
        %v2276 = vld [vmem:[%s2 + $0xdc] sm:$0xf]
        %v2277 = vld [vmem:[%s2 + $0xf0] sm:$0xf]
        %v2278 = vld [vmem:[%s2 + $0x104] sm:$0xf]
        %v2279 = vld [vmem:[%s2 + $0x118] sm:$0xf]
        %v2280 = vld [vmem:[%s2 + $0x12c] sm:$0xf]
        %v2281 = vld [vmem:[%s3 + $0x1] sm:$0x1]
        %v2283 = vlaneseq
        %v2284 = vshrl.u32 %v2283, 7
        %v2285 = vsub.s32 0, %v2284
        %v2286 = vrot.slane %v2281, %v2285
        %v2304 = vunpack.c.l.b16 %v2265
        %v2305 = vunpack.c.l.b16 %v2266
        %v2306 = vunpack.c.l.b16 %v2267
        %v2307 = vunpack.c.l.b16 %v2268
        %v2308 = vunpack.c.l.b16 %v2269
        %v2309 = vunpack.c.l.b16 %v2270
        %v2310 = vunpack.c.l.b16 %v2271
        %v2311 = vunpack.c.l.b16 %v2272
        %v2312 = vunpack.c.l.b16 %v2273
        %v2313 = vunpack.c.l.b16 %v2274
        %v2314 = vunpack.c.l.b16 %v2275
        %v2315 = vunpack.c.l.b16 %v2276
        %v2316 = vunpack.c.l.b16 %v2277
        %v2317 = vunpack.c.l.b16 %v2278
        %v2318 = vunpack.c.l.b16 %v2279
        %v2319 = vunpack.c.l.b16 %v2280
        %v2320 = vpack.c.b16 %v2305, %v2304
        %v2321 = vpack.c.b16 %v2307, %v2306
        %v2322 = vpack.c.b16 %v2309, %v2308
        %v2323 = vpack.c.b16 %v2311, %v2310
        %v2324 = vpack.c.b16 %v2313, %v2312
        %v2325 = vpack.c.b16 %v2315, %v2314
        %v2326 = vpack.c.b16 %v2317, %v2316
        %v2327 = vpack.c.b16 %v2319, %v2318
        %2336 = vmatprep.subr.bf16.mxu0 0
        %2337 = vmatpush1.bf16.msra.mxu0 %v2327
        %2338 = vmatprep.subr.bf16.mxu0 0
        %2339 = vmatpush1.bf16.msra.mxu0 %v2326
        %2340 = vmatprep.subr.bf16.mxu0 0
        %2341 = vmatpush1.bf16.msra.mxu0 %v2325
        %2342 = vmatprep.subr.bf16.mxu0 0
        %2343 = vmatpush1.bf16.msra.mxu0 %v2324
        %2344 = vmatprep.subr.bf16.mxu0 0
        %2345 = vmatpush1.bf16.msra.mxu0 %v2323
        %2346 = vmatprep.subr.bf16.mxu0 0
        %2347 = vmatpush1.bf16.msra.mxu0 %v2322
        %2348 = vmatprep.subr.bf16.mxu0 0
        %2349 = vmatpush1.bf16.msra.mxu0 %v2321
        %2350 = vmatprep.subr.bf16.mxu0 0
        %2351 = vmatpush1.bf16.msra.mxu0 %v2320
        %2352 = vmatprep.subr.bf16.mxu0 0
        %2353 = vmatpush2.bf16.msra.mxu0 0
        %2354 = vmatprep.subr.bf16.mxu0 0
        %2355 = vmatpush2.bf16.msra.mxu0 0
        %2356 = vmatprep.subr.bf16.mxu0 0
        %2357 = vmatpush2.bf16.msra.mxu0 0
        %2358 = vmatprep.subr.bf16.mxu0 0
        %2359 = vmatpush2.bf16.msra.mxu0 0
        %2360 = vmatprep.subr.bf16.mxu0 0
        %2361 = vmatpush2.bf16.msra.mxu0 0
        %2362 = vmatprep.subr.bf16.mxu0 0
        %2363 = vmatpush2.bf16.msra.mxu0 0
        %2364 = vmatprep.subr.bf16.mxu0 0
        %2365 = vmatpush2.bf16.msra.mxu0 0
        %2366 = vmatprep.subr.bf16.mxu0 0
        %2367 = vmatpush2.bf16.msra.mxu0 0
        %2368 = vmatprep.mubr.bf16.mxu0 0
        %2369 = vmatmul.mubr.bf16.gmra.mxu0 %v2249
        %v2370 = vpop.f32.mrf.mxu0
        %v2371 = vadd.f32 %v2286, %v2370
        %v2372 = vpop.f32.mrf.mxu0
        %v2373 = vpop.f32.mrf.mxu0
        %v2374 = vadd.f32 %v2286, %v2373
        %v2375 = vpop.f32.mrf.mxu0
        %2376 = vmatprep.mubr.bf16.mxu0 0
        %2377 = vmatmul.mubr.bf16.gmra.mxu0 %v2250
        %v2378 = vpop.f32.mrf.mxu0
        %v2379 = vadd.f32 %v2286, %v2378
        %v2380 = vpop.f32.mrf.mxu0
        %v2381 = vpop.f32.mrf.mxu0
        %v2382 = vadd.f32 %v2286, %v2381
        %v2383 = vpop.f32.mrf.mxu0
        %2384 = vmatprep.mubr.bf16.mxu0 0
        %2385 = vmatmul.mubr.bf16.gmra.mxu0 %v2251
        %v2386 = vpop.f32.mrf.mxu0
        %v2387 = vadd.f32 %v2286, %v2386
        %v2388 = vpop.f32.mrf.mxu0
        %v2389 = vpop.f32.mrf.mxu0
        %v2390 = vadd.f32 %v2286, %v2389
        %v2391 = vpop.f32.mrf.mxu0
        %2392 = vmatprep.mubr.bf16.mxu0 0
        %2393 = vmatmul.mubr.bf16.gmra.mxu0 %v2252
        %v2394 = vpop.f32.mrf.mxu0
        %v2395 = vadd.f32 %v2286, %v2394
        %v2396 = vpop.f32.mrf.mxu0
        %v2397 = vpop.f32.mrf.mxu0
        %v2398 = vadd.f32 %v2286, %v2397
        %v2399 = vpop.f32.mrf.mxu0
        %2400 = vmatprep.mubr.bf16.mxu0 0
        %2401 = vmatmul.mubr.bf16.gmra.mxu0 %v2253
        %v2402 = vpop.f32.mrf.mxu0
        %v2403 = vadd.f32 %v2286, %v2402
        %v2404 = vpop.f32.mrf.mxu0
        %v2405 = vpop.f32.mrf.mxu0
        %v2406 = vadd.f32 %v2286, %v2405
        %v2407 = vpop.f32.mrf.mxu0
        %2408 = vmatprep.mubr.bf16.mxu0 0
        %2409 = vmatmul.mubr.bf16.gmra.mxu0 %v2254
        %v2410 = vpop.f32.mrf.mxu0
        %v2411 = vadd.f32 %v2286, %v2410
        %v2412 = vpop.f32.mrf.mxu0
        %v2413 = vpop.f32.mrf.mxu0
        %v2414 = vadd.f32 %v2286, %v2413
        %v2415 = vpop.f32.mrf.mxu0
        %2416 = vmatprep.mubr.bf16.mxu0 0
        %2417 = vmatmul.mubr.bf16.gmra.mxu0 %v2255
        %v2418 = vpop.f32.mrf.mxu0
        %v2419 = vadd.f32 %v2286, %v2418
        %v2420 = vpop.f32.mrf.mxu0
        %v2421 = vpop.f32.mrf.mxu0
        %v2422 = vadd.f32 %v2286, %v2421
        %v2423 = vpop.f32.mrf.mxu0
        %2424 = vmatprep.mubr.bf16.mxu0 0
        %2425 = vmatmul.mubr.bf16.gmra.mxu0 %v2256
        %v2426 = vpop.f32.mrf.mxu0
        %v2427 = vadd.f32 %v2286, %v2426
        %v2428 = vpop.f32.mrf.mxu0
        %v2429 = vpop.f32.mrf.mxu0
        %v2430 = vadd.f32 %v2286, %v2429
        %v2431 = vpop.f32.mrf.mxu0
        %2432 = vmatprep.mubr.bf16.mxu0 0
        %2433 = vmatmul.mubr.bf16.gmra.mxu0 %v2257
        %v2434 = vpop.f32.mrf.mxu0
        %v2435 = vadd.f32 %v2286, %v2434
        %v2436 = vpop.f32.mrf.mxu0
        %v2437 = vpop.f32.mrf.mxu0
        %v2438 = vadd.f32 %v2286, %v2437
        %v2439 = vpop.f32.mrf.mxu0
        %2440 = vmatprep.mubr.bf16.mxu0 0
        %2441 = vmatmul.mubr.bf16.gmra.mxu0 %v2258
        %v2442 = vpop.f32.mrf.mxu0
        %v2443 = vadd.f32 %v2286, %v2442
        %v2444 = vpop.f32.mrf.mxu0
        %v2445 = vpop.f32.mrf.mxu0
        %v2446 = vadd.f32 %v2286, %v2445
        %v2447 = vpop.f32.mrf.mxu0
        %2448 = vmatprep.mubr.bf16.mxu0 0
        %2449 = vmatmul.mubr.bf16.gmra.mxu0 %v2259
        %v2450 = vpop.f32.mrf.mxu0
        %v2451 = vadd.f32 %v2286, %v2450
        %v2452 = vpop.f32.mrf.mxu0
        %v2453 = vpop.f32.mrf.mxu0
        %v2454 = vadd.f32 %v2286, %v2453
        %v2455 = vpop.f32.mrf.mxu0
        %2456 = vmatprep.mubr.bf16.mxu0 0
        %2457 = vmatmul.mubr.bf16.gmra.mxu0 %v2260
        %v2458 = vpop.f32.mrf.mxu0
        %v2459 = vadd.f32 %v2286, %v2458
        %v2460 = vpop.f32.mrf.mxu0
        %v2461 = vpop.f32.mrf.mxu0
        %v2462 = vadd.f32 %v2286, %v2461
        %v2463 = vpop.f32.mrf.mxu0
        %2464 = vmatprep.mubr.bf16.mxu0 0
        %2465 = vmatmul.mubr.bf16.gmra.mxu0 %v2261
        %v2466 = vpop.f32.mrf.mxu0
        %v2467 = vadd.f32 %v2286, %v2466
        %v2468 = vpop.f32.mrf.mxu0
        %v2469 = vpop.f32.mrf.mxu0
        %v2470 = vadd.f32 %v2286, %v2469
        %v2471 = vpop.f32.mrf.mxu0
        %2472 = vmatprep.mubr.bf16.mxu0 0
        %2473 = vmatmul.mubr.bf16.gmra.mxu0 %v2262
        %v2474 = vpop.f32.mrf.mxu0
        %v2475 = vadd.f32 %v2286, %v2474
        %v2476 = vpop.f32.mrf.mxu0
        %v2477 = vpop.f32.mrf.mxu0
        %v2478 = vadd.f32 %v2286, %v2477
        %v2479 = vpop.f32.mrf.mxu0
        %2480 = vmatprep.mubr.bf16.mxu0 0
        %2481 = vmatmul.mubr.bf16.gmra.mxu0 %v2263
        %v2482 = vpop.f32.mrf.mxu0
        %v2483 = vadd.f32 %v2286, %v2482
        %v2484 = vpop.f32.mrf.mxu0
        %v2485 = vpop.f32.mrf.mxu0
        %v2486 = vadd.f32 %v2286, %v2485
        %v2487 = vpop.f32.mrf.mxu0
        %2488 = vmatprep.mubr.bf16.mxu0 0
        %2489 = vmatmul.mubr.bf16.gmra.mxu0 %v2264
        %v2490 = vpop.f32.mrf.mxu0
        %v2491 = vadd.f32 %v2286, %v2490
        %v2492 = vpop.f32.mrf.mxu0
        %v2493 = vpop.f32.mrf.mxu0
        %v2494 = vadd.f32 %v2286, %v2493
        %v2495 = vpop.f32.mrf.mxu0
        %2496 = vdwg.mxu0
        %v2497 = vmax.f32 %v2371, 0.0
        %v2498 = vmax.f32 %v2374, 0.0
        %v2499 = vmax.f32 %v2379, 0.0
        %v2500 = vmax.f32 %v2382, 0.0
        %v2501 = vmax.f32 %v2387, 0.0
        %v2502 = vmax.f32 %v2390, 0.0
        %v2503 = vmax.f32 %v2395, 0.0
        %v2504 = vmax.f32 %v2398, 0.0
        %v2505 = vmax.f32 %v2403, 0.0
        %v2506 = vmax.f32 %v2406, 0.0
        %v2507 = vmax.f32 %v2411, 0.0
        %v2508 = vmax.f32 %v2414, 0.0
        %v2509 = vmax.f32 %v2419, 0.0
        %v2510 = vmax.f32 %v2422, 0.0
        %v2511 = vmax.f32 %v2427, 0.0
        %v2512 = vmax.f32 %v2430, 0.0
        %v2513 = vmax.f32 %v2435, 0.0
        %v2514 = vmax.f32 %v2438, 0.0
        %v2515 = vmax.f32 %v2443, 0.0
        %v2516 = vmax.f32 %v2446, 0.0
        %v2517 = vmax.f32 %v2451, 0.0
        %v2518 = vmax.f32 %v2454, 0.0
        %v2519 = vmax.f32 %v2459, 0.0
        %v2520 = vmax.f32 %v2462, 0.0
        %v2521 = vmax.f32 %v2467, 0.0
        %v2522 = vmax.f32 %v2470, 0.0
        %v2523 = vmax.f32 %v2475, 0.0
        %v2524 = vmax.f32 %v2478, 0.0
        %v2525 = vmax.f32 %v2483, 0.0
        %v2526 = vmax.f32 %v2486, 0.0
        %v2527 = vmax.f32 %v2491, 0.0
        %v2528 = vmax.f32 %v2494, 0.0
        %v2529 = vpack.c.bf16 %v2498, %v2497
        %v2530 = vpack.c.bf16 %v2500, %v2499
        %v2531 = vpack.c.bf16 %v2502, %v2501
        %v2532 = vpack.c.bf16 %v2504, %v2503
        %v2533 = vpack.c.bf16 %v2506, %v2505
        %v2534 = vpack.c.bf16 %v2508, %v2507
        %v2535 = vpack.c.bf16 %v2510, %v2509
        %v2536 = vpack.c.bf16 %v2512, %v2511
        %v2537 = vpack.c.bf16 %v2514, %v2513
        %v2538 = vpack.c.bf16 %v2516, %v2515
        %v2539 = vpack.c.bf16 %v2518, %v2517
        %v2540 = vpack.c.bf16 %v2520, %v2519
        %v2541 = vpack.c.bf16 %v2522, %v2521
        %v2542 = vpack.c.bf16 %v2524, %v2523
        %v2543 = vpack.c.bf16 %v2526, %v2525
        %v2544 = vpack.c.bf16 %v2528, %v2527
        %v2545 = vld [vmem:[%s2 + $0x4] sm:$0xf]
        %v2546 = vld [vmem:[%s2 + $0x18] sm:$0xf]
        %v2547 = vld [vmem:[%s2 + $0x2c] sm:$0xf]
        %v2548 = vld [vmem:[%s2 + $0x40] sm:$0xf]
        %v2549 = vld [vmem:[%s2 + $0x54] sm:$0xf]
        %v2550 = vld [vmem:[%s2 + $0x68] sm:$0xf]
        %v2551 = vld [vmem:[%s2 + $0x7c] sm:$0xf]
        %v2552 = vld [vmem:[%s2 + $0x90] sm:$0xf]
        %v2553 = vld [vmem:[%s2 + $0xa4] sm:$0xf]
        %v2554 = vld [vmem:[%s2 + $0xb8] sm:$0xf]
        %v2555 = vld [vmem:[%s2 + $0xcc] sm:$0xf]
        %v2556 = vld [vmem:[%s2 + $0xe0] sm:$0xf]
        %v2557 = vld [vmem:[%s2 + $0xf4] sm:$0xf]
        %v2558 = vld [vmem:[%s2 + $0x108] sm:$0xf]
        %v2559 = vld [vmem:[%s2 + $0x11c] sm:$0xf]
        %v2560 = vld [vmem:[%s2 + $0x130] sm:$0xf]
        %v2561 = vld [vmem:[%s3 + $0x2] sm:$0x1]
        %v2563 = vlaneseq
        %v2564 = vshrl.u32 %v2563, 7
        %v2565 = vsub.s32 0, %v2564
        %v2566 = vrot.slane %v2561, %v2565
        %v2584 = vunpack.c.l.b16 %v2545
        %v2585 = vunpack.c.l.b16 %v2546
        %v2586 = vunpack.c.l.b16 %v2547
        %v2587 = vunpack.c.l.b16 %v2548
        %v2588 = vunpack.c.l.b16 %v2549
        %v2589 = vunpack.c.l.b16 %v2550
        %v2590 = vunpack.c.l.b16 %v2551
        %v2591 = vunpack.c.l.b16 %v2552
        %v2592 = vunpack.c.l.b16 %v2553
        %v2593 = vunpack.c.l.b16 %v2554
        %v2594 = vunpack.c.l.b16 %v2555
        %v2595 = vunpack.c.l.b16 %v2556
        %v2596 = vunpack.c.l.b16 %v2557
        %v2597 = vunpack.c.l.b16 %v2558
        %v2598 = vunpack.c.l.b16 %v2559
        %v2599 = vunpack.c.l.b16 %v2560
        %v2600 = vpack.c.b16 %v2585, %v2584
        %v2601 = vpack.c.b16 %v2587, %v2586
        %v2602 = vpack.c.b16 %v2589, %v2588
        %v2603 = vpack.c.b16 %v2591, %v2590
        %v2604 = vpack.c.b16 %v2593, %v2592
        %v2605 = vpack.c.b16 %v2595, %v2594
        %v2606 = vpack.c.b16 %v2597, %v2596
        %v2607 = vpack.c.b16 %v2599, %v2598
        %2616 = vmatprep.subr.bf16.mxu0 0
        %2617 = vmatpush1.bf16.msra.mxu0 %v2607
        %2618 = vmatprep.subr.bf16.mxu0 0
        %2619 = vmatpush1.bf16.msra.mxu0 %v2606
        %2620 = vmatprep.subr.bf16.mxu0 0
        %2621 = vmatpush1.bf16.msra.mxu0 %v2605
        %2622 = vmatprep.subr.bf16.mxu0 0
        %2623 = vmatpush1.bf16.msra.mxu0 %v2604
        %2624 = vmatprep.subr.bf16.mxu0 0
        %2625 = vmatpush1.bf16.msra.mxu0 %v2603
        %2626 = vmatprep.subr.bf16.mxu0 0
        %2627 = vmatpush1.bf16.msra.mxu0 %v2602
        %2628 = vmatprep.subr.bf16.mxu0 0
        %2629 = vmatpush1.bf16.msra.mxu0 %v2601
        %2630 = vmatprep.subr.bf16.mxu0 0
        %2631 = vmatpush1.bf16.msra.mxu0 %v2600
        %2632 = vmatprep.subr.bf16.mxu0 0
        %2633 = vmatpush2.bf16.msra.mxu0 0
        %2634 = vmatprep.subr.bf16.mxu0 0
        %2635 = vmatpush2.bf16.msra.mxu0 0
        %2636 = vmatprep.subr.bf16.mxu0 0
        %2637 = vmatpush2.bf16.msra.mxu0 0
        %2638 = vmatprep.subr.bf16.mxu0 0
        %2639 = vmatpush2.bf16.msra.mxu0 0
        %2640 = vmatprep.subr.bf16.mxu0 0
        %2641 = vmatpush2.bf16.msra.mxu0 0
        %2642 = vmatprep.subr.bf16.mxu0 0
        %2643 = vmatpush2.bf16.msra.mxu0 0
        %2644 = vmatprep.subr.bf16.mxu0 0
        %2645 = vmatpush2.bf16.msra.mxu0 0
        %2646 = vmatprep.subr.bf16.mxu0 0
        %2647 = vmatpush2.bf16.msra.mxu0 0
        %2648 = vmatprep.mubr.bf16.mxu0 0
        %2649 = vmatmul.mubr.bf16.gmra.mxu0 %v2529
        %v2650 = vpop.f32.mrf.mxu0
        %v2651 = vadd.f32 %v2566, %v2650
        %v2652 = vpop.f32.mrf.mxu0
        %v2653 = vpop.f32.mrf.mxu0
        %v2654 = vadd.f32 %v2566, %v2653
        %v2655 = vpop.f32.mrf.mxu0
        %2656 = vmatprep.mubr.bf16.mxu0 0
        %2657 = vmatmul.mubr.bf16.gmra.mxu0 %v2530
        %v2658 = vpop.f32.mrf.mxu0
        %v2659 = vadd.f32 %v2566, %v2658
        %v2660 = vpop.f32.mrf.mxu0
        %v2661 = vpop.f32.mrf.mxu0
        %v2662 = vadd.f32 %v2566, %v2661
        %v2663 = vpop.f32.mrf.mxu0
        %2664 = vmatprep.mubr.bf16.mxu0 0
        %2665 = vmatmul.mubr.bf16.gmra.mxu0 %v2531
        %v2666 = vpop.f32.mrf.mxu0
        %v2667 = vadd.f32 %v2566, %v2666
        %v2668 = vpop.f32.mrf.mxu0
        %v2669 = vpop.f32.mrf.mxu0
        %v2670 = vadd.f32 %v2566, %v2669
        %v2671 = vpop.f32.mrf.mxu0
        %2672 = vmatprep.mubr.bf16.mxu0 0
        %2673 = vmatmul.mubr.bf16.gmra.mxu0 %v2532
        %v2674 = vpop.f32.mrf.mxu0
        %v2675 = vadd.f32 %v2566, %v2674
        %v2676 = vpop.f32.mrf.mxu0
        %v2677 = vpop.f32.mrf.mxu0
        %v2678 = vadd.f32 %v2566, %v2677
        %v2679 = vpop.f32.mrf.mxu0
        %2680 = vmatprep.mubr.bf16.mxu0 0
        %2681 = vmatmul.mubr.bf16.gmra.mxu0 %v2533
        %v2682 = vpop.f32.mrf.mxu0
        %v2683 = vadd.f32 %v2566, %v2682
        %v2684 = vpop.f32.mrf.mxu0
        %v2685 = vpop.f32.mrf.mxu0
        %v2686 = vadd.f32 %v2566, %v2685
        %v2687 = vpop.f32.mrf.mxu0
        %2688 = vmatprep.mubr.bf16.mxu0 0
        %2689 = vmatmul.mubr.bf16.gmra.mxu0 %v2534
        %v2690 = vpop.f32.mrf.mxu0
        %v2691 = vadd.f32 %v2566, %v2690
        %v2692 = vpop.f32.mrf.mxu0
        %v2693 = vpop.f32.mrf.mxu0
        %v2694 = vadd.f32 %v2566, %v2693
        %v2695 = vpop.f32.mrf.mxu0
        %2696 = vmatprep.mubr.bf16.mxu0 0
        %2697 = vmatmul.mubr.bf16.gmra.mxu0 %v2535
        %v2698 = vpop.f32.mrf.mxu0
        %v2699 = vadd.f32 %v2566, %v2698
        %v2700 = vpop.f32.mrf.mxu0
        %v2701 = vpop.f32.mrf.mxu0
        %v2702 = vadd.f32 %v2566, %v2701
        %v2703 = vpop.f32.mrf.mxu0
        %2704 = vmatprep.mubr.bf16.mxu0 0
        %2705 = vmatmul.mubr.bf16.gmra.mxu0 %v2536
        %v2706 = vpop.f32.mrf.mxu0
        %v2707 = vadd.f32 %v2566, %v2706
        %v2708 = vpop.f32.mrf.mxu0
        %v2709 = vpop.f32.mrf.mxu0
        %v2710 = vadd.f32 %v2566, %v2709
        %v2711 = vpop.f32.mrf.mxu0
        %2712 = vmatprep.mubr.bf16.mxu0 0
        %2713 = vmatmul.mubr.bf16.gmra.mxu0 %v2537
        %v2714 = vpop.f32.mrf.mxu0
        %v2715 = vadd.f32 %v2566, %v2714
        %v2716 = vpop.f32.mrf.mxu0
        %v2717 = vpop.f32.mrf.mxu0
        %v2718 = vadd.f32 %v2566, %v2717
        %v2719 = vpop.f32.mrf.mxu0
        %2720 = vmatprep.mubr.bf16.mxu0 0
        %2721 = vmatmul.mubr.bf16.gmra.mxu0 %v2538
        %v2722 = vpop.f32.mrf.mxu0
        %v2723 = vadd.f32 %v2566, %v2722
        %v2724 = vpop.f32.mrf.mxu0
        %v2725 = vpop.f32.mrf.mxu0
        %v2726 = vadd.f32 %v2566, %v2725
        %v2727 = vpop.f32.mrf.mxu0
        %2728 = vmatprep.mubr.bf16.mxu0 0
        %2729 = vmatmul.mubr.bf16.gmra.mxu0 %v2539
        %v2730 = vpop.f32.mrf.mxu0
        %v2731 = vadd.f32 %v2566, %v2730
        %v2732 = vpop.f32.mrf.mxu0
        %v2733 = vpop.f32.mrf.mxu0
        %v2734 = vadd.f32 %v2566, %v2733
        %v2735 = vpop.f32.mrf.mxu0
        %2736 = vmatprep.mubr.bf16.mxu0 0
        %2737 = vmatmul.mubr.bf16.gmra.mxu0 %v2540
        %v2738 = vpop.f32.mrf.mxu0
        %v2739 = vadd.f32 %v2566, %v2738
        %v2740 = vpop.f32.mrf.mxu0
        %v2741 = vpop.f32.mrf.mxu0
        %v2742 = vadd.f32 %v2566, %v2741
        %v2743 = vpop.f32.mrf.mxu0
        %2744 = vmatprep.mubr.bf16.mxu0 0
        %2745 = vmatmul.mubr.bf16.gmra.mxu0 %v2541
        %v2746 = vpop.f32.mrf.mxu0
        %v2747 = vadd.f32 %v2566, %v2746
        %v2748 = vpop.f32.mrf.mxu0
        %v2749 = vpop.f32.mrf.mxu0
        %v2750 = vadd.f32 %v2566, %v2749
        %v2751 = vpop.f32.mrf.mxu0
        %2752 = vmatprep.mubr.bf16.mxu0 0
        %2753 = vmatmul.mubr.bf16.gmra.mxu0 %v2542
        %v2754 = vpop.f32.mrf.mxu0
        %v2755 = vadd.f32 %v2566, %v2754
        %v2756 = vpop.f32.mrf.mxu0
        %v2757 = vpop.f32.mrf.mxu0
        %v2758 = vadd.f32 %v2566, %v2757
        %v2759 = vpop.f32.mrf.mxu0
        %2760 = vmatprep.mubr.bf16.mxu0 0
        %2761 = vmatmul.mubr.bf16.gmra.mxu0 %v2543
        %v2762 = vpop.f32.mrf.mxu0
        %v2763 = vadd.f32 %v2566, %v2762
        %v2764 = vpop.f32.mrf.mxu0
        %v2765 = vpop.f32.mrf.mxu0
        %v2766 = vadd.f32 %v2566, %v2765
        %v2767 = vpop.f32.mrf.mxu0
        %2768 = vmatprep.mubr.bf16.mxu0 0
        %2769 = vmatmul.mubr.bf16.gmra.mxu0 %v2544
        %v2770 = vpop.f32.mrf.mxu0
        %v2771 = vadd.f32 %v2566, %v2770
        %v2772 = vpop.f32.mrf.mxu0
        %v2773 = vpop.f32.mrf.mxu0
        %v2774 = vadd.f32 %v2566, %v2773
        %v2775 = vpop.f32.mrf.mxu0
        %2776 = vdwg.mxu0
        %v2777 = vmax.f32 %v2651, 0.0
        %v2778 = vmax.f32 %v2654, 0.0
        %v2779 = vmax.f32 %v2659, 0.0
        %v2780 = vmax.f32 %v2662, 0.0
        %v2781 = vmax.f32 %v2667, 0.0
        %v2782 = vmax.f32 %v2670, 0.0
        %v2783 = vmax.f32 %v2675, 0.0
        %v2784 = vmax.f32 %v2678, 0.0
        %v2785 = vmax.f32 %v2683, 0.0
        %v2786 = vmax.f32 %v2686, 0.0
        %v2787 = vmax.f32 %v2691, 0.0
        %v2788 = vmax.f32 %v2694, 0.0
        %v2789 = vmax.f32 %v2699, 0.0
        %v2790 = vmax.f32 %v2702, 0.0
        %v2791 = vmax.f32 %v2707, 0.0
        %v2792 = vmax.f32 %v2710, 0.0
        %v2793 = vmax.f32 %v2715, 0.0
        %v2794 = vmax.f32 %v2718, 0.0
        %v2795 = vmax.f32 %v2723, 0.0
        %v2796 = vmax.f32 %v2726, 0.0
        %v2797 = vmax.f32 %v2731, 0.0
        %v2798 = vmax.f32 %v2734, 0.0
        %v2799 = vmax.f32 %v2739, 0.0
        %v2800 = vmax.f32 %v2742, 0.0
        %v2801 = vmax.f32 %v2747, 0.0
        %v2802 = vmax.f32 %v2750, 0.0
        %v2803 = vmax.f32 %v2755, 0.0
        %v2804 = vmax.f32 %v2758, 0.0
        %v2805 = vmax.f32 %v2763, 0.0
        %v2806 = vmax.f32 %v2766, 0.0
        %v2807 = vmax.f32 %v2771, 0.0
        %v2808 = vmax.f32 %v2774, 0.0
        %v2809 = vpack.c.bf16 %v2778, %v2777
        %v2810 = vpack.c.bf16 %v2780, %v2779
        %v2811 = vpack.c.bf16 %v2782, %v2781
        %v2812 = vpack.c.bf16 %v2784, %v2783
        %v2813 = vpack.c.bf16 %v2786, %v2785
        %v2814 = vpack.c.bf16 %v2788, %v2787
        %v2815 = vpack.c.bf16 %v2790, %v2789
        %v2816 = vpack.c.bf16 %v2792, %v2791
        %v2817 = vpack.c.bf16 %v2794, %v2793
        %v2818 = vpack.c.bf16 %v2796, %v2795
        %v2819 = vpack.c.bf16 %v2798, %v2797
        %v2820 = vpack.c.bf16 %v2800, %v2799
        %v2821 = vpack.c.bf16 %v2802, %v2801
        %v2822 = vpack.c.bf16 %v2804, %v2803
        %v2823 = vpack.c.bf16 %v2806, %v2805
        %v2824 = vpack.c.bf16 %v2808, %v2807
        %v2825 = vld [vmem:[%s2 + $0x8] sm:$0xf]
        %v2826 = vld [vmem:[%s2 + $0x1c] sm:$0xf]
        %v2827 = vld [vmem:[%s2 + $0x30] sm:$0xf]
        %v2828 = vld [vmem:[%s2 + $0x44] sm:$0xf]
        %v2829 = vld [vmem:[%s2 + $0x58] sm:$0xf]
        %v2830 = vld [vmem:[%s2 + $0x6c] sm:$0xf]
        %v2831 = vld [vmem:[%s2 + $0x80] sm:$0xf]
        %v2832 = vld [vmem:[%s2 + $0x94] sm:$0xf]
        %v2833 = vld [vmem:[%s2 + $0xa8] sm:$0xf]
        %v2834 = vld [vmem:[%s2 + $0xbc] sm:$0xf]
        %v2835 = vld [vmem:[%s2 + $0xd0] sm:$0xf]
        %v2836 = vld [vmem:[%s2 + $0xe4] sm:$0xf]
        %v2837 = vld [vmem:[%s2 + $0xf8] sm:$0xf]
        %v2838 = vld [vmem:[%s2 + $0x10c] sm:$0xf]
        %v2839 = vld [vmem:[%s2 + $0x120] sm:$0xf]
        %v2840 = vld [vmem:[%s2 + $0x134] sm:$0xf]
        %v2841 = vld [vmem:[%s3 + $0x3] sm:$0x1]
        %v2843 = vlaneseq
        %v2844 = vshrl.u32 %v2843, 7
        %v2845 = vsub.s32 0, %v2844
        %v2846 = vrot.slane %v2841, %v2845
        %v2864 = vunpack.c.l.b16 %v2825
        %v2865 = vunpack.c.l.b16 %v2826
        %v2866 = vunpack.c.l.b16 %v2827
        %v2867 = vunpack.c.l.b16 %v2828
        %v2868 = vunpack.c.l.b16 %v2829
        %v2869 = vunpack.c.l.b16 %v2830
        %v2870 = vunpack.c.l.b16 %v2831
        %v2871 = vunpack.c.l.b16 %v2832
        %v2872 = vunpack.c.l.b16 %v2833
        %v2873 = vunpack.c.l.b16 %v2834
        %v2874 = vunpack.c.l.b16 %v2835
        %v2875 = vunpack.c.l.b16 %v2836
        %v2876 = vunpack.c.l.b16 %v2837
        %v2877 = vunpack.c.l.b16 %v2838
        %v2878 = vunpack.c.l.b16 %v2839
        %v2879 = vunpack.c.l.b16 %v2840
        %v2880 = vpack.c.b16 %v2865, %v2864
        %v2881 = vpack.c.b16 %v2867, %v2866
        %v2882 = vpack.c.b16 %v2869, %v2868
        %v2883 = vpack.c.b16 %v2871, %v2870
        %v2884 = vpack.c.b16 %v2873, %v2872
        %v2885 = vpack.c.b16 %v2875, %v2874
        %v2886 = vpack.c.b16 %v2877, %v2876
        %v2887 = vpack.c.b16 %v2879, %v2878
        %2896 = vmatprep.subr.bf16.mxu0 0
        %2897 = vmatpush1.bf16.msra.mxu0 %v2887
        %2898 = vmatprep.subr.bf16.mxu0 0
        %2899 = vmatpush1.bf16.msra.mxu0 %v2886
        %2900 = vmatprep.subr.bf16.mxu0 0
        %2901 = vmatpush1.bf16.msra.mxu0 %v2885
        %2902 = vmatprep.subr.bf16.mxu0 0
        %2903 = vmatpush1.bf16.msra.mxu0 %v2884
        %2904 = vmatprep.subr.bf16.mxu0 0
        %2905 = vmatpush1.bf16.msra.mxu0 %v2883
        %2906 = vmatprep.subr.bf16.mxu0 0
        %2907 = vmatpush1.bf16.msra.mxu0 %v2882
        %2908 = vmatprep.subr.bf16.mxu0 0
        %2909 = vmatpush1.bf16.msra.mxu0 %v2881
        %2910 = vmatprep.subr.bf16.mxu0 0
        %2911 = vmatpush1.bf16.msra.mxu0 %v2880
        %2912 = vmatprep.subr.bf16.mxu0 0
        %2913 = vmatpush2.bf16.msra.mxu0 0
        %2914 = vmatprep.subr.bf16.mxu0 0
        %2915 = vmatpush2.bf16.msra.mxu0 0
        %2916 = vmatprep.subr.bf16.mxu0 0
        %2917 = vmatpush2.bf16.msra.mxu0 0
        %2918 = vmatprep.subr.bf16.mxu0 0
        %2919 = vmatpush2.bf16.msra.mxu0 0
        %2920 = vmatprep.subr.bf16.mxu0 0
        %2921 = vmatpush2.bf16.msra.mxu0 0
        %2922 = vmatprep.subr.bf16.mxu0 0
        %2923 = vmatpush2.bf16.msra.mxu0 0
        %2924 = vmatprep.subr.bf16.mxu0 0
        %2925 = vmatpush2.bf16.msra.mxu0 0
        %2926 = vmatprep.subr.bf16.mxu0 0
        %2927 = vmatpush2.bf16.msra.mxu0 0
        %2928 = vmatprep.mubr.bf16.mxu0 0
        %2929 = vmatmul.mubr.bf16.gmra.mxu0 %v2809
        %v2930 = vpop.f32.mrf.mxu0
        %v2931 = vadd.f32 %v2846, %v2930
        %v2932 = vpop.f32.mrf.mxu0
        %v2933 = vpop.f32.mrf.mxu0
        %v2934 = vadd.f32 %v2846, %v2933
        %v2935 = vpop.f32.mrf.mxu0
        %2936 = vmatprep.mubr.bf16.mxu0 0
        %2937 = vmatmul.mubr.bf16.gmra.mxu0 %v2810
        %v2938 = vpop.f32.mrf.mxu0
        %v2939 = vadd.f32 %v2846, %v2938
        %v2940 = vpop.f32.mrf.mxu0
        %v2941 = vpop.f32.mrf.mxu0
        %v2942 = vadd.f32 %v2846, %v2941
        %v2943 = vpop.f32.mrf.mxu0
        %2944 = vmatprep.mubr.bf16.mxu0 0
        %2945 = vmatmul.mubr.bf16.gmra.mxu0 %v2811
        %v2946 = vpop.f32.mrf.mxu0
        %v2947 = vadd.f32 %v2846, %v2946
        %v2948 = vpop.f32.mrf.mxu0
        %v2949 = vpop.f32.mrf.mxu0
        %v2950 = vadd.f32 %v2846, %v2949
        %v2951 = vpop.f32.mrf.mxu0
        %2952 = vmatprep.mubr.bf16.mxu0 0
        %2953 = vmatmul.mubr.bf16.gmra.mxu0 %v2812
        %v2954 = vpop.f32.mrf.mxu0
        %v2955 = vadd.f32 %v2846, %v2954
        %v2956 = vpop.f32.mrf.mxu0
        %v2957 = vpop.f32.mrf.mxu0
        %v2958 = vadd.f32 %v2846, %v2957
        %v2959 = vpop.f32.mrf.mxu0
        %2960 = vmatprep.mubr.bf16.mxu0 0
        %2961 = vmatmul.mubr.bf16.gmra.mxu0 %v2813
        %v2962 = vpop.f32.mrf.mxu0
        %v2963 = vadd.f32 %v2846, %v2962
        %v2964 = vpop.f32.mrf.mxu0
        %v2965 = vpop.f32.mrf.mxu0
        %v2966 = vadd.f32 %v2846, %v2965
        %v2967 = vpop.f32.mrf.mxu0
        %2968 = vmatprep.mubr.bf16.mxu0 0
        %2969 = vmatmul.mubr.bf16.gmra.mxu0 %v2814
        %v2970 = vpop.f32.mrf.mxu0
        %v2971 = vadd.f32 %v2846, %v2970
        %v2972 = vpop.f32.mrf.mxu0
        %v2973 = vpop.f32.mrf.mxu0
        %v2974 = vadd.f32 %v2846, %v2973
        %v2975 = vpop.f32.mrf.mxu0
        %2976 = vmatprep.mubr.bf16.mxu0 0
        %2977 = vmatmul.mubr.bf16.gmra.mxu0 %v2815
        %v2978 = vpop.f32.mrf.mxu0
        %v2979 = vadd.f32 %v2846, %v2978
        %v2980 = vpop.f32.mrf.mxu0
        %v2981 = vpop.f32.mrf.mxu0
        %v2982 = vadd.f32 %v2846, %v2981
        %v2983 = vpop.f32.mrf.mxu0
        %2984 = vmatprep.mubr.bf16.mxu0 0
        %2985 = vmatmul.mubr.bf16.gmra.mxu0 %v2816
        %v2986 = vpop.f32.mrf.mxu0
        %v2987 = vadd.f32 %v2846, %v2986
        %v2988 = vpop.f32.mrf.mxu0
        %v2989 = vpop.f32.mrf.mxu0
        %v2990 = vadd.f32 %v2846, %v2989
        %v2991 = vpop.f32.mrf.mxu0
        %2992 = vmatprep.mubr.bf16.mxu0 0
        %2993 = vmatmul.mubr.bf16.gmra.mxu0 %v2817
        %v2994 = vpop.f32.mrf.mxu0
        %v2995 = vadd.f32 %v2846, %v2994
        %v2996 = vpop.f32.mrf.mxu0
        %v2997 = vpop.f32.mrf.mxu0
        %v2998 = vadd.f32 %v2846, %v2997
        %v2999 = vpop.f32.mrf.mxu0
        %3000 = vmatprep.mubr.bf16.mxu0 0
        %3001 = vmatmul.mubr.bf16.gmra.mxu0 %v2818
        %v3002 = vpop.f32.mrf.mxu0
        %v3003 = vadd.f32 %v2846, %v3002
        %v3004 = vpop.f32.mrf.mxu0
        %v3005 = vpop.f32.mrf.mxu0
        %v3006 = vadd.f32 %v2846, %v3005
        %v3007 = vpop.f32.mrf.mxu0
        %3008 = vmatprep.mubr.bf16.mxu0 0
        %3009 = vmatmul.mubr.bf16.gmra.mxu0 %v2819
        %v3010 = vpop.f32.mrf.mxu0
        %v3011 = vadd.f32 %v2846, %v3010
        %v3012 = vpop.f32.mrf.mxu0
        %v3013 = vpop.f32.mrf.mxu0
        %v3014 = vadd.f32 %v2846, %v3013
        %v3015 = vpop.f32.mrf.mxu0
        %3016 = vmatprep.mubr.bf16.mxu0 0
        %3017 = vmatmul.mubr.bf16.gmra.mxu0 %v2820
        %v3018 = vpop.f32.mrf.mxu0
        %v3019 = vadd.f32 %v2846, %v3018
        %v3020 = vpop.f32.mrf.mxu0
        %v3021 = vpop.f32.mrf.mxu0
        %v3022 = vadd.f32 %v2846, %v3021
        %v3023 = vpop.f32.mrf.mxu0
        %3024 = vmatprep.mubr.bf16.mxu0 0
        %3025 = vmatmul.mubr.bf16.gmra.mxu0 %v2821
        %v3026 = vpop.f32.mrf.mxu0
        %v3027 = vadd.f32 %v2846, %v3026
        %v3028 = vpop.f32.mrf.mxu0
        %v3029 = vpop.f32.mrf.mxu0
        %v3030 = vadd.f32 %v2846, %v3029
        %v3031 = vpop.f32.mrf.mxu0
        %3032 = vmatprep.mubr.bf16.mxu0 0
        %3033 = vmatmul.mubr.bf16.gmra.mxu0 %v2822
        %v3034 = vpop.f32.mrf.mxu0
        %v3035 = vadd.f32 %v2846, %v3034
        %v3036 = vpop.f32.mrf.mxu0
        %v3037 = vpop.f32.mrf.mxu0
        %v3038 = vadd.f32 %v2846, %v3037
        %v3039 = vpop.f32.mrf.mxu0
        %3040 = vmatprep.mubr.bf16.mxu0 0
        %3041 = vmatmul.mubr.bf16.gmra.mxu0 %v2823
        %v3042 = vpop.f32.mrf.mxu0
        %v3043 = vadd.f32 %v2846, %v3042
        %v3044 = vpop.f32.mrf.mxu0
        %v3045 = vpop.f32.mrf.mxu0
        %v3046 = vadd.f32 %v2846, %v3045
        %v3047 = vpop.f32.mrf.mxu0
        %3048 = vmatprep.mubr.bf16.mxu0 0
        %3049 = vmatmul.mubr.bf16.gmra.mxu0 %v2824
        %v3050 = vpop.f32.mrf.mxu0
        %v3051 = vadd.f32 %v2846, %v3050
        %v3052 = vpop.f32.mrf.mxu0
        %v3053 = vpop.f32.mrf.mxu0
        %v3054 = vadd.f32 %v2846, %v3053
        %v3055 = vpop.f32.mrf.mxu0
        %3056 = vdwg.mxu0
        %v3057 = vmax.f32 %v2931, 0.0
        %v3058 = vmax.f32 %v2934, 0.0
        %v3059 = vmax.f32 %v2939, 0.0
        %v3060 = vmax.f32 %v2942, 0.0
        %v3061 = vmax.f32 %v2947, 0.0
        %v3062 = vmax.f32 %v2950, 0.0
        %v3063 = vmax.f32 %v2955, 0.0
        %v3064 = vmax.f32 %v2958, 0.0
        %v3065 = vmax.f32 %v2963, 0.0
        %v3066 = vmax.f32 %v2966, 0.0
        %v3067 = vmax.f32 %v2971, 0.0
        %v3068 = vmax.f32 %v2974, 0.0
        %v3069 = vmax.f32 %v2979, 0.0
        %v3070 = vmax.f32 %v2982, 0.0
        %v3071 = vmax.f32 %v2987, 0.0
        %v3072 = vmax.f32 %v2990, 0.0
        %v3073 = vmax.f32 %v2995, 0.0
        %v3074 = vmax.f32 %v2998, 0.0
        %v3075 = vmax.f32 %v3003, 0.0
        %v3076 = vmax.f32 %v3006, 0.0
        %v3077 = vmax.f32 %v3011, 0.0
        %v3078 = vmax.f32 %v3014, 0.0
        %v3079 = vmax.f32 %v3019, 0.0
        %v3080 = vmax.f32 %v3022, 0.0
        %v3081 = vmax.f32 %v3027, 0.0
        %v3082 = vmax.f32 %v3030, 0.0
        %v3083 = vmax.f32 %v3035, 0.0
        %v3084 = vmax.f32 %v3038, 0.0
        %v3085 = vmax.f32 %v3043, 0.0
        %v3086 = vmax.f32 %v3046, 0.0
        %v3087 = vmax.f32 %v3051, 0.0
        %v3088 = vmax.f32 %v3054, 0.0
        %v3089 = vpack.c.bf16 %v3058, %v3057
        %v3090 = vpack.c.bf16 %v3060, %v3059
        %v3091 = vpack.c.bf16 %v3062, %v3061
        %v3092 = vpack.c.bf16 %v3064, %v3063
        %v3093 = vpack.c.bf16 %v3066, %v3065
        %v3094 = vpack.c.bf16 %v3068, %v3067
        %v3095 = vpack.c.bf16 %v3070, %v3069
        %v3096 = vpack.c.bf16 %v3072, %v3071
        %v3097 = vpack.c.bf16 %v3074, %v3073
        %v3098 = vpack.c.bf16 %v3076, %v3075
        %v3099 = vpack.c.bf16 %v3078, %v3077
        %v3100 = vpack.c.bf16 %v3080, %v3079
        %v3101 = vpack.c.bf16 %v3082, %v3081
        %v3102 = vpack.c.bf16 %v3084, %v3083
        %v3103 = vpack.c.bf16 %v3086, %v3085
        %v3104 = vpack.c.bf16 %v3088, %v3087
        %v3105 = vld [vmem:[%s2 + $0xc] sm:$0xf]
        %v3106 = vld [vmem:[%s2 + $0x20] sm:$0xf]
        %v3107 = vld [vmem:[%s2 + $0x34] sm:$0xf]
        %v3108 = vld [vmem:[%s2 + $0x48] sm:$0xf]
        %v3109 = vld [vmem:[%s2 + $0x5c] sm:$0xf]
        %v3110 = vld [vmem:[%s2 + $0x70] sm:$0xf]
        %v3111 = vld [vmem:[%s2 + $0x84] sm:$0xf]
        %v3112 = vld [vmem:[%s2 + $0x98] sm:$0xf]
        %v3113 = vld [vmem:[%s2 + $0xac] sm:$0xf]
        %v3114 = vld [vmem:[%s2 + $0xc0] sm:$0xf]
        %v3115 = vld [vmem:[%s2 + $0xd4] sm:$0xf]
        %v3116 = vld [vmem:[%s2 + $0xe8] sm:$0xf]
        %v3117 = vld [vmem:[%s2 + $0xfc] sm:$0xf]
        %v3118 = vld [vmem:[%s2 + $0x110] sm:$0xf]
        %v3119 = vld [vmem:[%s2 + $0x124] sm:$0xf]
        %v3120 = vld [vmem:[%s2 + $0x138] sm:$0xf]
        %v3121 = vld [vmem:[%s3 + $0x4] sm:$0x1]
        %v3123 = vlaneseq
        %v3124 = vshrl.u32 %v3123, 7
        %v3125 = vsub.s32 0, %v3124
        %v3126 = vrot.slane %v3121, %v3125
        %v3144 = vunpack.c.l.b16 %v3105
        %v3145 = vunpack.c.l.b16 %v3106
        %v3146 = vunpack.c.l.b16 %v3107
        %v3147 = vunpack.c.l.b16 %v3108
        %v3148 = vunpack.c.l.b16 %v3109
        %v3149 = vunpack.c.l.b16 %v3110
        %v3150 = vunpack.c.l.b16 %v3111
        %v3151 = vunpack.c.l.b16 %v3112
        %v3152 = vunpack.c.l.b16 %v3113
        %v3153 = vunpack.c.l.b16 %v3114
        %v3154 = vunpack.c.l.b16 %v3115
        %v3155 = vunpack.c.l.b16 %v3116
        %v3156 = vunpack.c.l.b16 %v3117
        %v3157 = vunpack.c.l.b16 %v3118
        %v3158 = vunpack.c.l.b16 %v3119
        %v3159 = vunpack.c.l.b16 %v3120
        %v3160 = vpack.c.b16 %v3145, %v3144
        %v3161 = vpack.c.b16 %v3147, %v3146
        %v3162 = vpack.c.b16 %v3149, %v3148
        %v3163 = vpack.c.b16 %v3151, %v3150
        %v3164 = vpack.c.b16 %v3153, %v3152
        %v3165 = vpack.c.b16 %v3155, %v3154
        %v3166 = vpack.c.b16 %v3157, %v3156
        %v3167 = vpack.c.b16 %v3159, %v3158
        %3176 = vmatprep.subr.bf16.mxu0 0
        %3177 = vmatpush1.bf16.msra.mxu0 %v3167
        %3178 = vmatprep.subr.bf16.mxu0 0
        %3179 = vmatpush1.bf16.msra.mxu0 %v3166
        %3180 = vmatprep.subr.bf16.mxu0 0
        %3181 = vmatpush1.bf16.msra.mxu0 %v3165
        %3182 = vmatprep.subr.bf16.mxu0 0
        %3183 = vmatpush1.bf16.msra.mxu0 %v3164
        %3184 = vmatprep.subr.bf16.mxu0 0
        %3185 = vmatpush1.bf16.msra.mxu0 %v3163
        %3186 = vmatprep.subr.bf16.mxu0 0
        %3187 = vmatpush1.bf16.msra.mxu0 %v3162
        %3188 = vmatprep.subr.bf16.mxu0 0
        %3189 = vmatpush1.bf16.msra.mxu0 %v3161
        %3190 = vmatprep.subr.bf16.mxu0 0
        %3191 = vmatpush1.bf16.msra.mxu0 %v3160
        %3192 = vmatprep.subr.bf16.mxu0 0
        %3193 = vmatpush2.bf16.msra.mxu0 0
        %3194 = vmatprep.subr.bf16.mxu0 0
        %3195 = vmatpush2.bf16.msra.mxu0 0
        %3196 = vmatprep.subr.bf16.mxu0 0
        %3197 = vmatpush2.bf16.msra.mxu0 0
        %3198 = vmatprep.subr.bf16.mxu0 0
        %3199 = vmatpush2.bf16.msra.mxu0 0
        %3200 = vmatprep.subr.bf16.mxu0 0
        %3201 = vmatpush2.bf16.msra.mxu0 0
        %3202 = vmatprep.subr.bf16.mxu0 0
        %3203 = vmatpush2.bf16.msra.mxu0 0
        %3204 = vmatprep.subr.bf16.mxu0 0
        %3205 = vmatpush2.bf16.msra.mxu0 0
        %3206 = vmatprep.subr.bf16.mxu0 0
        %3207 = vmatpush2.bf16.msra.mxu0 0
        %3208 = vmatprep.mubr.bf16.mxu0 0
        %3209 = vmatmul.mubr.bf16.gmra.mxu0 %v3089
        %v3210 = vpop.f32.mrf.mxu0
        %v3211 = vadd.f32 %v3126, %v3210
        %v3212 = vpop.f32.mrf.mxu0
        %v3213 = vpop.f32.mrf.mxu0
        %v3214 = vadd.f32 %v3126, %v3213
        %v3215 = vpop.f32.mrf.mxu0
        %3216 = vmatprep.mubr.bf16.mxu0 0
        %3217 = vmatmul.mubr.bf16.gmra.mxu0 %v3090
        %v3218 = vpop.f32.mrf.mxu0
        %v3219 = vadd.f32 %v3126, %v3218
        %v3220 = vpop.f32.mrf.mxu0
        %v3221 = vpop.f32.mrf.mxu0
        %v3222 = vadd.f32 %v3126, %v3221
        %v3223 = vpop.f32.mrf.mxu0
        %3224 = vmatprep.mubr.bf16.mxu0 0
        %3225 = vmatmul.mubr.bf16.gmra.mxu0 %v3091
        %v3226 = vpop.f32.mrf.mxu0
        %v3227 = vadd.f32 %v3126, %v3226
        %v3228 = vpop.f32.mrf.mxu0
        %v3229 = vpop.f32.mrf.mxu0
        %v3230 = vadd.f32 %v3126, %v3229
        %v3231 = vpop.f32.mrf.mxu0
        %3232 = vmatprep.mubr.bf16.mxu0 0
        %3233 = vmatmul.mubr.bf16.gmra.mxu0 %v3092
        %v3234 = vpop.f32.mrf.mxu0
        %v3235 = vadd.f32 %v3126, %v3234
        %v3236 = vpop.f32.mrf.mxu0
        %v3237 = vpop.f32.mrf.mxu0
        %v3238 = vadd.f32 %v3126, %v3237
        %v3239 = vpop.f32.mrf.mxu0
        %3240 = vmatprep.mubr.bf16.mxu0 0
        %3241 = vmatmul.mubr.bf16.gmra.mxu0 %v3093
        %v3242 = vpop.f32.mrf.mxu0
        %v3243 = vadd.f32 %v3126, %v3242
        %v3244 = vpop.f32.mrf.mxu0
        %v3245 = vpop.f32.mrf.mxu0
        %v3246 = vadd.f32 %v3126, %v3245
        %v3247 = vpop.f32.mrf.mxu0
        %3248 = vmatprep.mubr.bf16.mxu0 0
        %3249 = vmatmul.mubr.bf16.gmra.mxu0 %v3094
        %v3250 = vpop.f32.mrf.mxu0
        %v3251 = vadd.f32 %v3126, %v3250
        %v3252 = vpop.f32.mrf.mxu0
        %v3253 = vpop.f32.mrf.mxu0
        %v3254 = vadd.f32 %v3126, %v3253
        %v3255 = vpop.f32.mrf.mxu0
        %3256 = vmatprep.mubr.bf16.mxu0 0
        %3257 = vmatmul.mubr.bf16.gmra.mxu0 %v3095
        %v3258 = vpop.f32.mrf.mxu0
        %v3259 = vadd.f32 %v3126, %v3258
        %v3260 = vpop.f32.mrf.mxu0
        %v3261 = vpop.f32.mrf.mxu0
        %v3262 = vadd.f32 %v3126, %v3261
        %v3263 = vpop.f32.mrf.mxu0
        %3264 = vmatprep.mubr.bf16.mxu0 0
        %3265 = vmatmul.mubr.bf16.gmra.mxu0 %v3096
        %v3266 = vpop.f32.mrf.mxu0
        %v3267 = vadd.f32 %v3126, %v3266
        %v3268 = vpop.f32.mrf.mxu0
        %v3269 = vpop.f32.mrf.mxu0
        %v3270 = vadd.f32 %v3126, %v3269
        %v3271 = vpop.f32.mrf.mxu0
        %3272 = vmatprep.mubr.bf16.mxu0 0
        %3273 = vmatmul.mubr.bf16.gmra.mxu0 %v3097
        %v3274 = vpop.f32.mrf.mxu0
        %v3275 = vadd.f32 %v3126, %v3274
        %v3276 = vpop.f32.mrf.mxu0
        %v3277 = vpop.f32.mrf.mxu0
        %v3278 = vadd.f32 %v3126, %v3277
        %v3279 = vpop.f32.mrf.mxu0
        %3280 = vmatprep.mubr.bf16.mxu0 0
        %3281 = vmatmul.mubr.bf16.gmra.mxu0 %v3098
        %v3282 = vpop.f32.mrf.mxu0
        %v3283 = vadd.f32 %v3126, %v3282
        %v3284 = vpop.f32.mrf.mxu0
        %v3285 = vpop.f32.mrf.mxu0
        %v3286 = vadd.f32 %v3126, %v3285
        %v3287 = vpop.f32.mrf.mxu0
        %3288 = vmatprep.mubr.bf16.mxu0 0
        %3289 = vmatmul.mubr.bf16.gmra.mxu0 %v3099
        %v3290 = vpop.f32.mrf.mxu0
        %v3291 = vadd.f32 %v3126, %v3290
        %v3292 = vpop.f32.mrf.mxu0
        %v3293 = vpop.f32.mrf.mxu0
        %v3294 = vadd.f32 %v3126, %v3293
        %v3295 = vpop.f32.mrf.mxu0
        %3296 = vmatprep.mubr.bf16.mxu0 0
        %3297 = vmatmul.mubr.bf16.gmra.mxu0 %v3100
        %v3298 = vpop.f32.mrf.mxu0
        %v3299 = vadd.f32 %v3126, %v3298
        %v3300 = vpop.f32.mrf.mxu0
        %v3301 = vpop.f32.mrf.mxu0
        %v3302 = vadd.f32 %v3126, %v3301
        %v3303 = vpop.f32.mrf.mxu0
        %3304 = vmatprep.mubr.bf16.mxu0 0
        %3305 = vmatmul.mubr.bf16.gmra.mxu0 %v3101
        %v3306 = vpop.f32.mrf.mxu0
        %v3307 = vadd.f32 %v3126, %v3306
        %v3308 = vpop.f32.mrf.mxu0
        %v3309 = vpop.f32.mrf.mxu0
        %v3310 = vadd.f32 %v3126, %v3309
        %v3311 = vpop.f32.mrf.mxu0
        %3312 = vmatprep.mubr.bf16.mxu0 0
        %3313 = vmatmul.mubr.bf16.gmra.mxu0 %v3102
        %v3314 = vpop.f32.mrf.mxu0
        %v3315 = vadd.f32 %v3126, %v3314
        %v3316 = vpop.f32.mrf.mxu0
        %v3317 = vpop.f32.mrf.mxu0
        %v3318 = vadd.f32 %v3126, %v3317
        %v3319 = vpop.f32.mrf.mxu0
        %3320 = vmatprep.mubr.bf16.mxu0 0
        %3321 = vmatmul.mubr.bf16.gmra.mxu0 %v3103
        %v3322 = vpop.f32.mrf.mxu0
        %v3323 = vadd.f32 %v3126, %v3322
        %v3324 = vpop.f32.mrf.mxu0
        %v3325 = vpop.f32.mrf.mxu0
        %v3326 = vadd.f32 %v3126, %v3325
        %v3327 = vpop.f32.mrf.mxu0
        %3328 = vmatprep.mubr.bf16.mxu0 0
        %3329 = vmatmul.mubr.bf16.gmra.mxu0 %v3104
        %v3330 = vpop.f32.mrf.mxu0
        %v3331 = vadd.f32 %v3126, %v3330
        %v3332 = vpop.f32.mrf.mxu0
        %v3333 = vpop.f32.mrf.mxu0
        %v3334 = vadd.f32 %v3126, %v3333
        %v3335 = vpop.f32.mrf.mxu0
        %3336 = vdwg.mxu0
        %v3337 = vmax.f32 %v3211, 0.0
        %v3338 = vmax.f32 %v3214, 0.0
        %v3339 = vmax.f32 %v3219, 0.0
        %v3340 = vmax.f32 %v3222, 0.0
        %v3341 = vmax.f32 %v3227, 0.0
        %v3342 = vmax.f32 %v3230, 0.0
        %v3343 = vmax.f32 %v3235, 0.0
        %v3344 = vmax.f32 %v3238, 0.0
        %v3345 = vmax.f32 %v3243, 0.0
        %v3346 = vmax.f32 %v3246, 0.0
        %v3347 = vmax.f32 %v3251, 0.0
        %v3348 = vmax.f32 %v3254, 0.0
        %v3349 = vmax.f32 %v3259, 0.0
        %v3350 = vmax.f32 %v3262, 0.0
        %v3351 = vmax.f32 %v3267, 0.0
        %v3352 = vmax.f32 %v3270, 0.0
        %v3353 = vmax.f32 %v3275, 0.0
        %v3354 = vmax.f32 %v3278, 0.0
        %v3355 = vmax.f32 %v3283, 0.0
        %v3356 = vmax.f32 %v3286, 0.0
        %v3357 = vmax.f32 %v3291, 0.0
        %v3358 = vmax.f32 %v3294, 0.0
        %v3359 = vmax.f32 %v3299, 0.0
        %v3360 = vmax.f32 %v3302, 0.0
        %v3361 = vmax.f32 %v3307, 0.0
        %v3362 = vmax.f32 %v3310, 0.0
        %v3363 = vmax.f32 %v3315, 0.0
        %v3364 = vmax.f32 %v3318, 0.0
        %v3365 = vmax.f32 %v3323, 0.0
        %v3366 = vmax.f32 %v3326, 0.0
        %v3367 = vmax.f32 %v3331, 0.0
        %v3368 = vmax.f32 %v3334, 0.0
        %v3369 = vpack.c.bf16 %v3338, %v3337
        %v3370 = vpack.c.bf16 %v3340, %v3339
        %v3371 = vpack.c.bf16 %v3342, %v3341
        %v3372 = vpack.c.bf16 %v3344, %v3343
        %v3373 = vpack.c.bf16 %v3346, %v3345
        %v3374 = vpack.c.bf16 %v3348, %v3347
        %v3375 = vpack.c.bf16 %v3350, %v3349
        %v3376 = vpack.c.bf16 %v3352, %v3351
        %v3377 = vpack.c.bf16 %v3354, %v3353
        %v3378 = vpack.c.bf16 %v3356, %v3355
        %v3379 = vpack.c.bf16 %v3358, %v3357
        %v3380 = vpack.c.bf16 %v3360, %v3359
        %v3381 = vpack.c.bf16 %v3362, %v3361
        %v3382 = vpack.c.bf16 %v3364, %v3363
        %v3383 = vpack.c.bf16 %v3366, %v3365
        %v3384 = vpack.c.bf16 %v3368, %v3367
        %v3385 = vld [vmem:[%s2 + $0x10] sm:$0xf]
        %v3386 = vld [vmem:[%s2 + $0x24] sm:$0xf]
        %v3387 = vld [vmem:[%s2 + $0x38] sm:$0xf]
        %v3388 = vld [vmem:[%s2 + $0x4c] sm:$0xf]
        %v3389 = vld [vmem:[%s2 + $0x60] sm:$0xf]
        %v3390 = vld [vmem:[%s2 + $0x74] sm:$0xf]
        %v3391 = vld [vmem:[%s2 + $0x88] sm:$0xf]
        %v3392 = vld [vmem:[%s2 + $0x9c] sm:$0xf]
        %v3393 = vld [vmem:[%s2 + $0xb0] sm:$0xf]
        %v3394 = vld [vmem:[%s2 + $0xc4] sm:$0xf]
        %v3395 = vld [vmem:[%s2 + $0xd8] sm:$0xf]
        %v3396 = vld [vmem:[%s2 + $0xec] sm:$0xf]
        %v3397 = vld [vmem:[%s2 + $0x100] sm:$0xf]
        %v3398 = vld [vmem:[%s2 + $0x114] sm:$0xf]
        %v3399 = vld [vmem:[%s2 + $0x128] sm:$0xf]
        %v3400 = vld [vmem:[%s2 + $0x13c] sm:$0xf]
        %v3401 = vld [vmem:[%s3 + $0x5] sm:$0x1]
        %v3403 = vlaneseq
        %v3404 = vshrl.u32 %v3403, 7
        %v3405 = vsub.s32 0, %v3404
        %v3406 = vrot.slane %v3401, %v3405
        %v3424 = vunpack.c.l.b16 %v3385
        %v3425 = vunpack.c.l.b16 %v3386
        %v3426 = vunpack.c.l.b16 %v3387
        %v3427 = vunpack.c.l.b16 %v3388
        %v3428 = vunpack.c.l.b16 %v3389
        %v3429 = vunpack.c.l.b16 %v3390
        %v3430 = vunpack.c.l.b16 %v3391
        %v3431 = vunpack.c.l.b16 %v3392
        %v3432 = vunpack.c.l.b16 %v3393
        %v3433 = vunpack.c.l.b16 %v3394
        %v3434 = vunpack.c.l.b16 %v3395
        %v3435 = vunpack.c.l.b16 %v3396
        %v3436 = vunpack.c.l.b16 %v3397
        %v3437 = vunpack.c.l.b16 %v3398
        %v3438 = vunpack.c.l.b16 %v3399
        %v3439 = vunpack.c.l.b16 %v3400
        %v3440 = vpack.c.b16 %v3425, %v3424
        %v3441 = vpack.c.b16 %v3427, %v3426
        %v3442 = vpack.c.b16 %v3429, %v3428
        %v3443 = vpack.c.b16 %v3431, %v3430
        %v3444 = vpack.c.b16 %v3433, %v3432
        %v3445 = vpack.c.b16 %v3435, %v3434
        %v3446 = vpack.c.b16 %v3437, %v3436
        %v3447 = vpack.c.b16 %v3439, %v3438
        %3456 = vmatprep.subr.bf16.mxu0 0
        %3457 = vmatpush1.bf16.msra.mxu0 %v3447
        %3458 = vmatprep.subr.bf16.mxu0 0
        %3459 = vmatpush1.bf16.msra.mxu0 %v3446
        %3460 = vmatprep.subr.bf16.mxu0 0
        %3461 = vmatpush1.bf16.msra.mxu0 %v3445
        %3462 = vmatprep.subr.bf16.mxu0 0
        %3463 = vmatpush1.bf16.msra.mxu0 %v3444
        %3464 = vmatprep.subr.bf16.mxu0 0
        %3465 = vmatpush1.bf16.msra.mxu0 %v3443
        %3466 = vmatprep.subr.bf16.mxu0 0
        %3467 = vmatpush1.bf16.msra.mxu0 %v3442
        %3468 = vmatprep.subr.bf16.mxu0 0
        %3469 = vmatpush1.bf16.msra.mxu0 %v3441
        %3470 = vmatprep.subr.bf16.mxu0 0
        %3471 = vmatpush1.bf16.msra.mxu0 %v3440
        %3472 = vmatprep.subr.bf16.mxu0 0
        %3473 = vmatpush2.bf16.msra.mxu0 0
        %3474 = vmatprep.subr.bf16.mxu0 0
        %3475 = vmatpush2.bf16.msra.mxu0 0
        %3476 = vmatprep.subr.bf16.mxu0 0
        %3477 = vmatpush2.bf16.msra.mxu0 0
        %3478 = vmatprep.subr.bf16.mxu0 0
        %3479 = vmatpush2.bf16.msra.mxu0 0
        %3480 = vmatprep.subr.bf16.mxu0 0
        %3481 = vmatpush2.bf16.msra.mxu0 0
        %3482 = vmatprep.subr.bf16.mxu0 0
        %3483 = vmatpush2.bf16.msra.mxu0 0
        %3484 = vmatprep.subr.bf16.mxu0 0
        %3485 = vmatpush2.bf16.msra.mxu0 0
        %3486 = vmatprep.subr.bf16.mxu0 0
        %3487 = vmatpush2.bf16.msra.mxu0 0
        %3488 = vmatprep.mubr.bf16.mxu0 0
        %3489 = vmatmul.mubr.bf16.gmra.mxu0 %v3369
        %v3490 = vpop.f32.mrf.mxu0
        %v3491 = vadd.f32 %v3406, %v3490
        %v3492 = vpop.f32.mrf.mxu0
        %v3493 = vpop.f32.mrf.mxu0
        %v3494 = vadd.f32 %v3406, %v3493
        %v3495 = vpop.f32.mrf.mxu0
        %3496 = vmatprep.mubr.bf16.mxu0 0
        %3497 = vmatmul.mubr.bf16.gmra.mxu0 %v3370
        %v3498 = vpop.f32.mrf.mxu0
        %v3499 = vadd.f32 %v3406, %v3498
        %v3500 = vpop.f32.mrf.mxu0
        %v3501 = vpop.f32.mrf.mxu0
        %v3502 = vadd.f32 %v3406, %v3501
        %v3503 = vpop.f32.mrf.mxu0
        %3504 = vmatprep.mubr.bf16.mxu0 0
        %3505 = vmatmul.mubr.bf16.gmra.mxu0 %v3371
        %v3506 = vpop.f32.mrf.mxu0
        %v3507 = vadd.f32 %v3406, %v3506
        %v3508 = vpop.f32.mrf.mxu0
        %v3509 = vpop.f32.mrf.mxu0
        %v3510 = vadd.f32 %v3406, %v3509
        %v3511 = vpop.f32.mrf.mxu0
        %3512 = vmatprep.mubr.bf16.mxu0 0
        %3513 = vmatmul.mubr.bf16.gmra.mxu0 %v3372
        %v3514 = vpop.f32.mrf.mxu0
        %v3515 = vadd.f32 %v3406, %v3514
        %v3516 = vpop.f32.mrf.mxu0
        %v3517 = vpop.f32.mrf.mxu0
        %v3518 = vadd.f32 %v3406, %v3517
        %v3519 = vpop.f32.mrf.mxu0
        %3520 = vmatprep.mubr.bf16.mxu0 0
        %3521 = vmatmul.mubr.bf16.gmra.mxu0 %v3373
        %v3522 = vpop.f32.mrf.mxu0
        %v3523 = vadd.f32 %v3406, %v3522
        %v3524 = vpop.f32.mrf.mxu0
        %v3525 = vpop.f32.mrf.mxu0
        %v3526 = vadd.f32 %v3406, %v3525
        %v3527 = vpop.f32.mrf.mxu0
        %3528 = vmatprep.mubr.bf16.mxu0 0
        %3529 = vmatmul.mubr.bf16.gmra.mxu0 %v3374
        %v3530 = vpop.f32.mrf.mxu0
        %v3531 = vadd.f32 %v3406, %v3530
        %v3532 = vpop.f32.mrf.mxu0
        %v3533 = vpop.f32.mrf.mxu0
        %v3534 = vadd.f32 %v3406, %v3533
        %v3535 = vpop.f32.mrf.mxu0
        %3536 = vmatprep.mubr.bf16.mxu0 0
        %3537 = vmatmul.mubr.bf16.gmra.mxu0 %v3375
        %v3538 = vpop.f32.mrf.mxu0
        %v3539 = vadd.f32 %v3406, %v3538
        %v3540 = vpop.f32.mrf.mxu0
        %v3541 = vpop.f32.mrf.mxu0
        %v3542 = vadd.f32 %v3406, %v3541
        %v3543 = vpop.f32.mrf.mxu0
        %3544 = vmatprep.mubr.bf16.mxu0 0
        %3545 = vmatmul.mubr.bf16.gmra.mxu0 %v3376
        %v3546 = vpop.f32.mrf.mxu0
        %v3547 = vadd.f32 %v3406, %v3546
        %v3548 = vpop.f32.mrf.mxu0
        %v3549 = vpop.f32.mrf.mxu0
        %v3550 = vadd.f32 %v3406, %v3549
        %v3551 = vpop.f32.mrf.mxu0
        %3552 = vmatprep.mubr.bf16.mxu0 0
        %3553 = vmatmul.mubr.bf16.gmra.mxu0 %v3377
        %v3554 = vpop.f32.mrf.mxu0
        %v3555 = vadd.f32 %v3406, %v3554
        %v3556 = vpop.f32.mrf.mxu0
        %v3557 = vpop.f32.mrf.mxu0
        %v3558 = vadd.f32 %v3406, %v3557
        %v3559 = vpop.f32.mrf.mxu0
        %3560 = vmatprep.mubr.bf16.mxu0 0
        %3561 = vmatmul.mubr.bf16.gmra.mxu0 %v3378
        %v3562 = vpop.f32.mrf.mxu0
        %v3563 = vadd.f32 %v3406, %v3562
        %v3564 = vpop.f32.mrf.mxu0
        %v3565 = vpop.f32.mrf.mxu0
        %v3566 = vadd.f32 %v3406, %v3565
        %v3567 = vpop.f32.mrf.mxu0
        %3568 = vmatprep.mubr.bf16.mxu0 0
        %3569 = vmatmul.mubr.bf16.gmra.mxu0 %v3379
        %v3570 = vpop.f32.mrf.mxu0
        %v3571 = vadd.f32 %v3406, %v3570
        %v3572 = vpop.f32.mrf.mxu0
        %v3573 = vpop.f32.mrf.mxu0
        %v3574 = vadd.f32 %v3406, %v3573
        %v3575 = vpop.f32.mrf.mxu0
        %3576 = vmatprep.mubr.bf16.mxu0 0
        %3577 = vmatmul.mubr.bf16.gmra.mxu0 %v3380
        %v3578 = vpop.f32.mrf.mxu0
        %v3579 = vadd.f32 %v3406, %v3578
        %v3580 = vpop.f32.mrf.mxu0
        %v3581 = vpop.f32.mrf.mxu0
        %v3582 = vadd.f32 %v3406, %v3581
        %v3583 = vpop.f32.mrf.mxu0
        %3584 = vmatprep.mubr.bf16.mxu0 0
        %3585 = vmatmul.mubr.bf16.gmra.mxu0 %v3381
        %v3586 = vpop.f32.mrf.mxu0
        %v3587 = vadd.f32 %v3406, %v3586
        %v3588 = vpop.f32.mrf.mxu0
        %v3589 = vpop.f32.mrf.mxu0
        %v3590 = vadd.f32 %v3406, %v3589
        %v3591 = vpop.f32.mrf.mxu0
        %3592 = vmatprep.mubr.bf16.mxu0 0
        %3593 = vmatmul.mubr.bf16.gmra.mxu0 %v3382
        %v3594 = vpop.f32.mrf.mxu0
        %v3595 = vadd.f32 %v3406, %v3594
        %v3596 = vpop.f32.mrf.mxu0
        %v3597 = vpop.f32.mrf.mxu0
        %v3598 = vadd.f32 %v3406, %v3597
        %v3599 = vpop.f32.mrf.mxu0
        %3600 = vmatprep.mubr.bf16.mxu0 0
        %3601 = vmatmul.mubr.bf16.gmra.mxu0 %v3383
        %v3602 = vpop.f32.mrf.mxu0
        %v3603 = vadd.f32 %v3406, %v3602
        %v3604 = vpop.f32.mrf.mxu0
        %v3605 = vpop.f32.mrf.mxu0
        %v3606 = vadd.f32 %v3406, %v3605
        %v3607 = vpop.f32.mrf.mxu0
        %3608 = vmatprep.mubr.bf16.mxu0 0
        %3609 = vmatmul.mubr.bf16.gmra.mxu0 %v3384
        %v3610 = vpop.f32.mrf.mxu0
        %v3611 = vadd.f32 %v3406, %v3610
        %v3612 = vpop.f32.mrf.mxu0
        %v3613 = vpop.f32.mrf.mxu0
        %v3614 = vadd.f32 %v3406, %v3613
        %v3615 = vpop.f32.mrf.mxu0
        %3616 = vdwg.mxu0
        %3617 = vst [vmem:[%s203 + $0x100] sm:$0xff] %v3491
        %3618 = vst [vmem:[%s203 + $0x108] sm:$0xff] %v3494
        %3619 = vst [vmem:[%s203 + $0x110] sm:$0xff] %v3499
        %3620 = vst [vmem:[%s203 + $0x118] sm:$0xff] %v3502
        %3621 = vst [vmem:[%s203 + $0x120] sm:$0xff] %v3507
        %3622 = vst [vmem:[%s203 + $0x128] sm:$0xff] %v3510
        %3623 = vst [vmem:[%s203 + $0x130] sm:$0xff] %v3515
        %3624 = vst [vmem:[%s203 + $0x138] sm:$0xff] %v3518
        %3625 = vst [vmem:[%s203 + $0x140] sm:$0xff] %v3523
        %3626 = vst [vmem:[%s203 + $0x148] sm:$0xff] %v3526
        %3627 = vst [vmem:[%s203 + $0x150] sm:$0xff] %v3531
        %3628 = vst [vmem:[%s203 + $0x158] sm:$0xff] %v3534
        %3629 = vst [vmem:[%s203 + $0x160] sm:$0xff] %v3539
        %3630 = vst [vmem:[%s203 + $0x168] sm:$0xff] %v3542
        %3631 = vst [vmem:[%s203 + $0x170] sm:$0xff] %v3547
        %3632 = vst [vmem:[%s203 + $0x178] sm:$0xff] %v3550
        %3633 = vst [vmem:[%s203 + $0x180] sm:$0xff] %v3555
        %3634 = vst [vmem:[%s203 + $0x188] sm:$0xff] %v3558
        %3635 = vst [vmem:[%s203 + $0x190] sm:$0xff] %v3563
        %3636 = vst [vmem:[%s203 + $0x198] sm:$0xff] %v3566
        %3637 = vst [vmem:[%s203 + $0x1a0] sm:$0xff] %v3571
        %3638 = vst [vmem:[%s203 + $0x1a8] sm:$0xff] %v3574
        %3639 = vst [vmem:[%s203 + $0x1b0] sm:$0xff] %v3579
        %3640 = vst [vmem:[%s203 + $0x1b8] sm:$0xff] %v3582
        %3641 = vst [vmem:[%s203 + $0x1c0] sm:$0xff] %v3587
        %3642 = vst [vmem:[%s203 + $0x1c8] sm:$0xff] %v3590
        %3643 = vst [vmem:[%s203 + $0x1d0] sm:$0xff] %v3595
        %3644 = vst [vmem:[%s203 + $0x1d8] sm:$0xff] %v3598
        %3645 = vst [vmem:[%s203 + $0x1e0] sm:$0xff] %v3603
        %3646 = vst [vmem:[%s203 + $0x1e8] sm:$0xff] %v3606
        %3647 = vst [vmem:[%s203 + $0x1f0] sm:$0xff] %v3611
        %3648 = vst [vmem:[%s203 + $0x1f8] sm:$0xff] %v3614
        %s3649 = sand.u32 %s115, 1
        %s3650 = scalar_lea.sflag [#allocation3], %s3649
        %s3651 = sand.u32 %s115, 1
        %s3652 = smul.addr %s3651, 512
        %s3653 = scalar_lea.vmem [#allocation2], %s3652
        // Predicated region
        $region37: #{tpu_custom_call.1} parent=35 // pred_check
          %p3654 = pneg %p125
        $region38: #{tpu_custom_call.1} parent=35 // pred_check_branch
          %3656 = sbr.rel (%p3654) target = $region40
        $region39: #{tpu_custom_call.1} parent=35 // pred_region
          %s3657 = smul.u32 64, %s18
          %s3658 = ssub.s32 125, %s3657
          %p3659 = scmp.lt.s32.totalorder %s3658, 64
          %s3660 = scalar_select %p3659, %s3658, 64
          %s3661 = smul.u32 128, %s3660
          %s3663 = ssub.s32 8192, %s3661
          %3664 = vsyncadd %s3650, %s3663
          %p3665 = scmp.ne.s32.totalorder 0, %s3661
          %s3666 = smul.addr %s3657, 128
          %s3667 = scalar_lea.hbm %s4, %s3666
          %s3668 = smul.u32 8, %s3660
          %s3669 = sshll.u32 %s3653, 4
          %s3670 = int_to_ptr.vmem [resolvable:$true] %s3669
          %s3671 = sshll.u32 %s3668, 4
          %3675 = dma.vmem_to_hbm [thread:$0]  (%p3665), %s3670, %s3671, %s3667, %s3650, 128, 128, 8
        $region40: #{tpu_custom_call.1} parent=35 // pred_fallthru
          _
      $region36: #{tpu_custom_call.1} parent=5 // pred_fallthru
        _
      %p3676 = scmp.le.s32.totalorder 2, %s13
      // Predicated region
      $region41: #{tpu_custom_call.1} parent=5 // pred_check
        %p3677 = pneg %p3676
      $region42: #{tpu_custom_call.1} parent=5 // pred_check_branch
        %3679 = sbr.rel (%p3677) target = $region44
      $region43: #{tpu_custom_call.1} parent=5 // pred_region
        %s3680 = ssub.s32 %s13, 2
        // Predicated region
        $region45: #{tpu_custom_call.1} parent=43 // pred_check
          %p3681 = pneg %p131
        $region46: #{tpu_custom_call.1} parent=43 // pred_check_branch
          %3683 = sbr.rel (%p3681) target = $region48
        $region47: #{tpu_custom_call.1} parent=43 // pred_region
          %s3684 = sand.u32 %s116, 1
          %s3685 = scalar_lea.sflag [#allocation3], %s3684
          %s3686 = sand.u32 %s116, 1
          %s3687 = smul.addr %s3686, 512
          %s3688 = scalar_lea.vmem [#allocation2], %s3687
          %3689 = dma.done %s3685, 8192
        $region48: #{tpu_custom_call.1} parent=43 // pred_fallthru
          _
      $region44: #{tpu_custom_call.1} parent=5 // pred_fallthru
        _
    $region6: #{tpu_custom_call.1} parent=1 // loop_footer
      %s17 = sadd.s32 1, %s13
    $region7: #{tpu_custom_call.1} parent=1 // loop_footer_branch
      %12 = sbr.rel target = $region3
    $region8: #{tpu_custom_call.1} parent=1 // loop_exit
      _
    %3690 = vsyncpa [#allocation3], 1
    %s3691 = scalar_lea.sflag [#allocation3], 1
    %3692 = vsyncpa %s3691, 1

</llo_original>
